<compile_context>
chip_gen: v6e
topology: v6e:2x2x1
jax: 0.10.0
libtpu: 0.0.40
codegen_flags: <defaults>
</compile_context>

<pallas_src>
import jax
import jax.numpy as jnp
from jax.experimental import pallas as pl
from jax.experimental.pallas import tpu as pltpu

K = 7          # spatial-attention conv kernel size
P = K // 2     # padding


def _round_up(x, m):
    return (x + m - 1) // m * m


# ----------------------------------------------------------------------------
# Fused forward
# ----------------------------------------------------------------------------
def csef_forward(x1, x2, conv_w, conv_b, w_rl, w1, w2):
    f32 = jnp.float32
    B, C, H, W = x1.shape
    HW = H * W
    HID = w_rl.shape[0]

    WP = W + 2 * P                                              # padded row stride (flat layout)
    ACCLEN = _round_up((H - 1) * WP + W, 128)                   # conv accumulator length
    PADLEN = _round_up((K - 1) * WP + (K - 1) + ACCLEN, 128)    # padded-map length
    NT = K * K + 1                                              # 49 taps + 1 bias column
    inv_C = 1.0 / C
    inv_HW = 1.0 / HW
    LCHUNK = 128 if HW % 128 == 0 else HW                       # lane-chunked gating reads

    x1f = x1.astype(f32).reshape(B, C, HW)                      # lane-dense (free bitcast)
    x2f = x2.astype(f32).reshape(B, C, HW)

    # Pre-packed tap table: column t = [w_max[t], w_avg[t], w_max[t], w_avg[t]]
    # matching the sublane packing [x1-max, x1-mean, x2-max, x2-mean].
    # Column K*K folds the conv bias into the accumulator init of sublanes 0, 2.
    wm = conv_w[0, 0].astype(f32).reshape(-1)                   # (49,)
    wa = conv_w[0, 1].astype(f32).reshape(-1)                   # (49,)
    taps = jnp.stack([wm, wa, wm, wa], axis=1)                  # (49, 4)
    bias_col = conv_b.astype(f32).reshape(1, 1) * jnp.array([[1.0, 0.0, 1.0, 0.0]], f32)
    tab = jnp.concatenate([taps, bias_col], axis=0).reshape(NT, 4, 1)   # (NT, 4, 1)

    wrl = w_rl.astype(f32)                                      # (HID, C)   (untransposed)
    w12 = jnp.concatenate([w1, w2], axis=0).astype(f32)         # (2C, HID)  (single matmul)

    def kernel(x1_ref, x2_ref, tab_ref, wrl_ref, w12_ref, o_ref,
               pad_ref, dense_ref, x1g_ref, x2g_ref):
        # ---- channel max / mean of both branches, packed into 4 sublanes ----
        # The (C, HW) loads die right after the reductions; x is re-read in
        # 128-lane chunks only AFTER the tap loop, so no (C,HW) value is live
        # across the conv (keeps the hot loop spill-free).
        xv = x1_ref[0]                                          # (C, HW)
        mx1 = jnp.max(xv, axis=0, keepdims=True)                # (1, HW)
        av1 = jnp.sum(xv, axis=0, keepdims=True) * inv_C
        xv = x2_ref[0]
        mx2 = jnp.max(xv, axis=0, keepdims=True)
        av2 = jnp.sum(xv, axis=0, keepdims=True) * inv_C
        rid = jax.lax.broadcasted_iota(jnp.int32, (4, HW), 0)
        maps = jnp.where(rid == 0, mx1,
               jnp.where(rid == 1, av1,
               jnp.where(rid == 2, mx2, av2)))                  # (4, HW) packed maps

        # ---- scatter rows into the zero-padded flat maps (1 packed store/row) ----
        # Border stays 0 (= the conv's zero padding); interior fully rewritten.
        pad_ref[...] = jnp.zeros_like(pad_ref)
        for r in range(H):
            dst = (P + r) * WP + P
            pad_ref[:, dst:dst + W] = maps[:, r * W:(r + 1) * W]

        # ---- 7x7 conv: 49 taps, one shifted broadcast-FMA over the packed map ----
        pad = pad_ref[...]                                      # (4, PADLEN) in registers
        acc = jnp.broadcast_to(tab_ref[K * K], (4, ACCLEN))     # bias pre-folded (rows 0, 2)
        for di in range(K):
            for dj in range(K):
                t = di * K + dj
                s = di * WP + dj
                acc = acc + tab_ref[t] * pad[:, s:s + ACCLEN]

        # ---- de-pad (1 packed store/row), combine max/avg sublanes per branch ----
        for r in range(H):
            dense_ref[:, r * W:(r + 1) * W] = acc[:, r * WP:r * WP + W]
        d = dense_ref[...]                                      # (4, HW)
        rid4 = jax.lax.broadcasted_iota(jnp.int32, (4, HW), 0)
        conv1 = jnp.sum(jnp.where(rid4 < 2, d, 0.0), axis=0, keepdims=True)   # rows 0+1
        conv2 = jnp.sum(jnp.where(rid4 >= 2, d, 0.0), axis=0, keepdims=True)  # rows 2+3
        g1 = jax.nn.sigmoid(conv1) + 1.0                        # residual gate fused (+1)
        g2 = jax.nn.sigmoid(conv2) + 1.0

        # ---- residual spatial gate: x * (sa + 1), read x in 128-lane chunks ----
        for h0 in range(0, HW, LCHUNK):
            sl = slice(h0, h0 + LCHUNK)
            x1g_ref[:, sl] = x1_ref[0, :, sl] * g1[:, sl]
            x2g_ref[:, sl] = x2_ref[0, :, sl] * g2[:, sl]

        # ---- squeeze-excitation: pool -> MLP -> 2-way softmax ----
        y = jnp.sum(x1g_ref[...] + x2g_ref[...], axis=1, keepdims=True) * inv_HW   # (C, 1)
        yb = jnp.broadcast_to(y, (C, 128))                      # full 128-lane matmul operand
        hmid = jnp.maximum(
            jnp.dot(wrl_ref[...], yb, preferred_element_type=jnp.float32), 0.0)    # (HID, 128)
        y12 = jnp.dot(w12_ref[...], hmid, preferred_element_type=jnp.float32)      # (2C, 128)
        yc = y12[:, 0:1]                                        # (2C, 1)
        y1 = yc[0:C]
        y2 = yc[C:2 * C]
        m = jnp.maximum(y1, y2)
        e1 = jnp.exp(y1 - m)
        e2 = jnp.exp(y2 - m)
        inv = 1.0 / (e1 + e2)
        s1 = e1 * inv                                           # (C, 1)
        s2 = e2 * inv

        # ---- per-(batch, channel) blend, written lane-dense ----
        o_ref[0] = x1g_ref[...] * s1 + x2g_ref[...] * s2

    outf = pl.pallas_call(
        kernel,
        out_shape=jax.ShapeDtypeStruct((B, C, HW), f32),
        grid_spec=pltpu.PrefetchScalarGridSpec(
            num_scalar_prefetch=0,
            grid=(B,),
            in_specs=[
                pl.BlockSpec((1, C, HW), lambda b: (b, 0, 0)),
                pl.BlockSpec((1, C, HW), lambda b: (b, 0, 0)),
                pl.BlockSpec((NT, 4, 1), lambda b: (0, 0, 0)),
                pl.BlockSpec((HID, C), lambda b: (0, 0)),
                pl.BlockSpec((2 * C, HID), lambda b: (0, 0)),
            ],
            out_specs=pl.BlockSpec((1, C, HW), lambda b: (b, 0, 0)),
            scratch_shapes=[
                pltpu.VMEM((4, PADLEN), f32),   # packed padded maps (4 sublanes)
                pltpu.VMEM((4, HW), f32),       # packed de-padded conv maps
                pltpu.VMEM((C, HW), f32),       # x1 gated (stays on-chip)
                pltpu.VMEM((C, HW), f32),       # x2 gated (stays on-chip)
            ],
        ),
        compiler_params=pltpu.CompilerParams(
            dimension_semantics=("parallel",)),    # megacore over batch on 2-TC chips
    )(x1f, x2f, tab, wrl, w12)

    return outf.reshape(B, C, H, W)


# ----------------------------------------------------------------------------
# Pure-JAX reference (mirrors the PyTorch forward exactly)
# ----------------------------------------------------------------------------
def csef_ref(x1, x2, conv_w, conv_b, w_rl, w1, w2):
    hp = jax.lax.Precision.HIGHEST

    def sa(x):
        mx = jnp.max(x, axis=1, keepdims=True)
        av = jnp.mean(x, axis=1, keepdims=True)
        inp = jnp.concatenate([mx, av], axis=1)                       # (B,2,H,W)
        out = jax.lax.conv_general_dilated(
            inp, conv_w, window_strides=(1, 1), padding=((P, P), (P, P)),
            dimension_numbers=("NCHW", "OIHW", "NCHW"), precision=hp)
        out = out + conv_b.reshape(1, 1, 1, 1)
        return jax.nn.sigmoid(out)

    x1g = x1 * sa(x1) + x1
    x2g = x2 * sa(x2) + x2
    xs = x1g + x2g
    y = jnp.mean(xs, axis=(2, 3))                                     # (B,C)
    h = jnp.maximum(jnp.dot(y, w_rl.T, precision=hp), 0.0)            # (B,HID)
    y1 = jnp.dot(h, w1.T, precision=hp)                               # (B,C)
    y2 = jnp.dot(h, w2.T, precision=hp)
    ys = jax.nn.softmax(jnp.stack([y1, y2], axis=0), axis=0)
    return x1g * ys[0][:, :, None, None] + x2g * ys[1][:, :, None, None]


# ----------------------------------------------------------------------------
if __name__ == "__main__":
    B, C, H, W = 2, 128, 16, 16
    RED = 16
    HID = C // RED
    f32 = jnp.float32

    key = jax.random.PRNGKey(0)
    k1, k2, k3, k4, k5, k6 = jax.random.split(key, 6)

    # Parameter init mirroring the nn.Module __init__:
    #   SpatialAttention.conv : Conv2d(2, 1, 7, padding=3) -> kaiming_normal(fan_out), bias=0
    #   ConvRL[0]             : Linear(C, C//16, bias=False) -> normal(std=1e-3)
    #   conv1 / conv2         : Linear(C//16, C, bias=False) -> normal(std=1e-3)
    conv_w = jax.random.normal(k1, (1, 2, K, K), f32) * ((2.0 / (1 * K * K)) ** 0.5)
    conv_b = jnp.zeros((1,), f32)
    w_rl = jax.random.normal(k2, (HID, C), f32) * 1e-3
    w1 = jax.random.normal(k3, (C, HID), f32) * 1e-3
    w2 = jax.random.normal(k4, (C, HID), f32) * 1e-3

    x1 = jax.random.normal(k5, (B, C, H, W), f32)
    x2 = jax.random.normal(k6, (B, C, H, W), f32)

    fwd = jax.jit(csef_forward)
    out = jax.block_until_ready(fwd(x1, x2, conv_w, conv_b, w_rl, w1, w2))

    ref = csef_ref(x1, x2, conv_w, conv_b, w_rl, w1, w2)
    assert out.shape == (B, C, H, W) and out.dtype == f32
    assert jnp.allclose(out, ref, rtol=1e-3, atol=1e-3), "mismatch vs reference"

    print("KERNEL_OK")
</pallas_src>

<mosaic_0001>
module attributes {stable_mosaic.version = 11 : i64} {
  func.func @kernel(%arg0: i32, %arg1: memref<1x128x256xf32, #tpu.memory_space<vmem>>, %arg2: memref<1x128x256xf32, #tpu.memory_space<vmem>>, %arg3: memref<50x4x1xf32, #tpu.memory_space<vmem>>, %arg4: memref<8x128xf32, #tpu.memory_space<vmem>>, %arg5: memref<256x8xf32, #tpu.memory_space<vmem>>, %arg6: memref<1x128x256xf32, #tpu.memory_space<vmem>>, %arg7: memref<4x640xf32, #tpu.memory_space<vmem>>, %arg8: memref<4x256xf32, #tpu.memory_space<vmem>>, %arg9: memref<128x256xf32, #tpu.memory_space<vmem>>, %arg10: memref<128x256xf32, #tpu.memory_space<vmem>>) attributes {dimension_semantics = [#tpu.dimension_semantics<parallel>], iteration_bounds = array<i64: 2>, scalar_prefetch = 0 : i64, scratch_operands = 4 : i64, tpu.core_type = #tpu.core_type<tc>, window_params = [{transform_indices = @transform_0, window_bounds = array<i64: 1, 128, 256>}, {transform_indices = @transform_1, window_bounds = array<i64: 1, 128, 256>}, {pipeline_mode = #tpu.pipeline_mode<synchronous>, transform_indices = @transform_2, window_bounds = array<i64: 50, 4, 1>}, {pipeline_mode = #tpu.pipeline_mode<synchronous>, transform_indices = @transform_3, window_bounds = array<i64: 8, 128>}, {pipeline_mode = #tpu.pipeline_mode<synchronous>, transform_indices = @transform_4, window_bounds = array<i64: 256, 8>}, {transform_indices = @transform_5, window_bounds = array<i64: 1, 128, 256>}]} {
    %c0 = arith.constant 0 : index
    %c0_0 = arith.constant 0 : index
    %c0_1 = arith.constant 0 : index
    %0 = vector.load %arg1[%c0, %c0_0, %c0_1] : memref<1x128x256xf32, #tpu.memory_space<vmem>>, vector<1x128x256xf32>
    %1 = vector.shape_cast %0 : vector<1x128x256xf32> to vector<128x256xf32>
    %cst = arith.constant dense<0xFF800000> : vector<256xf32>
    %2 = vector.multi_reduction <maximumf>, %1, %cst [0] : vector<128x256xf32> to vector<256xf32>
    %3 = vector.shape_cast %2 : vector<256xf32> to vector<1x256xf32>
    %cst_2 = arith.constant dense<0.000000e+00> : vector<256xf32>
    %4 = vector.multi_reduction <add>, %1, %cst_2 [0] : vector<128x256xf32> to vector<256xf32>
    %5 = vector.shape_cast %4 : vector<256xf32> to vector<1x256xf32>
    %cst_3 = arith.constant 7.812500e-03 : f32
    %6 = vector.broadcast %cst_3 : f32 to vector<1x256xf32>
    %7 = arith.mulf %5, %6 : vector<1x256xf32>
    %c0_4 = arith.constant 0 : index
    %c0_5 = arith.constant 0 : index
    %c0_6 = arith.constant 0 : index
    %8 = vector.load %arg2[%c0_4, %c0_5, %c0_6] : memref<1x128x256xf32, #tpu.memory_space<vmem>>, vector<1x128x256xf32>
    %9 = vector.shape_cast %8 : vector<1x128x256xf32> to vector<128x256xf32>
    %cst_7 = arith.constant dense<0xFF800000> : vector<256xf32>
    %10 = vector.multi_reduction <maximumf>, %9, %cst_7 [0] : vector<128x256xf32> to vector<256xf32>
    %11 = vector.shape_cast %10 : vector<256xf32> to vector<1x256xf32>
    %cst_8 = arith.constant dense<0.000000e+00> : vector<256xf32>
    %12 = vector.multi_reduction <add>, %9, %cst_8 [0] : vector<128x256xf32> to vector<256xf32>
    %13 = vector.shape_cast %12 : vector<256xf32> to vector<1x256xf32>
    %cst_9 = arith.constant 7.812500e-03 : f32
    %14 = vector.broadcast %cst_9 : f32 to vector<1x256xf32>
    %15 = arith.mulf %13, %14 : vector<1x256xf32>
    %16 = tpu.iota {dimensions = array<i32: 0>} : vector<4x256xi32>
    %c0_i32 = arith.constant 0 : i32
    %17 = vector.broadcast %c0_i32 : i32 to vector<4x256xi32>
    %18 = arith.cmpi eq, %16, %17 : vector<4x256xi32>
    %c1_i32 = arith.constant 1 : i32
    %19 = vector.broadcast %c1_i32 : i32 to vector<4x256xi32>
    %20 = arith.cmpi eq, %16, %19 : vector<4x256xi32>
    %c2_i32 = arith.constant 2 : i32
    %21 = vector.broadcast %c2_i32 : i32 to vector<4x256xi32>
    %22 = arith.cmpi eq, %16, %21 : vector<4x256xi32>
    %23 = vector.shape_cast %11 : vector<1x256xf32> to vector<1x256xf32>
    %24 = vector.broadcast %23 : vector<1x256xf32> to vector<4x256xf32>
    %25 = vector.shape_cast %15 : vector<1x256xf32> to vector<1x256xf32>
    %26 = vector.broadcast %25 : vector<1x256xf32> to vector<4x256xf32>
    %27 = arith.select %22, %24, %26 : vector<4x256xi1>, vector<4x256xf32>
    %28 = vector.shape_cast %7 : vector<1x256xf32> to vector<1x256xf32>
    %29 = vector.broadcast %28 : vector<1x256xf32> to vector<4x256xf32>
    %30 = arith.select %20, %29, %27 : vector<4x256xi1>, vector<4x256xf32>
    %31 = vector.shape_cast %3 : vector<1x256xf32> to vector<1x256xf32>
    %32 = vector.broadcast %31 : vector<1x256xf32> to vector<4x256xf32>
    %33 = arith.select %18, %32, %30 : vector<4x256xi1>, vector<4x256xf32>
    %cst_10 = arith.constant 0.000000e+00 : f32
    %34 = vector.broadcast %cst_10 : f32 to vector<4x640xf32>
    %c0_11 = arith.constant 0 : index
    %c0_12 = arith.constant 0 : index
    %35 = vector.load %arg7[%c0_11, %c0_12] : memref<4x640xf32, #tpu.memory_space<vmem>>, vector<4x640xf32>
    tpu.vector_store %arg7[%c0_11, %c0_12], %34 {strides = array<i32>} : memref<4x640xf32, #tpu.memory_space<vmem>>, vector<4x640xf32>,
    %36 = vector.extract_strided_slice %33 {offsets = [0, 0], sizes = [4, 16], strides = [1, 1]} : vector<4x256xf32> to vector<4x16xf32>
    %c0_13 = arith.constant 0 : index
    %c69 = arith.constant 69 : index
    %37 = vector.load %arg7[%c0_13, %c69] : memref<4x640xf32, #tpu.memory_space<vmem>>, vector<4x16xf32>
    tpu.vector_store %arg7[%c0_13, %c69], %36 {strides = array<i32>} : memref<4x640xf32, #tpu.memory_space<vmem>>, vector<4x16xf32>,
    %38 = vector.extract_strided_slice %33 {offsets = [0, 16], sizes = [4, 16], strides = [1, 1]} : vector<4x256xf32> to vector<4x16xf32>
    %c0_14 = arith.constant 0 : index
    %c91 = arith.constant 91 : index
    %39 = vector.load %arg7[%c0_14, %c91] : memref<4x640xf32, #tpu.memory_space<vmem>>, vector<4x16xf32>
    tpu.vector_store %arg7[%c0_14, %c91], %38 {strides = array<i32>} : memref<4x640xf32, #tpu.memory_space<vmem>>, vector<4x16xf32>,
    %40 = vector.extract_strided_slice %33 {offsets = [0, 32], sizes = [4, 16], strides = [1, 1]} : vector<4x256xf32> to vector<4x16xf32>
    %c0_15 = arith.constant 0 : index
    %c113 = arith.constant 113 : index
    %41 = vector.load %arg7[%c0_15, %c113] : memref<4x640xf32, #tpu.memory_space<vmem>>, vector<4x16xf32>
    tpu.vector_store %arg7[%c0_15, %c113], %40 {strides = array<i32>} : memref<4x640xf32, #tpu.memory_space<vmem>>, vector<4x16xf32>,
    %42 = vector.extract_strided_slice %33 {offsets = [0, 48], sizes = [4, 16], strides = [1, 1]} : vector<4x256xf32> to vector<4x16xf32>
    %c0_16 = arith.constant 0 : index
    %c135 = arith.constant 135 : index
    %43 = vector.load %arg7[%c0_16, %c135] : memref<4x640xf32, #tpu.memory_space<vmem>>, vector<4x16xf32>
    tpu.vector_store %arg7[%c0_16, %c135], %42 {strides = array<i32>} : memref<4x640xf32, #tpu.memory_space<vmem>>, vector<4x16xf32>,
    %44 = vector.extract_strided_slice %33 {offsets = [0, 64], sizes = [4, 16], strides = [1, 1]} : vector<4x256xf32> to vector<4x16xf32>
    %c0_17 = arith.constant 0 : index
    %c157 = arith.constant 157 : index
    %45 = vector.load %arg7[%c0_17, %c157] : memref<4x640xf32, #tpu.memory_space<vmem>>, vector<4x16xf32>
    tpu.vector_store %arg7[%c0_17, %c157], %44 {strides = array<i32>} : memref<4x640xf32, #tpu.memory_space<vmem>>, vector<4x16xf32>,
    %46 = vector.extract_strided_slice %33 {offsets = [0, 80], sizes = [4, 16], strides = [1, 1]} : vector<4x256xf32> to vector<4x16xf32>
    %c0_18 = arith.constant 0 : index
    %c179 = arith.constant 179 : index
    %47 = vector.load %arg7[%c0_18, %c179] : memref<4x640xf32, #tpu.memory_space<vmem>>, vector<4x16xf32>
    tpu.vector_store %arg7[%c0_18, %c179], %46 {strides = array<i32>} : memref<4x640xf32, #tpu.memory_space<vmem>>, vector<4x16xf32>,
    %48 = vector.extract_strided_slice %33 {offsets = [0, 96], sizes = [4, 16], strides = [1, 1]} : vector<4x256xf32> to vector<4x16xf32>
    %c0_19 = arith.constant 0 : index
    %c201 = arith.constant 201 : index
    %49 = vector.load %arg7[%c0_19, %c201] : memref<4x640xf32, #tpu.memory_space<vmem>>, vector<4x16xf32>
    tpu.vector_store %arg7[%c0_19, %c201], %48 {strides = array<i32>} : memref<4x640xf32, #tpu.memory_space<vmem>>, vector<4x16xf32>,
    %50 = vector.extract_strided_slice %33 {offsets = [0, 112], sizes = [4, 16], strides = [1, 1]} : vector<4x256xf32> to vector<4x16xf32>
    %c0_20 = arith.constant 0 : index
    %c223 = arith.constant 223 : index
    %51 = vector.load %arg7[%c0_20, %c223] : memref<4x640xf32, #tpu.memory_space<vmem>>, vector<4x16xf32>
    tpu.vector_store %arg7[%c0_20, %c223], %50 {strides = array<i32>} : memref<4x640xf32, #tpu.memory_space<vmem>>, vector<4x16xf32>,
    %52 = vector.extract_strided_slice %33 {offsets = [0, 128], sizes = [4, 16], strides = [1, 1]} : vector<4x256xf32> to vector<4x16xf32>
    %c0_21 = arith.constant 0 : index
    %c245 = arith.constant 245 : index
    %53 = vector.load %arg7[%c0_21, %c245] : memref<4x640xf32, #tpu.memory_space<vmem>>, vector<4x16xf32>
    tpu.vector_store %arg7[%c0_21, %c245], %52 {strides = array<i32>} : memref<4x640xf32, #tpu.memory_space<vmem>>, vector<4x16xf32>,
    %54 = vector.extract_strided_slice %33 {offsets = [0, 144], sizes = [4, 16], strides = [1, 1]} : vector<4x256xf32> to vector<4x16xf32>
    %c0_22 = arith.constant 0 : index
    %c267 = arith.constant 267 : index
    %55 = vector.load %arg7[%c0_22, %c267] : memref<4x640xf32, #tpu.memory_space<vmem>>, vector<4x16xf32>
    tpu.vector_store %arg7[%c0_22, %c267], %54 {strides = array<i32>} : memref<4x640xf32, #tpu.memory_space<vmem>>, vector<4x16xf32>,
    %56 = vector.extract_strided_slice %33 {offsets = [0, 160], sizes = [4, 16], strides = [1, 1]} : vector<4x256xf32> to vector<4x16xf32>
    %c0_23 = arith.constant 0 : index
    %c289 = arith.constant 289 : index
    %57 = vector.load %arg7[%c0_23, %c289] : memref<4x640xf32, #tpu.memory_space<vmem>>, vector<4x16xf32>
    tpu.vector_store %arg7[%c0_23, %c289], %56 {strides = array<i32>} : memref<4x640xf32, #tpu.memory_space<vmem>>, vector<4x16xf32>,
    %58 = vector.extract_strided_slice %33 {offsets = [0, 176], sizes = [4, 16], strides = [1, 1]} : vector<4x256xf32> to vector<4x16xf32>
    %c0_24 = arith.constant 0 : index
    %c311 = arith.constant 311 : index
    %59 = vector.load %arg7[%c0_24, %c311] : memref<4x640xf32, #tpu.memory_space<vmem>>, vector<4x16xf32>
    tpu.vector_store %arg7[%c0_24, %c311], %58 {strides = array<i32>} : memref<4x640xf32, #tpu.memory_space<vmem>>, vector<4x16xf32>,
    %60 = vector.extract_strided_slice %33 {offsets = [0, 192], sizes = [4, 16], strides = [1, 1]} : vector<4x256xf32> to vector<4x16xf32>
    %c0_25 = arith.constant 0 : index
    %c333 = arith.constant 333 : index
    %61 = vector.load %arg7[%c0_25, %c333] : memref<4x640xf32, #tpu.memory_space<vmem>>, vector<4x16xf32>
    tpu.vector_store %arg7[%c0_25, %c333], %60 {strides = array<i32>} : memref<4x640xf32, #tpu.memory_space<vmem>>, vector<4x16xf32>,
    %62 = vector.extract_strided_slice %33 {offsets = [0, 208], sizes = [4, 16], strides = [1, 1]} : vector<4x256xf32> to vector<4x16xf32>
    %c0_26 = arith.constant 0 : index
    %c355 = arith.constant 355 : index
    %63 = vector.load %arg7[%c0_26, %c355] : memref<4x640xf32, #tpu.memory_space<vmem>>, vector<4x16xf32>
    tpu.vector_store %arg7[%c0_26, %c355], %62 {strides = array<i32>} : memref<4x640xf32, #tpu.memory_space<vmem>>, vector<4x16xf32>,
    %64 = vector.extract_strided_slice %33 {offsets = [0, 224], sizes = [4, 16], strides = [1, 1]} : vector<4x256xf32> to vector<4x16xf32>
    %c0_27 = arith.constant 0 : index
    %c377 = arith.constant 377 : index
    %65 = vector.load %arg7[%c0_27, %c377] : memref<4x640xf32, #tpu.memory_space<vmem>>, vector<4x16xf32>
    tpu.vector_store %arg7[%c0_27, %c377], %64 {strides = array<i32>} : memref<4x640xf32, #tpu.memory_space<vmem>>, vector<4x16xf32>,
    %66 = vector.extract_strided_slice %33 {offsets = [0, 240], sizes = [4, 16], strides = [1, 1]} : vector<4x256xf32> to vector<4x16xf32>
    %c0_28 = arith.constant 0 : index
    %c399 = arith.constant 399 : index
    %67 = vector.load %arg7[%c0_28, %c399] : memref<4x640xf32, #tpu.memory_space<vmem>>, vector<4x16xf32>
    tpu.vector_store %arg7[%c0_28, %c399], %66 {strides = array<i32>} : memref<4x640xf32, #tpu.memory_space<vmem>>, vector<4x16xf32>,
    %c0_29 = arith.constant 0 : index
    %c0_30 = arith.constant 0 : index
    %68 = vector.load %arg7[%c0_29, %c0_30] : memref<4x640xf32, #tpu.memory_space<vmem>>, vector<4x640xf32>
    %c49 = arith.constant 49 : index
    %c0_31 = arith.constant 0 : index
    %c0_32 = arith.constant 0 : index
    %69 = vector.load %arg3[%c49, %c0_31, %c0_32] : memref<50x4x1xf32, #tpu.memory_space<vmem>>, vector<1x4x1xf32>
    %70 = vector.shape_cast %69 : vector<1x4x1xf32> to vector<4x1xf32>
    %71 = vector.shape_cast %70 : vector<4x1xf32> to vector<4x1xf32>
    %72 = vector.broadcast %71 : vector<4x1xf32> to vector<4x384xf32>
    %c0_33 = arith.constant 0 : index
    %c0_34 = arith.constant 0 : index
    %c0_35 = arith.constant 0 : index
    %73 = vector.load %arg3[%c0_33, %c0_34, %c0_35] : memref<50x4x1xf32, #tpu.memory_space<vmem>>, vector<1x4x1xf32>
    %74 = vector.shape_cast %73 : vector<1x4x1xf32> to vector<4x1xf32>
    %75 = vector.extract_strided_slice %68 {offsets = [0, 0], sizes = [4, 384], strides = [1, 1]} : vector<4x640xf32> to vector<4x384xf32>
    %76 = vector.broadcast %74 : vector<4x1xf32> to vector<4x384xf32>
    %77 = arith.mulf %76, %75 : vector<4x384xf32>
    %78 = arith.addf %72, %77 : vector<4x384xf32>
    %c1 = arith.constant 1 : index
    %c0_36 = arith.constant 0 : index
    %c0_37 = arith.constant 0 : index
    %79 = vector.load %arg3[%c1, %c0_36, %c0_37] : memref<50x4x1xf32, #tpu.memory_space<vmem>>, vector<1x4x1xf32>
    %80 = vector.shape_cast %79 : vector<1x4x1xf32> to vector<4x1xf32>
    %81 = vector.extract_strided_slice %68 {offsets = [0, 1], sizes = [4, 384], strides = [1, 1]} : vector<4x640xf32> to vector<4x384xf32>
    %82 = vector.broadcast %80 : vector<4x1xf32> to vector<4x384xf32>
    %83 = arith.mulf %82, %81 : vector<4x384xf32>
    %84 = arith.addf %78, %83 : vector<4x384xf32>
    %c2 = arith.constant 2 : index
    %c0_38 = arith.constant 0 : index
    %c0_39 = arith.constant 0 : index
    %85 = vector.load %arg3[%c2, %c0_38, %c0_39] : memref<50x4x1xf32, #tpu.memory_space<vmem>>, vector<1x4x1xf32>
    %86 = vector.shape_cast %85 : vector<1x4x1xf32> to vector<4x1xf32>
    %87 = vector.extract_strided_slice %68 {offsets = [0, 2], sizes = [4, 384], strides = [1, 1]} : vector<4x640xf32> to vector<4x384xf32>
    %88 = vector.broadcast %86 : vector<4x1xf32> to vector<4x384xf32>
    %89 = arith.mulf %88, %87 : vector<4x384xf32>
    %90 = arith.addf %84, %89 : vector<4x384xf32>
    %c3 = arith.constant 3 : index
    %c0_40 = arith.constant 0 : index
    %c0_41 = arith.constant 0 : index
    %91 = vector.load %arg3[%c3, %c0_40, %c0_41] : memref<50x4x1xf32, #tpu.memory_space<vmem>>, vector<1x4x1xf32>
    %92 = vector.shape_cast %91 : vector<1x4x1xf32> to vector<4x1xf32>
    %93 = vector.extract_strided_slice %68 {offsets = [0, 3], sizes = [4, 384], strides = [1, 1]} : vector<4x640xf32> to vector<4x384xf32>
    %94 = vector.broadcast %92 : vector<4x1xf32> to vector<4x384xf32>
    %95 = arith.mulf %94, %93 : vector<4x384xf32>
    %96 = arith.addf %90, %95 : vector<4x384xf32>
    %c4 = arith.constant 4 : index
    %c0_42 = arith.constant 0 : index
    %c0_43 = arith.constant 0 : index
    %97 = vector.load %arg3[%c4, %c0_42, %c0_43] : memref<50x4x1xf32, #tpu.memory_space<vmem>>, vector<1x4x1xf32>
    %98 = vector.shape_cast %97 : vector<1x4x1xf32> to vector<4x1xf32>
    %99 = vector.extract_strided_slice %68 {offsets = [0, 4], sizes = [4, 384], strides = [1, 1]} : vector<4x640xf32> to vector<4x384xf32>
    %100 = vector.broadcast %98 : vector<4x1xf32> to vector<4x384xf32>
    %101 = arith.mulf %100, %99 : vector<4x384xf32>
    %102 = arith.addf %96, %101 : vector<4x384xf32>
    %c5 = arith.constant 5 : index
    %c0_44 = arith.constant 0 : index
    %c0_45 = arith.constant 0 : index
    %103 = vector.load %arg3[%c5, %c0_44, %c0_45] : memref<50x4x1xf32, #tpu.memory_space<vmem>>, vector<1x4x1xf32>
    %104 = vector.shape_cast %103 : vector<1x4x1xf32> to vector<4x1xf32>
    %105 = vector.extract_strided_slice %68 {offsets = [0, 5], sizes = [4, 384], strides = [1, 1]} : vector<4x640xf32> to vector<4x384xf32>
    %106 = vector.broadcast %104 : vector<4x1xf32> to vector<4x384xf32>
    %107 = arith.mulf %106, %105 : vector<4x384xf32>
    %108 = arith.addf %102, %107 : vector<4x384xf32>
    %c6 = arith.constant 6 : index
    %c0_46 = arith.constant 0 : index
    %c0_47 = arith.constant 0 : index
    %109 = vector.load %arg3[%c6, %c0_46, %c0_47] : memref<50x4x1xf32, #tpu.memory_space<vmem>>, vector<1x4x1xf32>
    %110 = vector.shape_cast %109 : vector<1x4x1xf32> to vector<4x1xf32>
    %111 = vector.extract_strided_slice %68 {offsets = [0, 6], sizes = [4, 384], strides = [1, 1]} : vector<4x640xf32> to vector<4x384xf32>
    %112 = vector.broadcast %110 : vector<4x1xf32> to vector<4x384xf32>
    %113 = arith.mulf %112, %111 : vector<4x384xf32>
    %114 = arith.addf %108, %113 : vector<4x384xf32>
    %c7 = arith.constant 7 : index
    %c0_48 = arith.constant 0 : index
    %c0_49 = arith.constant 0 : index
    %115 = vector.load %arg3[%c7, %c0_48, %c0_49] : memref<50x4x1xf32, #tpu.memory_space<vmem>>, vector<1x4x1xf32>
    %116 = vector.shape_cast %115 : vector<1x4x1xf32> to vector<4x1xf32>
    %117 = vector.extract_strided_slice %68 {offsets = [0, 22], sizes = [4, 384], strides = [1, 1]} : vector<4x640xf32> to vector<4x384xf32>
    %118 = vector.broadcast %116 : vector<4x1xf32> to vector<4x384xf32>
    %119 = arith.mulf %118, %117 : vector<4x384xf32>
    %120 = arith.addf %114, %119 : vector<4x384xf32>
    %c8 = arith.constant 8 : index
    %c0_50 = arith.constant 0 : index
    %c0_51 = arith.constant 0 : index
    %121 = vector.load %arg3[%c8, %c0_50, %c0_51] : memref<50x4x1xf32, #tpu.memory_space<vmem>>, vector<1x4x1xf32>
    %122 = vector.shape_cast %121 : vector<1x4x1xf32> to vector<4x1xf32>
    %123 = vector.extract_strided_slice %68 {offsets = [0, 23], sizes = [4, 384], strides = [1, 1]} : vector<4x640xf32> to vector<4x384xf32>
    %124 = vector.broadcast %122 : vector<4x1xf32> to vector<4x384xf32>
    %125 = arith.mulf %124, %123 : vector<4x384xf32>
    %126 = arith.addf %120, %125 : vector<4x384xf32>
    %c9 = arith.constant 9 : index
    %c0_52 = arith.constant 0 : index
    %c0_53 = arith.constant 0 : index
    %127 = vector.load %arg3[%c9, %c0_52, %c0_53] : memref<50x4x1xf32, #tpu.memory_space<vmem>>, vector<1x4x1xf32>
    %128 = vector.shape_cast %127 : vector<1x4x1xf32> to vector<4x1xf32>
    %129 = vector.extract_strided_slice %68 {offsets = [0, 24], sizes = [4, 384], strides = [1, 1]} : vector<4x640xf32> to vector<4x384xf32>
    %130 = vector.broadcast %128 : vector<4x1xf32> to vector<4x384xf32>
    %131 = arith.mulf %130, %129 : vector<4x384xf32>
    %132 = arith.addf %126, %131 : vector<4x384xf32>
    %c10 = arith.constant 10 : index
    %c0_54 = arith.constant 0 : index
    %c0_55 = arith.constant 0 : index
    %133 = vector.load %arg3[%c10, %c0_54, %c0_55] : memref<50x4x1xf32, #tpu.memory_space<vmem>>, vector<1x4x1xf32>
    %134 = vector.shape_cast %133 : vector<1x4x1xf32> to vector<4x1xf32>
    %135 = vector.extract_strided_slice %68 {offsets = [0, 25], sizes = [4, 384], strides = [1, 1]} : vector<4x640xf32> to vector<4x384xf32>
    %136 = vector.broadcast %134 : vector<4x1xf32> to vector<4x384xf32>
    %137 = arith.mulf %136, %135 : vector<4x384xf32>
    %138 = arith.addf %132, %137 : vector<4x384xf32>
    %c11 = arith.constant 11 : index
    %c0_56 = arith.constant 0 : index
    %c0_57 = arith.constant 0 : index
    %139 = vector.load %arg3[%c11, %c0_56, %c0_57] : memref<50x4x1xf32, #tpu.memory_space<vmem>>, vector<1x4x1xf32>
    %140 = vector.shape_cast %139 : vector<1x4x1xf32> to vector<4x1xf32>
    %141 = vector.extract_strided_slice %68 {offsets = [0, 26], sizes = [4, 384], strides = [1, 1]} : vector<4x640xf32> to vector<4x384xf32>
    %142 = vector.broadcast %140 : vector<4x1xf32> to vector<4x384xf32>
    %143 = arith.mulf %142, %141 : vector<4x384xf32>
    %144 = arith.addf %138, %143 : vector<4x384xf32>
    %c12 = arith.constant 12 : index
    %c0_58 = arith.constant 0 : index
    %c0_59 = arith.constant 0 : index
    %145 = vector.load %arg3[%c12, %c0_58, %c0_59] : memref<50x4x1xf32, #tpu.memory_space<vmem>>, vector<1x4x1xf32>
    %146 = vector.shape_cast %145 : vector<1x4x1xf32> to vector<4x1xf32>
    %147 = vector.extract_strided_slice %68 {offsets = [0, 27], sizes = [4, 384], strides = [1, 1]} : vector<4x640xf32> to vector<4x384xf32>
    %148 = vector.broadcast %146 : vector<4x1xf32> to vector<4x384xf32>
    %149 = arith.mulf %148, %147 : vector<4x384xf32>
    %150 = arith.addf %144, %149 : vector<4x384xf32>
    %c13 = arith.constant 13 : index
    %c0_60 = arith.constant 0 : index
    %c0_61 = arith.constant 0 : index
    %151 = vector.load %arg3[%c13, %c0_60, %c0_61] : memref<50x4x1xf32, #tpu.memory_space<vmem>>, vector<1x4x1xf32>
    %152 = vector.shape_cast %151 : vector<1x4x1xf32> to vector<4x1xf32>
    %153 = vector.extract_strided_slice %68 {offsets = [0, 28], sizes = [4, 384], strides = [1, 1]} : vector<4x640xf32> to vector<4x384xf32>
    %154 = vector.broadcast %152 : vector<4x1xf32> to vector<4x384xf32>
    %155 = arith.mulf %154, %153 : vector<4x384xf32>
    %156 = arith.addf %150, %155 : vector<4x384xf32>
    %c14 = arith.constant 14 : index
    %c0_62 = arith.constant 0 : index
    %c0_63 = arith.constant 0 : index
    %157 = vector.load %arg3[%c14, %c0_62, %c0_63] : memref<50x4x1xf32, #tpu.memory_space<vmem>>, vector<1x4x1xf32>
    %158 = vector.shape_cast %157 : vector<1x4x1xf32> to vector<4x1xf32>
    %159 = vector.extract_strided_slice %68 {offsets = [0, 44], sizes = [4, 384], strides = [1, 1]} : vector<4x640xf32> to vector<4x384xf32>
    %160 = vector.broadcast %158 : vector<4x1xf32> to vector<4x384xf32>
    %161 = arith.mulf %160, %159 : vector<4x384xf32>
    %162 = arith.addf %156, %161 : vector<4x384xf32>
    %c15 = arith.constant 15 : index
    %c0_64 = arith.constant 0 : index
    %c0_65 = arith.constant 0 : index
    %163 = vector.load %arg3[%c15, %c0_64, %c0_65] : memref<50x4x1xf32, #tpu.memory_space<vmem>>, vector<1x4x1xf32>
    %164 = vector.shape_cast %163 : vector<1x4x1xf32> to vector<4x1xf32>
    %165 = vector.extract_strided_slice %68 {offsets = [0, 45], sizes = [4, 384], strides = [1, 1]} : vector<4x640xf32> to vector<4x384xf32>
    %166 = vector.broadcast %164 : vector<4x1xf32> to vector<4x384xf32>
    %167 = arith.mulf %166, %165 : vector<4x384xf32>
    %168 = arith.addf %162, %167 : vector<4x384xf32>
    %c16 = arith.constant 16 : index
    %c0_66 = arith.constant 0 : index
    %c0_67 = arith.constant 0 : index
    %169 = vector.load %arg3[%c16, %c0_66, %c0_67] : memref<50x4x1xf32, #tpu.memory_space<vmem>>, vector<1x4x1xf32>
    %170 = vector.shape_cast %169 : vector<1x4x1xf32> to vector<4x1xf32>
    %171 = vector.extract_strided_slice %68 {offsets = [0, 46], sizes = [4, 384], strides = [1, 1]} : vector<4x640xf32> to vector<4x384xf32>
    %172 = vector.broadcast %170 : vector<4x1xf32> to vector<4x384xf32>
    %173 = arith.mulf %172, %171 : vector<4x384xf32>
    %174 = arith.addf %168, %173 : vector<4x384xf32>
    %c17 = arith.constant 17 : index
    %c0_68 = arith.constant 0 : index
    %c0_69 = arith.constant 0 : index
    %175 = vector.load %arg3[%c17, %c0_68, %c0_69] : memref<50x4x1xf32, #tpu.memory_space<vmem>>, vector<1x4x1xf32>
    %176 = vector.shape_cast %175 : vector<1x4x1xf32> to vector<4x1xf32>
    %177 = vector.extract_strided_slice %68 {offsets = [0, 47], sizes = [4, 384], strides = [1, 1]} : vector<4x640xf32> to vector<4x384xf32>
    %178 = vector.broadcast %176 : vector<4x1xf32> to vector<4x384xf32>
    %179 = arith.mulf %178, %177 : vector<4x384xf32>
    %180 = arith.addf %174, %179 : vector<4x384xf32>
    %c18 = arith.constant 18 : index
    %c0_70 = arith.constant 0 : index
    %c0_71 = arith.constant 0 : index
    %181 = vector.load %arg3[%c18, %c0_70, %c0_71] : memref<50x4x1xf32, #tpu.memory_space<vmem>>, vector<1x4x1xf32>
    %182 = vector.shape_cast %181 : vector<1x4x1xf32> to vector<4x1xf32>
    %183 = vector.extract_strided_slice %68 {offsets = [0, 48], sizes = [4, 384], strides = [1, 1]} : vector<4x640xf32> to vector<4x384xf32>
    %184 = vector.broadcast %182 : vector<4x1xf32> to vector<4x384xf32>
    %185 = arith.mulf %184, %183 : vector<4x384xf32>
    %186 = arith.addf %180, %185 : vector<4x384xf32>
    %c19 = arith.constant 19 : index
    %c0_72 = arith.constant 0 : index
    %c0_73 = arith.constant 0 : index
    %187 = vector.load %arg3[%c19, %c0_72, %c0_73] : memref<50x4x1xf32, #tpu.memory_space<vmem>>, vector<1x4x1xf32>
    %188 = vector.shape_cast %187 : vector<1x4x1xf32> to vector<4x1xf32>
    %189 = vector.extract_strided_slice %68 {offsets = [0, 49], sizes = [4, 384], strides = [1, 1]} : vector<4x640xf32> to vector<4x384xf32>
    %190 = vector.broadcast %188 : vector<4x1xf32> to vector<4x384xf32>
    %191 = arith.mulf %190, %189 : vector<4x384xf32>
    %192 = arith.addf %186, %191 : vector<4x384xf32>
    %c20 = arith.constant 20 : index
    %c0_74 = arith.constant 0 : index
    %c0_75 = arith.constant 0 : index
    %193 = vector.load %arg3[%c20, %c0_74, %c0_75] : memref<50x4x1xf32, #tpu.memory_space<vmem>>, vector<1x4x1xf32>
    %194 = vector.shape_cast %193 : vector<1x4x1xf32> to vector<4x1xf32>
    %195 = vector.extract_strided_slice %68 {offsets = [0, 50], sizes = [4, 384], strides = [1, 1]} : vector<4x640xf32> to vector<4x384xf32>
    %196 = vector.broadcast %194 : vector<4x1xf32> to vector<4x384xf32>
    %197 = arith.mulf %196, %195 : vector<4x384xf32>
    %198 = arith.addf %192, %197 : vector<4x384xf32>
    %c21 = arith.constant 21 : index
    %c0_76 = arith.constant 0 : index
    %c0_77 = arith.constant 0 : index
    %199 = vector.load %arg3[%c21, %c0_76, %c0_77] : memref<50x4x1xf32, #tpu.memory_space<vmem>>, vector<1x4x1xf32>
    %200 = vector.shape_cast %199 : vector<1x4x1xf32> to vector<4x1xf32>
    %201 = vector.extract_strided_slice %68 {offsets = [0, 66], sizes = [4, 384], strides = [1, 1]} : vector<4x640xf32> to vector<4x384xf32>
    %202 = vector.broadcast %200 : vector<4x1xf32> to vector<4x384xf32>
    %203 = arith.mulf %202, %201 : vector<4x384xf32>
    %204 = arith.addf %198, %203 : vector<4x384xf32>
    %c22 = arith.constant 22 : index
    %c0_78 = arith.constant 0 : index
    %c0_79 = arith.constant 0 : index
    %205 = vector.load %arg3[%c22, %c0_78, %c0_79] : memref<50x4x1xf32, #tpu.memory_space<vmem>>, vector<1x4x1xf32>
    %206 = vector.shape_cast %205 : vector<1x4x1xf32> to vector<4x1xf32>
    %207 = vector.extract_strided_slice %68 {offsets = [0, 67], sizes = [4, 384], strides = [1, 1]} : vector<4x640xf32> to vector<4x384xf32>
    %208 = vector.broadcast %206 : vector<4x1xf32> to vector<4x384xf32>
    %209 = arith.mulf %208, %207 : vector<4x384xf32>
    %210 = arith.addf %204, %209 : vector<4x384xf32>
    %c23 = arith.constant 23 : index
    %c0_80 = arith.constant 0 : index
    %c0_81 = arith.constant 0 : index
    %211 = vector.load %arg3[%c23, %c0_80, %c0_81] : memref<50x4x1xf32, #tpu.memory_space<vmem>>, vector<1x4x1xf32>
    %212 = vector.shape_cast %211 : vector<1x4x1xf32> to vector<4x1xf32>
    %213 = vector.extract_strided_slice %68 {offsets = [0, 68], sizes = [4, 384], strides = [1, 1]} : vector<4x640xf32> to vector<4x384xf32>
    %214 = vector.broadcast %212 : vector<4x1xf32> to vector<4x384xf32>
    %215 = arith.mulf %214, %213 : vector<4x384xf32>
    %216 = arith.addf %210, %215 : vector<4x384xf32>
    %c24 = arith.constant 24 : index
    %c0_82 = arith.constant 0 : index
    %c0_83 = arith.constant 0 : index
    %217 = vector.load %arg3[%c24, %c0_82, %c0_83] : memref<50x4x1xf32, #tpu.memory_space<vmem>>, vector<1x4x1xf32>
    %218 = vector.shape_cast %217 : vector<1x4x1xf32> to vector<4x1xf32>
    %219 = vector.extract_strided_slice %68 {offsets = [0, 69], sizes = [4, 384], strides = [1, 1]} : vector<4x640xf32> to vector<4x384xf32>
    %220 = vector.broadcast %218 : vector<4x1xf32> to vector<4x384xf32>
    %221 = arith.mulf %220, %219 : vector<4x384xf32>
    %222 = arith.addf %216, %221 : vector<4x384xf32>
    %c25 = arith.constant 25 : index
    %c0_84 = arith.constant 0 : index
    %c0_85 = arith.constant 0 : index
    %223 = vector.load %arg3[%c25, %c0_84, %c0_85] : memref<50x4x1xf32, #tpu.memory_space<vmem>>, vector<1x4x1xf32>
    %224 = vector.shape_cast %223 : vector<1x4x1xf32> to vector<4x1xf32>
    %225 = vector.extract_strided_slice %68 {offsets = [0, 70], sizes = [4, 384], strides = [1, 1]} : vector<4x640xf32> to vector<4x384xf32>
    %226 = vector.broadcast %224 : vector<4x1xf32> to vector<4x384xf32>
    %227 = arith.mulf %226, %225 : vector<4x384xf32>
    %228 = arith.addf %222, %227 : vector<4x384xf32>
    %c26 = arith.constant 26 : index
    %c0_86 = arith.constant 0 : index
    %c0_87 = arith.constant 0 : index
    %229 = vector.load %arg3[%c26, %c0_86, %c0_87] : memref<50x4x1xf32, #tpu.memory_space<vmem>>, vector<1x4x1xf32>
    %230 = vector.shape_cast %229 : vector<1x4x1xf32> to vector<4x1xf32>
    %231 = vector.extract_strided_slice %68 {offsets = [0, 71], sizes = [4, 384], strides = [1, 1]} : vector<4x640xf32> to vector<4x384xf32>
    %232 = vector.broadcast %230 : vector<4x1xf32> to vector<4x384xf32>
    %233 = arith.mulf %232, %231 : vector<4x384xf32>
    %234 = arith.addf %228, %233 : vector<4x384xf32>
    %c27 = arith.constant 27 : index
    %c0_88 = arith.constant 0 : index
    %c0_89 = arith.constant 0 : index
    %235 = vector.load %arg3[%c27, %c0_88, %c0_89] : memref<50x4x1xf32, #tpu.memory_space<vmem>>, vector<1x4x1xf32>
    %236 = vector.shape_cast %235 : vector<1x4x1xf32> to vector<4x1xf32>
    %237 = vector.extract_strided_slice %68 {offsets = [0, 72], sizes = [4, 384], strides = [1, 1]} : vector<4x640xf32> to vector<4x384xf32>
    %238 = vector.broadcast %236 : vector<4x1xf32> to vector<4x384xf32>
    %239 = arith.mulf %238, %237 : vector<4x384xf32>
    %240 = arith.addf %234, %239 : vector<4x384xf32>
    %c28 = arith.constant 28 : index
    %c0_90 = arith.constant 0 : index
    %c0_91 = arith.constant 0 : index
    %241 = vector.load %arg3[%c28, %c0_90, %c0_91] : memref<50x4x1xf32, #tpu.memory_space<vmem>>, vector<1x4x1xf32>
    %242 = vector.shape_cast %241 : vector<1x4x1xf32> to vector<4x1xf32>
    %243 = vector.extract_strided_slice %68 {offsets = [0, 88], sizes = [4, 384], strides = [1, 1]} : vector<4x640xf32> to vector<4x384xf32>
    %244 = vector.broadcast %242 : vector<4x1xf32> to vector<4x384xf32>
    %245 = arith.mulf %244, %243 : vector<4x384xf32>
    %246 = arith.addf %240, %245 : vector<4x384xf32>
    %c29 = arith.constant 29 : index
    %c0_92 = arith.constant 0 : index
    %c0_93 = arith.constant 0 : index
    %247 = vector.load %arg3[%c29, %c0_92, %c0_93] : memref<50x4x1xf32, #tpu.memory_space<vmem>>, vector<1x4x1xf32>
    %248 = vector.shape_cast %247 : vector<1x4x1xf32> to vector<4x1xf32>
    %249 = vector.extract_strided_slice %68 {offsets = [0, 89], sizes = [4, 384], strides = [1, 1]} : vector<4x640xf32> to vector<4x384xf32>
    %250 = vector.broadcast %248 : vector<4x1xf32> to vector<4x384xf32>
    %251 = arith.mulf %250, %249 : vector<4x384xf32>
    %252 = arith.addf %246, %251 : vector<4x384xf32>
    %c30 = arith.constant 30 : index
    %c0_94 = arith.constant 0 : index
    %c0_95 = arith.constant 0 : index
    %253 = vector.load %arg3[%c30, %c0_94, %c0_95] : memref<50x4x1xf32, #tpu.memory_space<vmem>>, vector<1x4x1xf32>
    %254 = vector.shape_cast %253 : vector<1x4x1xf32> to vector<4x1xf32>
    %255 = vector.extract_strided_slice %68 {offsets = [0, 90], sizes = [4, 384], strides = [1, 1]} : vector<4x640xf32> to vector<4x384xf32>
    %256 = vector.broadcast %254 : vector<4x1xf32> to vector<4x384xf32>
    %257 = arith.mulf %256, %255 : vector<4x384xf32>
    %258 = arith.addf %252, %257 : vector<4x384xf32>
    %c31 = arith.constant 31 : index
    %c0_96 = arith.constant 0 : index
    %c0_97 = arith.constant 0 : index
    %259 = vector.load %arg3[%c31, %c0_96, %c0_97] : memref<50x4x1xf32, #tpu.memory_space<vmem>>, vector<1x4x1xf32>
    %260 = vector.shape_cast %259 : vector<1x4x1xf32> to vector<4x1xf32>
    %261 = vector.extract_strided_slice %68 {offsets = [0, 91], sizes = [4, 384], strides = [1, 1]} : vector<4x640xf32> to vector<4x384xf32>
    %262 = vector.broadcast %260 : vector<4x1xf32> to vector<4x384xf32>
    %263 = arith.mulf %262, %261 : vector<4x384xf32>
    %264 = arith.addf %258, %263 : vector<4x384xf32>
    %c32 = arith.constant 32 : index
    %c0_98 = arith.constant 0 : index
    %c0_99 = arith.constant 0 : index
    %265 = vector.load %arg3[%c32, %c0_98, %c0_99] : memref<50x4x1xf32, #tpu.memory_space<vmem>>, vector<1x4x1xf32>
    %266 = vector.shape_cast %265 : vector<1x4x1xf32> to vector<4x1xf32>
    %267 = vector.extract_strided_slice %68 {offsets = [0, 92], sizes = [4, 384], strides = [1, 1]} : vector<4x640xf32> to vector<4x384xf32>
    %268 = vector.broadcast %266 : vector<4x1xf32> to vector<4x384xf32>
    %269 = arith.mulf %268, %267 : vector<4x384xf32>
    %270 = arith.addf %264, %269 : vector<4x384xf32>
    %c33 = arith.constant 33 : index
    %c0_100 = arith.constant 0 : index
    %c0_101 = arith.constant 0 : index
    %271 = vector.load %arg3[%c33, %c0_100, %c0_101] : memref<50x4x1xf32, #tpu.memory_space<vmem>>, vector<1x4x1xf32>
    %272 = vector.shape_cast %271 : vector<1x4x1xf32> to vector<4x1xf32>
    %273 = vector.extract_strided_slice %68 {offsets = [0, 93], sizes = [4, 384], strides = [1, 1]} : vector<4x640xf32> to vector<4x384xf32>
    %274 = vector.broadcast %272 : vector<4x1xf32> to vector<4x384xf32>
    %275 = arith.mulf %274, %273 : vector<4x384xf32>
    %276 = arith.addf %270, %275 : vector<4x384xf32>
    %c34 = arith.constant 34 : index
    %c0_102 = arith.constant 0 : index
    %c0_103 = arith.constant 0 : index
    %277 = vector.load %arg3[%c34, %c0_102, %c0_103] : memref<50x4x1xf32, #tpu.memory_space<vmem>>, vector<1x4x1xf32>
    %278 = vector.shape_cast %277 : vector<1x4x1xf32> to vector<4x1xf32>
    %279 = vector.extract_strided_slice %68 {offsets = [0, 94], sizes = [4, 384], strides = [1, 1]} : vector<4x640xf32> to vector<4x384xf32>
    %280 = vector.broadcast %278 : vector<4x1xf32> to vector<4x384xf32>
    %281 = arith.mulf %280, %279 : vector<4x384xf32>
    %282 = arith.addf %276, %281 : vector<4x384xf32>
    %c35 = arith.constant 35 : index
    %c0_104 = arith.constant 0 : index
    %c0_105 = arith.constant 0 : index
    %283 = vector.load %arg3[%c35, %c0_104, %c0_105] : memref<50x4x1xf32, #tpu.memory_space<vmem>>, vector<1x4x1xf32>
    %284 = vector.shape_cast %283 : vector<1x4x1xf32> to vector<4x1xf32>
    %285 = vector.extract_strided_slice %68 {offsets = [0, 110], sizes = [4, 384], strides = [1, 1]} : vector<4x640xf32> to vector<4x384xf32>
    %286 = vector.broadcast %284 : vector<4x1xf32> to vector<4x384xf32>
    %287 = arith.mulf %286, %285 : vector<4x384xf32>
    %288 = arith.addf %282, %287 : vector<4x384xf32>
    %c36 = arith.constant 36 : index
    %c0_106 = arith.constant 0 : index
    %c0_107 = arith.constant 0 : index
    %289 = vector.load %arg3[%c36, %c0_106, %c0_107] : memref<50x4x1xf32, #tpu.memory_space<vmem>>, vector<1x4x1xf32>
    %290 = vector.shape_cast %289 : vector<1x4x1xf32> to vector<4x1xf32>
    %291 = vector.extract_strided_slice %68 {offsets = [0, 111], sizes = [4, 384], strides = [1, 1]} : vector<4x640xf32> to vector<4x384xf32>
    %292 = vector.broadcast %290 : vector<4x1xf32> to vector<4x384xf32>
    %293 = arith.mulf %292, %291 : vector<4x384xf32>
    %294 = arith.addf %288, %293 : vector<4x384xf32>
    %c37 = arith.constant 37 : index
    %c0_108 = arith.constant 0 : index
    %c0_109 = arith.constant 0 : index
    %295 = vector.load %arg3[%c37, %c0_108, %c0_109] : memref<50x4x1xf32, #tpu.memory_space<vmem>>, vector<1x4x1xf32>
    %296 = vector.shape_cast %295 : vector<1x4x1xf32> to vector<4x1xf32>
    %297 = vector.extract_strided_slice %68 {offsets = [0, 112], sizes = [4, 384], strides = [1, 1]} : vector<4x640xf32> to vector<4x384xf32>
    %298 = vector.broadcast %296 : vector<4x1xf32> to vector<4x384xf32>
    %299 = arith.mulf %298, %297 : vector<4x384xf32>
    %300 = arith.addf %294, %299 : vector<4x384xf32>
    %c38 = arith.constant 38 : index
    %c0_110 = arith.constant 0 : index
    %c0_111 = arith.constant 0 : index
    %301 = vector.load %arg3[%c38, %c0_110, %c0_111] : memref<50x4x1xf32, #tpu.memory_space<vmem>>, vector<1x4x1xf32>
    %302 = vector.shape_cast %301 : vector<1x4x1xf32> to vector<4x1xf32>
    %303 = vector.extract_strided_slice %68 {offsets = [0, 113], sizes = [4, 384], strides = [1, 1]} : vector<4x640xf32> to vector<4x384xf32>
    %304 = vector.broadcast %302 : vector<4x1xf32> to vector<4x384xf32>
    %305 = arith.mulf %304, %303 : vector<4x384xf32>
    %306 = arith.addf %300, %305 : vector<4x384xf32>
    %c39 = arith.constant 39 : index
    %c0_112 = arith.constant 0 : index
    %c0_113 = arith.constant 0 : index
    %307 = vector.load %arg3[%c39, %c0_112, %c0_113] : memref<50x4x1xf32, #tpu.memory_space<vmem>>, vector<1x4x1xf32>
    %308 = vector.shape_cast %307 : vector<1x4x1xf32> to vector<4x1xf32>
    %309 = vector.extract_strided_slice %68 {offsets = [0, 114], sizes = [4, 384], strides = [1, 1]} : vector<4x640xf32> to vector<4x384xf32>
    %310 = vector.broadcast %308 : vector<4x1xf32> to vector<4x384xf32>
    %311 = arith.mulf %310, %309 : vector<4x384xf32>
    %312 = arith.addf %306, %311 : vector<4x384xf32>
    %c40 = arith.constant 40 : index
    %c0_114 = arith.constant 0 : index
    %c0_115 = arith.constant 0 : index
    %313 = vector.load %arg3[%c40, %c0_114, %c0_115] : memref<50x4x1xf32, #tpu.memory_space<vmem>>, vector<1x4x1xf32>
    %314 = vector.shape_cast %313 : vector<1x4x1xf32> to vector<4x1xf32>
    %315 = vector.extract_strided_slice %68 {offsets = [0, 115], sizes = [4, 384], strides = [1, 1]} : vector<4x640xf32> to vector<4x384xf32>
    %316 = vector.broadcast %314 : vector<4x1xf32> to vector<4x384xf32>
    %317 = arith.mulf %316, %315 : vector<4x384xf32>
    %318 = arith.addf %312, %317 : vector<4x384xf32>
    %c41 = arith.constant 41 : index
    %c0_116 = arith.constant 0 : index
    %c0_117 = arith.constant 0 : index
    %319 = vector.load %arg3[%c41, %c0_116, %c0_117] : memref<50x4x1xf32, #tpu.memory_space<vmem>>, vector<1x4x1xf32>
    %320 = vector.shape_cast %319 : vector<1x4x1xf32> to vector<4x1xf32>
    %321 = vector.extract_strided_slice %68 {offsets = [0, 116], sizes = [4, 384], strides = [1, 1]} : vector<4x640xf32> to vector<4x384xf32>
    %322 = vector.broadcast %320 : vector<4x1xf32> to vector<4x384xf32>
    %323 = arith.mulf %322, %321 : vector<4x384xf32>
    %324 = arith.addf %318, %323 : vector<4x384xf32>
    %c42 = arith.constant 42 : index
    %c0_118 = arith.constant 0 : index
    %c0_119 = arith.constant 0 : index
    %325 = vector.load %arg3[%c42, %c0_118, %c0_119] : memref<50x4x1xf32, #tpu.memory_space<vmem>>, vector<1x4x1xf32>
    %326 = vector.shape_cast %325 : vector<1x4x1xf32> to vector<4x1xf32>
    %327 = vector.extract_strided_slice %68 {offsets = [0, 132], sizes = [4, 384], strides = [1, 1]} : vector<4x640xf32> to vector<4x384xf32>
    %328 = vector.broadcast %326 : vector<4x1xf32> to vector<4x384xf32>
    %329 = arith.mulf %328, %327 : vector<4x384xf32>
    %330 = arith.addf %324, %329 : vector<4x384xf32>
    %c43 = arith.constant 43 : index
    %c0_120 = arith.constant 0 : index
    %c0_121 = arith.constant 0 : index
    %331 = vector.load %arg3[%c43, %c0_120, %c0_121] : memref<50x4x1xf32, #tpu.memory_space<vmem>>, vector<1x4x1xf32>
    %332 = vector.shape_cast %331 : vector<1x4x1xf32> to vector<4x1xf32>
    %333 = vector.extract_strided_slice %68 {offsets = [0, 133], sizes = [4, 384], strides = [1, 1]} : vector<4x640xf32> to vector<4x384xf32>
    %334 = vector.broadcast %332 : vector<4x1xf32> to vector<4x384xf32>
    %335 = arith.mulf %334, %333 : vector<4x384xf32>
    %336 = arith.addf %330, %335 : vector<4x384xf32>
    %c44 = arith.constant 44 : index
    %c0_122 = arith.constant 0 : index
    %c0_123 = arith.constant 0 : index
    %337 = vector.load %arg3[%c44, %c0_122, %c0_123] : memref<50x4x1xf32, #tpu.memory_space<vmem>>, vector<1x4x1xf32>
    %338 = vector.shape_cast %337 : vector<1x4x1xf32> to vector<4x1xf32>
    %339 = vector.extract_strided_slice %68 {offsets = [0, 134], sizes = [4, 384], strides = [1, 1]} : vector<4x640xf32> to vector<4x384xf32>
    %340 = vector.broadcast %338 : vector<4x1xf32> to vector<4x384xf32>
    %341 = arith.mulf %340, %339 : vector<4x384xf32>
    %342 = arith.addf %336, %341 : vector<4x384xf32>
    %c45 = arith.constant 45 : index
    %c0_124 = arith.constant 0 : index
    %c0_125 = arith.constant 0 : index
    %343 = vector.load %arg3[%c45, %c0_124, %c0_125] : memref<50x4x1xf32, #tpu.memory_space<vmem>>, vector<1x4x1xf32>
    %344 = vector.shape_cast %343 : vector<1x4x1xf32> to vector<4x1xf32>
    %345 = vector.extract_strided_slice %68 {offsets = [0, 135], sizes = [4, 384], strides = [1, 1]} : vector<4x640xf32> to vector<4x384xf32>
    %346 = vector.broadcast %344 : vector<4x1xf32> to vector<4x384xf32>
    %347 = arith.mulf %346, %345 : vector<4x384xf32>
    %348 = arith.addf %342, %347 : vector<4x384xf32>
    %c46 = arith.constant 46 : index
    %c0_126 = arith.constant 0 : index
    %c0_127 = arith.constant 0 : index
    %349 = vector.load %arg3[%c46, %c0_126, %c0_127] : memref<50x4x1xf32, #tpu.memory_space<vmem>>, vector<1x4x1xf32>
    %350 = vector.shape_cast %349 : vector<1x4x1xf32> to vector<4x1xf32>
    %351 = vector.extract_strided_slice %68 {offsets = [0, 136], sizes = [4, 384], strides = [1, 1]} : vector<4x640xf32> to vector<4x384xf32>
    %352 = vector.broadcast %350 : vector<4x1xf32> to vector<4x384xf32>
    %353 = arith.mulf %352, %351 : vector<4x384xf32>
    %354 = arith.addf %348, %353 : vector<4x384xf32>
    %c47 = arith.constant 47 : index
    %c0_128 = arith.constant 0 : index
    %c0_129 = arith.constant 0 : index
    %355 = vector.load %arg3[%c47, %c0_128, %c0_129] : memref<50x4x1xf32, #tpu.memory_space<vmem>>, vector<1x4x1xf32>
    %356 = vector.shape_cast %355 : vector<1x4x1xf32> to vector<4x1xf32>
    %357 = vector.extract_strided_slice %68 {offsets = [0, 137], sizes = [4, 384], strides = [1, 1]} : vector<4x640xf32> to vector<4x384xf32>
    %358 = vector.broadcast %356 : vector<4x1xf32> to vector<4x384xf32>
    %359 = arith.mulf %358, %357 : vector<4x384xf32>
    %360 = arith.addf %354, %359 : vector<4x384xf32>
    %c48 = arith.constant 48 : index
    %c0_130 = arith.constant 0 : index
    %c0_131 = arith.constant 0 : index
    %361 = vector.load %arg3[%c48, %c0_130, %c0_131] : memref<50x4x1xf32, #tpu.memory_space<vmem>>, vector<1x4x1xf32>
    %362 = vector.shape_cast %361 : vector<1x4x1xf32> to vector<4x1xf32>
    %363 = vector.extract_strided_slice %68 {offsets = [0, 138], sizes = [4, 384], strides = [1, 1]} : vector<4x640xf32> to vector<4x384xf32>
    %364 = vector.broadcast %362 : vector<4x1xf32> to vector<4x384xf32>
    %365 = arith.mulf %364, %363 : vector<4x384xf32>
    %366 = arith.addf %360, %365 : vector<4x384xf32>
    %367 = vector.extract_strided_slice %366 {offsets = [0, 0], sizes = [4, 16], strides = [1, 1]} : vector<4x384xf32> to vector<4x16xf32>
    %c0_132 = arith.constant 0 : index
    %c0_133 = arith.constant 0 : index
    %368 = vector.load %arg8[%c0_132, %c0_133] : memref<4x256xf32, #tpu.memory_space<vmem>>, vector<4x16xf32>
    tpu.vector_store %arg8[%c0_132, %c0_133], %367 {strides = array<i32>} : memref<4x256xf32, #tpu.memory_space<vmem>>, vector<4x16xf32>,
    %369 = vector.extract_strided_slice %366 {offsets = [0, 22], sizes = [4, 16], strides = [1, 1]} : vector<4x384xf32> to vector<4x16xf32>
    %c0_134 = arith.constant 0 : index
    %c16_135 = arith.constant 16 : index
    %370 = vector.load %arg8[%c0_134, %c16_135] : memref<4x256xf32, #tpu.memory_space<vmem>>, vector<4x16xf32>
    tpu.vector_store %arg8[%c0_134, %c16_135], %369 {strides = array<i32>} : memref<4x256xf32, #tpu.memory_space<vmem>>, vector<4x16xf32>,
    %371 = vector.extract_strided_slice %366 {offsets = [0, 44], sizes = [4, 16], strides = [1, 1]} : vector<4x384xf32> to vector<4x16xf32>
    %c0_136 = arith.constant 0 : index
    %c32_137 = arith.constant 32 : index
    %372 = vector.load %arg8[%c0_136, %c32_137] : memref<4x256xf32, #tpu.memory_space<vmem>>, vector<4x16xf32>
    tpu.vector_store %arg8[%c0_136, %c32_137], %371 {strides = array<i32>} : memref<4x256xf32, #tpu.memory_space<vmem>>, vector<4x16xf32>,
    %373 = vector.extract_strided_slice %366 {offsets = [0, 66], sizes = [4, 16], strides = [1, 1]} : vector<4x384xf32> to vector<4x16xf32>
    %c0_138 = arith.constant 0 : index
    %c48_139 = arith.constant 48 : index
    %374 = vector.load %arg8[%c0_138, %c48_139] : memref<4x256xf32, #tpu.memory_space<vmem>>, vector<4x16xf32>
    tpu.vector_store %arg8[%c0_138, %c48_139], %373 {strides = array<i32>} : memref<4x256xf32, #tpu.memory_space<vmem>>, vector<4x16xf32>,
    %375 = vector.extract_strided_slice %366 {offsets = [0, 88], sizes = [4, 16], strides = [1, 1]} : vector<4x384xf32> to vector<4x16xf32>
    %c0_140 = arith.constant 0 : index
    %c64 = arith.constant 64 : index
    %376 = vector.load %arg8[%c0_140, %c64] : memref<4x256xf32, #tpu.memory_space<vmem>>, vector<4x16xf32>
    tpu.vector_store %arg8[%c0_140, %c64], %375 {strides = array<i32>} : memref<4x256xf32, #tpu.memory_space<vmem>>, vector<4x16xf32>,
    %377 = vector.extract_strided_slice %366 {offsets = [0, 110], sizes = [4, 16], strides = [1, 1]} : vector<4x384xf32> to vector<4x16xf32>
    %c0_141 = arith.constant 0 : index
    %c80 = arith.constant 80 : index
    %378 = vector.load %arg8[%c0_141, %c80] : memref<4x256xf32, #tpu.memory_space<vmem>>, vector<4x16xf32>
    tpu.vector_store %arg8[%c0_141, %c80], %377 {strides = array<i32>} : memref<4x256xf32, #tpu.memory_space<vmem>>, vector<4x16xf32>,
    %379 = vector.extract_strided_slice %366 {offsets = [0, 132], sizes = [4, 16], strides = [1, 1]} : vector<4x384xf32> to vector<4x16xf32>
    %c0_142 = arith.constant 0 : index
    %c96 = arith.constant 96 : index
    %380 = vector.load %arg8[%c0_142, %c96] : memref<4x256xf32, #tpu.memory_space<vmem>>, vector<4x16xf32>
    tpu.vector_store %arg8[%c0_142, %c96], %379 {strides = array<i32>} : memref<4x256xf32, #tpu.memory_space<vmem>>, vector<4x16xf32>,
    %381 = vector.extract_strided_slice %366 {offsets = [0, 154], sizes = [4, 16], strides = [1, 1]} : vector<4x384xf32> to vector<4x16xf32>
    %c0_143 = arith.constant 0 : index
    %c112 = arith.constant 112 : index
    %382 = vector.load %arg8[%c0_143, %c112] : memref<4x256xf32, #tpu.memory_space<vmem>>, vector<4x16xf32>
    tpu.vector_store %arg8[%c0_143, %c112], %381 {strides = array<i32>} : memref<4x256xf32, #tpu.memory_space<vmem>>, vector<4x16xf32>,
    %383 = vector.extract_strided_slice %366 {offsets = [0, 176], sizes = [4, 16], strides = [1, 1]} : vector<4x384xf32> to vector<4x16xf32>
    %c0_144 = arith.constant 0 : index
    %c128 = arith.constant 128 : index
    %384 = vector.load %arg8[%c0_144, %c128] : memref<4x256xf32, #tpu.memory_space<vmem>>, vector<4x16xf32>
    tpu.vector_store %arg8[%c0_144, %c128], %383 {strides = array<i32>} : memref<4x256xf32, #tpu.memory_space<vmem>>, vector<4x16xf32>,
    %385 = vector.extract_strided_slice %366 {offsets = [0, 198], sizes = [4, 16], strides = [1, 1]} : vector<4x384xf32> to vector<4x16xf32>
    %c0_145 = arith.constant 0 : index
    %c144 = arith.constant 144 : index
    %386 = vector.load %arg8[%c0_145, %c144] : memref<4x256xf32, #tpu.memory_space<vmem>>, vector<4x16xf32>
    tpu.vector_store %arg8[%c0_145, %c144], %385 {strides = array<i32>} : memref<4x256xf32, #tpu.memory_space<vmem>>, vector<4x16xf32>,
    %387 = vector.extract_strided_slice %366 {offsets = [0, 220], sizes = [4, 16], strides = [1, 1]} : vector<4x384xf32> to vector<4x16xf32>
    %c0_146 = arith.constant 0 : index
    %c160 = arith.constant 160 : index
    %388 = vector.load %arg8[%c0_146, %c160] : memref<4x256xf32, #tpu.memory_space<vmem>>, vector<4x16xf32>
    tpu.vector_store %arg8[%c0_146, %c160], %387 {strides = array<i32>} : memref<4x256xf32, #tpu.memory_space<vmem>>, vector<4x16xf32>,
    %389 = vector.extract_strided_slice %366 {offsets = [0, 242], sizes = [4, 16], strides = [1, 1]} : vector<4x384xf32> to vector<4x16xf32>
    %c0_147 = arith.constant 0 : index
    %c176 = arith.constant 176 : index
    %390 = vector.load %arg8[%c0_147, %c176] : memref<4x256xf32, #tpu.memory_space<vmem>>, vector<4x16xf32>
    tpu.vector_store %arg8[%c0_147, %c176], %389 {strides = array<i32>} : memref<4x256xf32, #tpu.memory_space<vmem>>, vector<4x16xf32>,
    %391 = vector.extract_strided_slice %366 {offsets = [0, 264], sizes = [4, 16], strides = [1, 1]} : vector<4x384xf32> to vector<4x16xf32>
    %c0_148 = arith.constant 0 : index
    %c192 = arith.constant 192 : index
    %392 = vector.load %arg8[%c0_148, %c192] : memref<4x256xf32, #tpu.memory_space<vmem>>, vector<4x16xf32>
    tpu.vector_store %arg8[%c0_148, %c192], %391 {strides = array<i32>} : memref<4x256xf32, #tpu.memory_space<vmem>>, vector<4x16xf32>,
    %393 = vector.extract_strided_slice %366 {offsets = [0, 286], sizes = [4, 16], strides = [1, 1]} : vector<4x384xf32> to vector<4x16xf32>
    %c0_149 = arith.constant 0 : index
    %c208 = arith.constant 208 : index
    %394 = vector.load %arg8[%c0_149, %c208] : memref<4x256xf32, #tpu.memory_space<vmem>>, vector<4x16xf32>
    tpu.vector_store %arg8[%c0_149, %c208], %393 {strides = array<i32>} : memref<4x256xf32, #tpu.memory_space<vmem>>, vector<4x16xf32>,
    %395 = vector.extract_strided_slice %366 {offsets = [0, 308], sizes = [4, 16], strides = [1, 1]} : vector<4x384xf32> to vector<4x16xf32>
    %c0_150 = arith.constant 0 : index
    %c224 = arith.constant 224 : index
    %396 = vector.load %arg8[%c0_150, %c224] : memref<4x256xf32, #tpu.memory_space<vmem>>, vector<4x16xf32>
    tpu.vector_store %arg8[%c0_150, %c224], %395 {strides = array<i32>} : memref<4x256xf32, #tpu.memory_space<vmem>>, vector<4x16xf32>,
    %397 = vector.extract_strided_slice %366 {offsets = [0, 330], sizes = [4, 16], strides = [1, 1]} : vector<4x384xf32> to vector<4x16xf32>
    %c0_151 = arith.constant 0 : index
    %c240 = arith.constant 240 : index
    %398 = vector.load %arg8[%c0_151, %c240] : memref<4x256xf32, #tpu.memory_space<vmem>>, vector<4x16xf32>
    tpu.vector_store %arg8[%c0_151, %c240], %397 {strides = array<i32>} : memref<4x256xf32, #tpu.memory_space<vmem>>, vector<4x16xf32>,
    %c0_152 = arith.constant 0 : index
    %c0_153 = arith.constant 0 : index
    %399 = vector.load %arg8[%c0_152, %c0_153] : memref<4x256xf32, #tpu.memory_space<vmem>>, vector<4x256xf32>
    %400 = tpu.iota {dimensions = array<i32: 0>} : vector<4x256xi32>
    %c2_i32_154 = arith.constant 2 : i32
    %401 = vector.broadcast %c2_i32_154 : i32 to vector<4x256xi32>
    %402 = arith.cmpi slt, %400, %401 : vector<4x256xi32>
    %cst_155 = arith.constant 0.000000e+00 : f32
    %403 = vector.broadcast %cst_155 : f32 to vector<4x256xf32>
    %404 = arith.select %402, %399, %403 : vector<4x256xi1>, vector<4x256xf32>
    %cst_156 = arith.constant dense<0.000000e+00> : vector<256xf32>
    %405 = vector.multi_reduction <add>, %404, %cst_156 [0] : vector<4x256xf32> to vector<256xf32>
    %406 = vector.shape_cast %405 : vector<256xf32> to vector<1x256xf32>
    %c2_i32_157 = arith.constant 2 : i32
    %407 = vector.broadcast %c2_i32_157 : i32 to vector<4x256xi32>
    %408 = arith.cmpi sge, %400, %407 : vector<4x256xi32>
    %cst_158 = arith.constant 0.000000e+00 : f32
    %409 = vector.broadcast %cst_158 : f32 to vector<4x256xf32>
    %410 = arith.select %408, %399, %409 : vector<4x256xi1>, vector<4x256xf32>
    %cst_159 = arith.constant dense<0.000000e+00> : vector<256xf32>
    %411 = vector.multi_reduction <add>, %410, %cst_159 [0] : vector<4x256xf32> to vector<256xf32>
    %412 = vector.shape_cast %411 : vector<256xf32> to vector<1x256xf32>
    %413 = arith.negf %406 : vector<1x256xf32>
    %414 = math.exp %413 : vector<1x256xf32>
    %cst_160 = arith.constant 1.000000e+00 : f32
    %415 = vector.broadcast %cst_160 : f32 to vector<1x256xf32>
    %416 = arith.addf %415, %414 : vector<1x256xf32>
    %417 = arith.divf %415, %416 : vector<1x256xf32>
    %cst_161 = arith.constant 1.000000e+00 : f32
    %418 = vector.broadcast %cst_161 : f32 to vector<1x256xf32>
    %419 = arith.addf %417, %418 : vector<1x256xf32>
    %420 = arith.negf %412 : vector<1x256xf32>
    %421 = math.exp %420 : vector<1x256xf32>
    %cst_162 = arith.constant 1.000000e+00 : f32
    %422 = vector.broadcast %cst_162 : f32 to vector<1x256xf32>
    %423 = arith.addf %422, %421 : vector<1x256xf32>
    %424 = arith.divf %422, %423 : vector<1x256xf32>
    %cst_163 = arith.constant 1.000000e+00 : f32
    %425 = vector.broadcast %cst_163 : f32 to vector<1x256xf32>
    %426 = arith.addf %424, %425 : vector<1x256xf32>
    %c0_164 = arith.constant 0 : index
    %c0_165 = arith.constant 0 : index
    %c0_166 = arith.constant 0 : index
    %427 = vector.load %arg1[%c0_164, %c0_165, %c0_166] : memref<1x128x256xf32, #tpu.memory_space<vmem>>, vector<1x128x128xf32>
    %428 = vector.shape_cast %427 : vector<1x128x128xf32> to vector<128x128xf32>
    %429 = vector.extract_strided_slice %419 {offsets = [0, 0], sizes = [1, 128], strides = [1, 1]} : vector<1x256xf32> to vector<1x128xf32>
    %430 = vector.broadcast %429 : vector<1x128xf32> to vector<128x128xf32>
    %431 = arith.mulf %428, %430 : vector<128x128xf32>
    %c0_167 = arith.constant 0 : index
    %c0_168 = arith.constant 0 : index
    %432 = vector.load %arg9[%c0_167, %c0_168] : memref<128x256xf32, #tpu.memory_space<vmem>>, vector<128x128xf32>
    tpu.vector_store %arg9[%c0_167, %c0_168], %431 {strides = array<i32>} : memref<128x256xf32, #tpu.memory_space<vmem>>, vector<128x128xf32>,
    %c0_169 = arith.constant 0 : index
    %c0_170 = arith.constant 0 : index
    %c0_171 = arith.constant 0 : index
    %433 = vector.load %arg2[%c0_169, %c0_170, %c0_171] : memref<1x128x256xf32, #tpu.memory_space<vmem>>, vector<1x128x128xf32>
    %434 = vector.shape_cast %433 : vector<1x128x128xf32> to vector<128x128xf32>
    %435 = vector.extract_strided_slice %426 {offsets = [0, 0], sizes = [1, 128], strides = [1, 1]} : vector<1x256xf32> to vector<1x128xf32>
    %436 = vector.broadcast %435 : vector<1x128xf32> to vector<128x128xf32>
    %437 = arith.mulf %434, %436 : vector<128x128xf32>
    %c0_172 = arith.constant 0 : index
    %c0_173 = arith.constant 0 : index
    %438 = vector.load %arg10[%c0_172, %c0_173] : memref<128x256xf32, #tpu.memory_space<vmem>>, vector<128x128xf32>
    tpu.vector_store %arg10[%c0_172, %c0_173], %437 {strides = array<i32>} : memref<128x256xf32, #tpu.memory_space<vmem>>, vector<128x128xf32>,
    %c0_174 = arith.constant 0 : index
    %c0_175 = arith.constant 0 : index
    %c128_176 = arith.constant 128 : index
    %439 = vector.load %arg1[%c0_174, %c0_175, %c128_176] : memref<1x128x256xf32, #tpu.memory_space<vmem>>, vector<1x128x128xf32>
    %440 = vector.shape_cast %439 : vector<1x128x128xf32> to vector<128x128xf32>
    %441 = vector.extract_strided_slice %419 {offsets = [0, 128], sizes = [1, 128], strides = [1, 1]} : vector<1x256xf32> to vector<1x128xf32>
    %442 = vector.broadcast %441 : vector<1x128xf32> to vector<128x128xf32>
    %443 = arith.mulf %440, %442 : vector<128x128xf32>
    %c0_177 = arith.constant 0 : index
    %c128_178 = arith.constant 128 : index
    %444 = vector.load %arg9[%c0_177, %c128_178] : memref<128x256xf32, #tpu.memory_space<vmem>>, vector<128x128xf32>
    tpu.vector_store %arg9[%c0_177, %c128_178], %443 {strides = array<i32>} : memref<128x256xf32, #tpu.memory_space<vmem>>, vector<128x128xf32>,
    %c0_179 = arith.constant 0 : index
    %c0_180 = arith.constant 0 : index
    %c128_181 = arith.constant 128 : index
    %445 = vector.load %arg2[%c0_179, %c0_180, %c128_181] : memref<1x128x256xf32, #tpu.memory_space<vmem>>, vector<1x128x128xf32>
    %446 = vector.shape_cast %445 : vector<1x128x128xf32> to vector<128x128xf32>
    %447 = vector.extract_strided_slice %426 {offsets = [0, 128], sizes = [1, 128], strides = [1, 1]} : vector<1x256xf32> to vector<1x128xf32>
    %448 = vector.broadcast %447 : vector<1x128xf32> to vector<128x128xf32>
    %449 = arith.mulf %446, %448 : vector<128x128xf32>
    %c0_182 = arith.constant 0 : index
    %c128_183 = arith.constant 128 : index
    %450 = vector.load %arg10[%c0_182, %c128_183] : memref<128x256xf32, #tpu.memory_space<vmem>>, vector<128x128xf32>
    tpu.vector_store %arg10[%c0_182, %c128_183], %449 {strides = array<i32>} : memref<128x256xf32, #tpu.memory_space<vmem>>, vector<128x128xf32>,
    %c0_184 = arith.constant 0 : index
    %c0_185 = arith.constant 0 : index
    %451 = vector.load %arg9[%c0_184, %c0_185] : memref<128x256xf32, #tpu.memory_space<vmem>>, vector<128x256xf32>
    %c0_186 = arith.constant 0 : index
    %c0_187 = arith.constant 0 : index
    %452 = vector.load %arg10[%c0_186, %c0_187] : memref<128x256xf32, #tpu.memory_space<vmem>>, vector<128x256xf32>
    %453 = arith.addf %451, %452 : vector<128x256xf32>
    %cst_188 = arith.constant dense<0.000000e+00> : vector<128xf32>
    %454 = vector.multi_reduction <add>, %453, %cst_188 [1] : vector<128x256xf32> to vector<128xf32>
    %455 = vector.shape_cast %454 : vector<128xf32> to vector<128x1xf32>
    %cst_189 = arith.constant 3.906250e-03 : f32
    %456 = vector.broadcast %cst_189 : f32 to vector<128x1xf32>
    %457 = arith.mulf %455, %456 : vector<128x1xf32>
    %458 = vector.shape_cast %457 : vector<128x1xf32> to vector<128x1xf32>
    %459 = vector.broadcast %458 : vector<128x1xf32> to vector<128x128xf32>
    %c0_190 = arith.constant 0 : index
    %c0_191 = arith.constant 0 : index
    %460 = vector.load %arg4[%c0_190, %c0_191] : memref<8x128xf32, #tpu.memory_space<vmem>>, vector<8x128xf32>
    %cst_192 = arith.constant dense<0.000000e+00> : vector<8x128xf32>
    %461 = tpu.matmul %460, %459, %cst_192 {dimension_numbers = #tpu.dot_dimension_numbers<[1], [0], [0], [1], [0, 0, 1, 1], [], []>} : vector<8x128xf32>, vector<128x128xf32>, vector<8x128xf32> -> vector<8x128xf32>
    %cst_193 = arith.constant 0.000000e+00 : f32
    %462 = vector.broadcast %cst_193 : f32 to vector<8x128xf32>
    %463 = arith.maximumf %461, %462 : vector<8x128xf32>
    %c0_194 = arith.constant 0 : index
    %c0_195 = arith.constant 0 : index
    %464 = vector.load %arg5[%c0_194, %c0_195] : memref<256x8xf32, #tpu.memory_space<vmem>>, vector<256x8xf32>
    %cst_196 = arith.constant dense<0.000000e+00> : vector<256x128xf32>
    %465 = tpu.matmul %464, %463, %cst_196 {dimension_numbers = #tpu.dot_dimension_numbers<[1], [0], [0], [1], [0, 0, 1, 1], [], []>} : vector<256x8xf32>, vector<8x128xf32>, vector<256x128xf32> -> vector<256x128xf32>
    %466 = vector.extract_strided_slice %465 {offsets = [0, 0], sizes = [256, 1], strides = [1, 1]} : vector<256x128xf32> to vector<256x1xf32>
    %467 = vector.extract_strided_slice %466 {offsets = [0, 0], sizes = [128, 1], strides = [1, 1]} : vector<256x1xf32> to vector<128x1xf32>
    %468 = vector.extract_strided_slice %466 {offsets = [128, 0], sizes = [128, 1], strides = [1, 1]} : vector<256x1xf32> to vector<128x1xf32>
    %469 = arith.maximumf %467, %468 : vector<128x1xf32>
    %470 = arith.subf %467, %469 : vector<128x1xf32>
    %471 = math.exp %470 : vector<128x1xf32>
    %472 = arith.subf %468, %469 : vector<128x1xf32>
    %473 = math.exp %472 : vector<128x1xf32>
    %474 = arith.addf %471, %473 : vector<128x1xf32>
    %cst_197 = arith.constant 1.000000e+00 : f32
    %475 = vector.broadcast %cst_197 : f32 to vector<128x1xf32>
    %476 = arith.divf %475, %474 : vector<128x1xf32>
    %477 = arith.mulf %471, %476 : vector<128x1xf32>
    %478 = arith.mulf %473, %476 : vector<128x1xf32>
    %c0_198 = arith.constant 0 : index
    %c0_199 = arith.constant 0 : index
    %479 = vector.load %arg9[%c0_198, %c0_199] : memref<128x256xf32, #tpu.memory_space<vmem>>, vector<128x256xf32>
    %480 = vector.broadcast %477 : vector<128x1xf32> to vector<128x256xf32>
    %481 = arith.mulf %479, %480 : vector<128x256xf32>
    %c0_200 = arith.constant 0 : index
    %c0_201 = arith.constant 0 : index
    %482 = vector.load %arg10[%c0_200, %c0_201] : memref<128x256xf32, #tpu.memory_space<vmem>>, vector<128x256xf32>
    %483 = vector.broadcast %478 : vector<128x1xf32> to vector<128x256xf32>
    %484 = arith.mulf %482, %483 : vector<128x256xf32>
    %485 = arith.addf %481, %484 : vector<128x256xf32>
    %c0_202 = arith.constant 0 : index
    %c0_203 = arith.constant 0 : index
    %c0_204 = arith.constant 0 : index
    %486 = vector.load %arg6[%c0_202, %c0_203, %c0_204] : memref<1x128x256xf32, #tpu.memory_space<vmem>>, vector<1x128x256xf32>
    %487 = vector.shape_cast %486 : vector<1x128x256xf32> to vector<128x256xf32>
    %488 = vector.shape_cast %485 : vector<128x256xf32> to vector<1x128x256xf32>
    tpu.vector_store %arg6[%c0_202, %c0_203, %c0_204], %488 {strides = array<i32>} : memref<1x128x256xf32, #tpu.memory_space<vmem>>, vector<1x128x256xf32>,
    return
  }
  func.func @transform_0(%arg0: i32) -> (i32, i32, i32) {
    %c0_i32 = arith.constant 0 : i32
    %c0_i32_0 = arith.constant 0 : i32
    %c0_i32_1 = arith.constant 0 : i32
    return %arg0, %c0_i32, %c0_i32_0 : i32, i32, i32
  }
  func.func @transform_1(%arg0: i32) -> (i32, i32, i32) {
    %c0_i32 = arith.constant 0 : i32
    %c0_i32_0 = arith.constant 0 : i32
    %c0_i32_1 = arith.constant 0 : i32
    return %arg0, %c0_i32, %c0_i32_0 : i32, i32, i32
  }
  func.func @transform_2(%arg0: i32) -> (i32, i32, i32) {
    %c0_i32 = arith.constant 0 : i32
    %c0_i32_0 = arith.constant 0 : i32
    %c0_i32_1 = arith.constant 0 : i32
    %c0_i32_2 = arith.constant 0 : i32
    return %c0_i32, %c0_i32_0, %c0_i32_1 : i32, i32, i32
  }
  func.func @transform_3(%arg0: i32) -> (i32, i32) {
    %c0_i32 = arith.constant 0 : i32
    %c0_i32_0 = arith.constant 0 : i32
    %c0_i32_1 = arith.constant 0 : i32
    return %c0_i32, %c0_i32_0 : i32, i32
  }
  func.func @transform_4(%arg0: i32) -> (i32, i32) {
    %c0_i32 = arith.constant 0 : i32
    %c0_i32_0 = arith.constant 0 : i32
    %c0_i32_1 = arith.constant 0 : i32
    return %c0_i32, %c0_i32_0 : i32, i32
  }
  func.func @transform_5(%arg0: i32) -> (i32, i32, i32) {
    %c0_i32 = arith.constant 0 : i32
    %c0_i32_0 = arith.constant 0 : i32
    %c0_i32_1 = arith.constant 0 : i32
    return %arg0, %c0_i32, %c0_i32_0 : i32, i32, i32
  }
}

</mosaic_0001>

<llo_original>
// kernel: squeeze.4
$region0: #{squeeze.4}
  %s0 = inlined_call_operand.vmem [shape: f32[7,7], index: 0, kind: input, shape index: {}]
  %s1 = inlined_call_operand.vmem [shape: f32[49,1], index: 1, kind: output, shape index: {}]
  $region1: #{squeeze.4} parent=0
    #allocation0 [shape = 'u8[4096]{0}', space=vmem, size = 0x1000, scoped, tag = 'scoped mem for output reshape']
    %v2 = vld [vmem:[%s0] sm:$0x1]
    %vm3 = vcmask 56320
    %4 = vst.msk [vmem:[#allocation0] sm:$0x1] %vm3, %v2
    %s5 = scalar_lea.vmem %s0, 6
    %v6 = vld [vmem:[%s5] sm:$0x1]
    %7 = vrot.lane.b32.xlu0 %v6, 42
    %v8 = vpop.permute.xlu0 %7
    %vm9 = vcmask 400720
    %10 = vst.msk [vmem:[#allocation0] sm:$0x1] %vm9, %v8
    %s11 = scalar_lea.vmem %s0, 5
    %v12 = vld [vmem:[%s11] sm:$0x1]
    %13 = vrot.lane.b32.xlu0 %v12, 35
    %v14 = vpop.permute.xlu0 %13
    %vm15 = vcmask 343320
    %16 = vst.msk [vmem:[#allocation0] sm:$0x1] %vm15, %v14
    %s17 = scalar_lea.vmem %s0, 4
    %v18 = vld [vmem:[%s17] sm:$0x1]
    %19 = vrot.lane.b32.xlu0 %v18, 28
    %v20 = vpop.permute.xlu0 %19
    %vm21 = vcmask 285920
    %22 = vst.msk [vmem:[#allocation0] sm:$0x1] %vm21, %v20
    %s23 = scalar_lea.vmem %s0, 3
    %v24 = vld [vmem:[%s23] sm:$0x1]
    %25 = vrot.lane.b32.xlu0 %v24, 21
    %v26 = vpop.permute.xlu0 %25
    %vm27 = vcmask 228520
    %28 = vst.msk [vmem:[#allocation0] sm:$0x1] %vm27, %v26
    %s29 = scalar_lea.vmem %s0, 2
    %v30 = vld [vmem:[%s29] sm:$0x1]
    %31 = vrot.lane.b32.xlu0 %v30, 14
    %v32 = vpop.permute.xlu0 %31
    %vm33 = vcmask 171120
    %34 = vst.msk [vmem:[#allocation0] sm:$0x1] %vm33, %v32
    %s35 = scalar_lea.vmem %s0, 1
    %v36 = vld [vmem:[%s35] sm:$0x1]
    %37 = vrot.lane.b32.xlu0 %v36, 7
    %v38 = vpop.permute.xlu0 %37
    %vm39 = vcmask 113720
    %40 = vst.msk [vmem:[#allocation0] sm:$0x1] %vm39, %v38
    %s42 = sshll.u32 1, 1
    %s43 = ssub.s32 %s42, 1
    %v45 = vld [vmem:[#allocation0] sm:%s43]
    %s46 = sshll.u32 1, 1
    %s47 = ssub.s32 %s46, 1
    %48 = vst [vmem:[%s1] sm:%s47] %v45

// kernel: csef_forward.1
$region0: #{csef_forward.1}
  #allocation0 [shape = 'u32[]', space=smem, size = 0x4, offset = 0x4, fixed_abs, tag = 'smem constant byte address 0x4 - core index']
  #allocation1 [shape = 'u32[144,128]{1,0:T(1,128)}', space=vmem, size = 0x12000, scoped, tag = 'internal scratch']
  #allocation2 [shape = 'f32[4,640]{1,0:T(4,128)}', space=vmem, size = 0x2800, scoped, tag = 'scratch operand']
  #allocation3 [shape = 'f32[4,256]{1,0:T(4,128)}', space=vmem, size = 0x1000, scoped, tag = 'scratch operand']
  #allocation4 [shape = 'f32[128,256]{1,0:T(8,128)}', space=vmem, size = 0x20000, scoped, tag = 'scratch operand']
  #allocation5 [shape = 'f32[128,256]{1,0:T(8,128)}', space=vmem, size = 0x20000, scoped, tag = 'scratch operand']
  %s0 = inlined_call_operand.vmem [shape: f32[2,128,256], index: 0, kind: input, shape index: {}]
  %s1 = inlined_call_operand.vmem [shape: f32[2,128,256], index: 1, kind: input, shape index: {}]
  %s2 = inlined_call_operand.vmem [shape: f32[50,4,1], index: 2, kind: input, shape index: {}]
  %s3 = inlined_call_operand.vmem [shape: f32[8,128], index: 3, kind: input, shape index: {}]
  %s4 = inlined_call_operand.vmem [shape: f32[256,8], index: 4, kind: input, shape index: {}]
  %s5 = inlined_call_operand.vmem [shape: f32[2,128,256], index: 5, kind: output, shape index: {}]
  %s6 = sld [smem:[#allocation0]]
  $region53: #{csef_forward.1} parent=0
    _
  %s8 = ssub.s32 1, %s6
  %s9 = scalar_select 0, %s8, %s6
  loop: start=0, step=1, limit=4
  $region2: #{csef_forward.1} parent=0 // loop_pre_header
    _
  $region3: #{csef_forward.1} parent=0 // loop_header
    %s11 = sphi 0, %s15
    %p12 = scmp.ge.s32.totalorder %s11, 4
    %s21 = sphi 0, %s23
    %s24 = sphi 0, %s21
    %s25 = sphi 0, %s24
    %s41 = sphi 0, %s25
    %s47 = sphi 0, %s49
    %s50 = sphi 0, %s47
    %s51 = sphi 0, %s50
    %s67 = sphi 0, %s51
    %s71 = sphi 0, %s71
    %s73 = sphi 0, %s71
    %s74 = sphi 0, %s73
    %s88 = sphi 0, %s74
    %s92 = sphi 0, %s92
    %s94 = sphi 0, %s92
    %s95 = sphi 0, %s94
    %s109 = sphi 0, %s95
    %s113 = sphi 0, %s113
    %s115 = sphi 0, %s113
    %s116 = sphi 0, %s115
    %s130 = sphi 0, %s116
    %s136 = sphi 0, %s138
    %s139 = sphi 0, %s136
    %s140 = sphi 0, %s139
    %s156 = sphi 0, %s140
  $region4: #{csef_forward.1} parent=0 // loop_header_branch
    %14 = sbr.rel (%p12) target = $region8
  $region5: #{csef_forward.1} parent=0 // loop_body
    %s16 = ssub.s32 %s11, 1
    %s17 = ssub.s32 %s11, 2
    %s18 = sadd.s32 %s11, 1
    %s19 = ssub.s32 %s11, %s18
    %p20 = scmp.eq.s32.totalorder %s19, 0
    %s22 = sadd.s32 %s21, 1
    %s23 = scalar_select %p20, %s21, %s22
    %p26 = pneg %p20
    %p27 = scmp.eq.s32.totalorder %s11, 1
    %p28 = por %p26, %p27
    %p29 = scmp.ne.s32.totalorder %s21, %s24
    %p30 = scmp.eq.s32.totalorder %s11, 0
    %p31 = por %p29, %p30
    %p32 = scmp.ne.s32.totalorder %s21, %s24
    %p33 = scmp.eq.s32.totalorder %s16, 1
    %p34 = por %p32, %p33
    %p35 = scmp.ne.s32.totalorder %s24, %s25
    %p36 = scmp.eq.s32.totalorder %s16, 0
    %p37 = por %p35, %p36
    %p38 = scmp.ne.s32.totalorder %s24, %s25
    %p39 = scmp.eq.s32.totalorder %s17, 1
    %p40 = por %p38, %p39
    %p42 = scmp.ne.s32.totalorder %s25, %s41
    %p43 = scmp.eq.s32.totalorder %s17, 0
    %p44 = por %p42, %p43
    %s45 = ssub.s32 %s11, %s18
    %p46 = scmp.eq.s32.totalorder %s45, 0
    %s48 = sadd.s32 %s47, 1
    %s49 = scalar_select %p46, %s47, %s48
    %p52 = pneg %p46
    %p53 = scmp.eq.s32.totalorder %s11, 1
    %p54 = por %p52, %p53
    %p55 = scmp.ne.s32.totalorder %s47, %s50
    %p56 = scmp.eq.s32.totalorder %s11, 0
    %p57 = por %p55, %p56
    %p58 = scmp.ne.s32.totalorder %s47, %s50
    %p59 = scmp.eq.s32.totalorder %s16, 1
    %p60 = por %p58, %p59
    %p61 = scmp.ne.s32.totalorder %s50, %s51
    %p62 = scmp.eq.s32.totalorder %s16, 0
    %p63 = por %p61, %p62
    %p64 = scmp.ne.s32.totalorder %s50, %s51
    %p65 = scmp.eq.s32.totalorder %s17, 1
    %p66 = por %p64, %p65
    %p68 = scmp.ne.s32.totalorder %s51, %s67
    %p69 = scmp.eq.s32.totalorder %s17, 0
    %p70 = por %p68, %p69
    %s72 = sadd.s32 %s71, 1
    %p75 = scmp.eq.s32.totalorder %s11, 1
    %p76 = scmp.ne.s32.totalorder %s71, %s73
    %p77 = scmp.eq.s32.totalorder %s11, 0
    %p78 = por %p76, %p77
    %p79 = scmp.ne.s32.totalorder %s71, %s73
    %p80 = scmp.eq.s32.totalorder %s16, 1
    %p81 = por %p79, %p80
    %p82 = scmp.ne.s32.totalorder %s73, %s74
    %p83 = scmp.eq.s32.totalorder %s16, 0
    %p84 = por %p82, %p83
    %p85 = scmp.ne.s32.totalorder %s73, %s74
    %p86 = scmp.eq.s32.totalorder %s17, 1
    %p87 = por %p85, %p86
    %p89 = scmp.ne.s32.totalorder %s74, %s88
    %p90 = scmp.eq.s32.totalorder %s17, 0
    %p91 = por %p89, %p90
    %s93 = sadd.s32 %s92, 1
    %p96 = scmp.eq.s32.totalorder %s11, 1
    %p97 = scmp.ne.s32.totalorder %s92, %s94
    %p98 = scmp.eq.s32.totalorder %s11, 0
    %p99 = por %p97, %p98
    %p100 = scmp.ne.s32.totalorder %s92, %s94
    %p101 = scmp.eq.s32.totalorder %s16, 1
    %p102 = por %p100, %p101
    %p103 = scmp.ne.s32.totalorder %s94, %s95
    %p104 = scmp.eq.s32.totalorder %s16, 0
    %p105 = por %p103, %p104
    %p106 = scmp.ne.s32.totalorder %s94, %s95
    %p107 = scmp.eq.s32.totalorder %s17, 1
    %p108 = por %p106, %p107
    %p110 = scmp.ne.s32.totalorder %s95, %s109
    %p111 = scmp.eq.s32.totalorder %s17, 0
    %p112 = por %p110, %p111
    %s114 = sadd.s32 %s113, 1
    %p117 = scmp.eq.s32.totalorder %s11, 1
    %p118 = scmp.ne.s32.totalorder %s113, %s115
    %p119 = scmp.eq.s32.totalorder %s11, 0
    %p120 = por %p118, %p119
    %p121 = scmp.ne.s32.totalorder %s113, %s115
    %p122 = scmp.eq.s32.totalorder %s16, 1
    %p123 = por %p121, %p122
    %p124 = scmp.ne.s32.totalorder %s115, %s116
    %p125 = scmp.eq.s32.totalorder %s16, 0
    %p126 = por %p124, %p125
    %p127 = scmp.ne.s32.totalorder %s115, %s116
    %p128 = scmp.eq.s32.totalorder %s17, 1
    %p129 = por %p127, %p128
    %p131 = scmp.ne.s32.totalorder %s116, %s130
    %p132 = scmp.eq.s32.totalorder %s17, 0
    %p133 = por %p131, %p132
    %s134 = ssub.s32 %s11, %s18
    %p135 = scmp.eq.s32.totalorder %s134, 0
    %s137 = sadd.s32 %s136, 1
    %s138 = scalar_select %p135, %s136, %s137
    %p141 = pneg %p135
    %p142 = scmp.eq.s32.totalorder %s11, 1
    %p143 = por %p141, %p142
    %p144 = scmp.ne.s32.totalorder %s136, %s139
    %p145 = scmp.eq.s32.totalorder %s11, 0
    %p146 = por %p144, %p145
    %p147 = scmp.ne.s32.totalorder %s136, %s139
    %p148 = scmp.eq.s32.totalorder %s16, 1
    %p149 = por %p147, %p148
    %p150 = scmp.ne.s32.totalorder %s139, %s140
    %p151 = scmp.eq.s32.totalorder %s16, 0
    %p152 = por %p150, %p151
    %p153 = scmp.ne.s32.totalorder %s139, %s140
    %p154 = scmp.eq.s32.totalorder %s17, 1
    %p155 = por %p153, %p154
    %p157 = scmp.ne.s32.totalorder %s140, %s156
    %p158 = scmp.eq.s32.totalorder %s17, 0
    %p159 = por %p157, %p158
    %p160 = scmp.le.s32.totalorder 1, %s11
    %p161 = scmp.lt.s32.totalorder %s11, 3
    %p162 = pnand %p160, %p161
    %p163 = pneg %p162
    // Predicated region
    $region9: #{csef_forward.1} parent=5 // pred_check
      _
    $region10: #{csef_forward.1} parent=5 // pred_check_branch
      %165 = sbr.rel (%p162) target = $region12
    $region11: #{csef_forward.1} parent=5 // pred_region
      %s166 = ssub.s32 %s11, 1
      // Predicated region
      $region13: #{csef_forward.1} parent=11 // pred_check
        %p167 = pneg %p84
      $region14: #{csef_forward.1} parent=11 // pred_check_branch
        %169 = sbr.rel (%p167) target = $region16
      $region15: #{csef_forward.1} parent=11 // pred_region
        _
      $region16: #{csef_forward.1} parent=11 // pred_fallthru
        _
      // Predicated region
      $region17: #{csef_forward.1} parent=11 // pred_check
        %p170 = pneg %p105
      $region18: #{csef_forward.1} parent=11 // pred_check_branch
        %172 = sbr.rel (%p170) target = $region20
      $region19: #{csef_forward.1} parent=11 // pred_region
        _
      $region20: #{csef_forward.1} parent=11 // pred_fallthru
        _
      // Predicated region
      $region21: #{csef_forward.1} parent=11 // pred_check
        %p173 = pneg %p126
      $region22: #{csef_forward.1} parent=11 // pred_check_branch
        %175 = sbr.rel (%p173) target = $region24
      $region23: #{csef_forward.1} parent=11 // pred_region
        _
      $region24: #{csef_forward.1} parent=11 // pred_fallthru
        _
    $region12: #{csef_forward.1} parent=5 // pred_fallthru
      _
    %p176 = scmp.lt.s32.totalorder %s11, 2
    // Predicated region
    $region25: #{csef_forward.1} parent=5 // pred_check
      %p177 = pneg %p176
    $region26: #{csef_forward.1} parent=5 // pred_check_branch
      %179 = sbr.rel (%p177) target = $region28
    $region27: #{csef_forward.1} parent=5 // pred_region
      // Predicated region
      $region29: #{csef_forward.1} parent=27 // pred_check
        %p180 = pneg %p31
      $region30: #{csef_forward.1} parent=27 // pred_check_branch
        %182 = sbr.rel (%p180) target = $region32
      $region31: #{csef_forward.1} parent=27 // pred_region
        %p183 = scmp.lt.s32.totalorder %s11, 1
        %s184 = scalar_select %p183, %s11, 1
        %s185 = smul.addr %s184, 32
        %s186 = smul.addr %s185, 8
        %s187 = scalar_lea.vmem %s0, %s186
      $region32: #{csef_forward.1} parent=27 // pred_fallthru
        _
      // Predicated region
      $region33: #{csef_forward.1} parent=27 // pred_check
        %p188 = pneg %p57
      $region34: #{csef_forward.1} parent=27 // pred_check_branch
        %190 = sbr.rel (%p188) target = $region36
      $region35: #{csef_forward.1} parent=27 // pred_region
        %p191 = scmp.lt.s32.totalorder %s11, 1
        %s192 = scalar_select %p191, %s11, 1
        %s193 = smul.addr %s192, 32
        %s194 = smul.addr %s193, 8
        %s195 = scalar_lea.vmem %s1, %s194
      $region36: #{csef_forward.1} parent=27 // pred_fallthru
        _
    $region28: #{csef_forward.1} parent=5 // pred_fallthru
      _
    %p196 = scmp.le.s32.totalorder 1, %s11
    %p197 = scmp.lt.s32.totalorder %s11, 3
    %p198 = pnand %p196, %p197
    %p199 = pneg %p198
    // Predicated region
    $region37: #{csef_forward.1} parent=5 // pred_check
      _
    $region38: #{csef_forward.1} parent=5 // pred_check_branch
      %201 = sbr.rel (%p198) target = $region40
    $region39: #{csef_forward.1} parent=5 // pred_region
      %s202 = ssub.s32 %s11, 1
      %p203 = scmp.lt.s32.totalorder %s16, 1
      %s204 = scalar_select %p203, %s16, 1
      %s205 = smul.addr %s204, 32
      %s206 = smul.addr %s205, 8
      %s207 = scalar_lea.vmem %s0, %s206
      %p208 = pneg %p37
      %p209 = pneg %p34
      %p210 = scmp.lt.s32.totalorder %s16, 1
      %s211 = scalar_select %p210, %s16, 1
      %s212 = smul.addr %s211, 32
      %s213 = smul.addr %s212, 8
      %s214 = scalar_lea.vmem %s1, %s213
      %p215 = pneg %p63
      %p216 = pneg %p60
      %p217 = pneg %p84
      %p218 = pneg %p81
      %p219 = pneg %p105
      %p220 = pneg %p102
      %p221 = pneg %p126
      %p222 = pneg %p123
      %p223 = pneg %p152
      %p224 = pneg %p149
      %p225 = scmp.lt.s32.totalorder %s16, 1
      %s226 = scalar_select %p225, %s16, 1
      %s227 = smul.addr %s226, 32
      %s228 = smul.addr %s227, 8
      %s229 = scalar_lea.vmem %s5, %s228
      %p230 = scmp.lt.s32.totalorder %s16, 1
      %s231 = scalar_select %p230, %s16, 1
      %s232 = smul.addr %s231, 32
      %s233 = smul.addr %s232, 8
      %s234 = scalar_lea.vmem %s0, %s233
      %p235 = scmp.lt.s32.totalorder %s16, 1
      %s236 = scalar_select %p235, %s16, 1
      %s237 = smul.addr %s236, 32
      %s238 = smul.addr %s237, 8
      %s239 = scalar_lea.vmem %s1, %s238
      %p240 = scmp.lt.s32.totalorder %s16, 1
      %s241 = scalar_select %p240, %s16, 1
      %s242 = smul.addr %s241, 32
      %s243 = smul.addr %s242, 8
      %s244 = scalar_lea.vmem %s5, %s243
      %v245 = vld [vmem:[%s234] sm:$0xff]
      %v246 = vld [vmem:[%s234 + $0x8] sm:$0xff]
      %v247 = vld [vmem:[%s234 + $0x10] sm:$0xff]
      %v248 = vld [vmem:[%s234 + $0x18] sm:$0xff]
      %v249 = vld [vmem:[%s234 + $0x20] sm:$0xff]
      %v250 = vld [vmem:[%s234 + $0x28] sm:$0xff]
      %v251 = vld [vmem:[%s234 + $0x30] sm:$0xff]
      %v252 = vld [vmem:[%s234 + $0x38] sm:$0xff]
      %v253 = vld [vmem:[%s234 + $0x40] sm:$0xff]
      %v254 = vld [vmem:[%s234 + $0x48] sm:$0xff]
      %v255 = vld [vmem:[%s234 + $0x50] sm:$0xff]
      %v256 = vld [vmem:[%s234 + $0x58] sm:$0xff]
      %v257 = vld [vmem:[%s234 + $0x60] sm:$0xff]
      %v258 = vld [vmem:[%s234 + $0x68] sm:$0xff]
      %v259 = vld [vmem:[%s234 + $0x70] sm:$0xff]
      %v260 = vld [vmem:[%s234 + $0x78] sm:$0xff]
      %v261 = vld [vmem:[%s234 + $0x80] sm:$0xff]
      %v262 = vld [vmem:[%s234 + $0x88] sm:$0xff]
      %v263 = vld [vmem:[%s234 + $0x90] sm:$0xff]
      %v264 = vld [vmem:[%s234 + $0x98] sm:$0xff]
      %v265 = vld [vmem:[%s234 + $0xa0] sm:$0xff]
      %v266 = vld [vmem:[%s234 + $0xa8] sm:$0xff]
      %v267 = vld [vmem:[%s234 + $0xb0] sm:$0xff]
      %v268 = vld [vmem:[%s234 + $0xb8] sm:$0xff]
      %v269 = vld [vmem:[%s234 + $0xc0] sm:$0xff]
      %v270 = vld [vmem:[%s234 + $0xc8] sm:$0xff]
      %v271 = vld [vmem:[%s234 + $0xd0] sm:$0xff]
      %v272 = vld [vmem:[%s234 + $0xd8] sm:$0xff]
      %v273 = vld [vmem:[%s234 + $0xe0] sm:$0xff]
      %v274 = vld [vmem:[%s234 + $0xe8] sm:$0xff]
      %v275 = vld [vmem:[%s234 + $0xf0] sm:$0xff]
      %v276 = vld [vmem:[%s234 + $0xf8] sm:$0xff]
      %v277 = vmax.f32 %v245, %v249
      %v278 = vmax.f32 %v247, %v251
      %v279 = vmax.f32 %v277, %v253
      %v280 = vmax.f32 %v278, %v255
      %v281 = vmax.f32 %v279, %v257
      %v282 = vmax.f32 %v280, %v259
      %v283 = vmax.f32 %v281, %v261
      %v284 = vmax.f32 %v282, %v263
      %v285 = vmax.f32 %v283, %v265
      %v286 = vmax.f32 %v284, %v267
      %v287 = vmax.f32 %v285, %v269
      %v288 = vmax.f32 %v286, %v271
      %v289 = vmax.f32 %v287, %v273
      %v290 = vmax.f32 %v288, %v275
      %v291 = vmax.f32 %v289, %v290
      %v292 = vrot.slane %v291, 4
      %v293 = vmax.f32 %v291, %v292
      %v294 = vrot.slane %v293, 2
      %v295 = vmax.f32 %v293, %v294
      %v296 = vrot.slane %v295, 1
      %v297 = vmax.f32 %v295, %v296
      %v298 = vmax.f32 %v246, %v250
      %v299 = vmax.f32 %v248, %v252
      %v300 = vmax.f32 %v298, %v254
      %v301 = vmax.f32 %v299, %v256
      %v302 = vmax.f32 %v300, %v258
      %v303 = vmax.f32 %v301, %v260
      %v304 = vmax.f32 %v302, %v262
      %v305 = vmax.f32 %v303, %v264
      %v306 = vmax.f32 %v304, %v266
      %v307 = vmax.f32 %v305, %v268
      %v308 = vmax.f32 %v306, %v270
      %v309 = vmax.f32 %v307, %v272
      %v310 = vmax.f32 %v308, %v274
      %v311 = vmax.f32 %v309, %v276
      %v312 = vmax.f32 %v310, %v311
      %v313 = vrot.slane %v312, 4
      %v314 = vmax.f32 %v312, %v313
      %v315 = vrot.slane %v314, 2
      %v316 = vmax.f32 %v314, %v315
      %v317 = vrot.slane %v316, 1
      %v318 = vmax.f32 %v316, %v317
      %v319 = vadd.f32 %v245, %v247
      %v320 = vadd.f32 %v319, %v249
      %v321 = vadd.f32 %v320, %v251
      %v322 = vadd.f32 %v321, %v253
      %v323 = vadd.f32 %v322, %v255
      %v324 = vadd.f32 %v323, %v257
      %v325 = vadd.f32 %v324, %v259
      %v326 = vadd.f32 %v325, %v261
      %v327 = vadd.f32 %v326, %v263
      %v328 = vadd.f32 %v327, %v265
      %v329 = vadd.f32 %v328, %v267
      %v330 = vadd.f32 %v329, %v269
      %v331 = vadd.f32 %v330, %v271
      %v332 = vadd.f32 %v331, %v273
      %v333 = vadd.f32 %v332, %v275
      %v334 = vrot.slane %v333, 4
      %v335 = vadd.f32 %v333, %v334
      %v336 = vrot.slane %v335, 2
      %v337 = vadd.f32 %v335, %v336
      %v338 = vrot.slane %v337, 1
      %v339 = vadd.f32 %v337, %v338
      %v340 = vadd.f32 %v246, %v248
      %v341 = vadd.f32 %v340, %v250
      %v342 = vadd.f32 %v341, %v252
      %v343 = vadd.f32 %v342, %v254
      %v344 = vadd.f32 %v343, %v256
      %v345 = vadd.f32 %v344, %v258
      %v346 = vadd.f32 %v345, %v260
      %v347 = vadd.f32 %v346, %v262
      %v348 = vadd.f32 %v347, %v264
      %v349 = vadd.f32 %v348, %v266
      %v350 = vadd.f32 %v349, %v268
      %v351 = vadd.f32 %v350, %v270
      %v352 = vadd.f32 %v351, %v272
      %v353 = vadd.f32 %v352, %v274
      %v354 = vadd.f32 %v353, %v276
      %v355 = vrot.slane %v354, 4
      %v356 = vadd.f32 %v354, %v355
      %v357 = vrot.slane %v356, 2
      %v358 = vadd.f32 %v356, %v357
      %v359 = vrot.slane %v358, 1
      %v360 = vadd.f32 %v358, %v359
      %v361 = vmul.f32 %v339, 0.0078125
      %v362 = vmul.f32 %v360, 0.0078125
      %v363 = vld [vmem:[%s239] sm:$0xff]
      %v364 = vld [vmem:[%s239 + $0x8] sm:$0xff]
      %v365 = vld [vmem:[%s239 + $0x10] sm:$0xff]
      %v366 = vld [vmem:[%s239 + $0x18] sm:$0xff]
      %v367 = vld [vmem:[%s239 + $0x20] sm:$0xff]
      %v368 = vld [vmem:[%s239 + $0x28] sm:$0xff]
      %v369 = vld [vmem:[%s239 + $0x30] sm:$0xff]
      %v370 = vld [vmem:[%s239 + $0x38] sm:$0xff]
      %v371 = vld [vmem:[%s239 + $0x40] sm:$0xff]
      %v372 = vld [vmem:[%s239 + $0x48] sm:$0xff]
      %v373 = vld [vmem:[%s239 + $0x50] sm:$0xff]
      %v374 = vld [vmem:[%s239 + $0x58] sm:$0xff]
      %v375 = vld [vmem:[%s239 + $0x60] sm:$0xff]
      %v376 = vld [vmem:[%s239 + $0x68] sm:$0xff]
      %v377 = vld [vmem:[%s239 + $0x70] sm:$0xff]
      %v378 = vld [vmem:[%s239 + $0x78] sm:$0xff]
      %v379 = vld [vmem:[%s239 + $0x80] sm:$0xff]
      %v380 = vld [vmem:[%s239 + $0x88] sm:$0xff]
      %v381 = vld [vmem:[%s239 + $0x90] sm:$0xff]
      %v382 = vld [vmem:[%s239 + $0x98] sm:$0xff]
      %v383 = vld [vmem:[%s239 + $0xa0] sm:$0xff]
      %v384 = vld [vmem:[%s239 + $0xa8] sm:$0xff]
      %v385 = vld [vmem:[%s239 + $0xb0] sm:$0xff]
      %v386 = vld [vmem:[%s239 + $0xb8] sm:$0xff]
      %v387 = vld [vmem:[%s239 + $0xc0] sm:$0xff]
      %v388 = vld [vmem:[%s239 + $0xc8] sm:$0xff]
      %v389 = vld [vmem:[%s239 + $0xd0] sm:$0xff]
      %v390 = vld [vmem:[%s239 + $0xd8] sm:$0xff]
      %v391 = vld [vmem:[%s239 + $0xe0] sm:$0xff]
      %v392 = vld [vmem:[%s239 + $0xe8] sm:$0xff]
      %v393 = vld [vmem:[%s239 + $0xf0] sm:$0xff]
      %v394 = vld [vmem:[%s239 + $0xf8] sm:$0xff]
      %v395 = vmax.f32 %v363, %v367
      %v396 = vmax.f32 %v365, %v369
      %v397 = vmax.f32 %v395, %v371
      %v398 = vmax.f32 %v396, %v373
      %v399 = vmax.f32 %v397, %v375
      %v400 = vmax.f32 %v398, %v377
      %v401 = vmax.f32 %v399, %v379
      %v402 = vmax.f32 %v400, %v381
      %v403 = vmax.f32 %v401, %v383
      %v404 = vmax.f32 %v402, %v385
      %v405 = vmax.f32 %v403, %v387
      %v406 = vmax.f32 %v404, %v389
      %v407 = vmax.f32 %v405, %v391
      %v408 = vmax.f32 %v406, %v393
      %v409 = vmax.f32 %v407, %v408
      %v410 = vrot.slane %v409, 4
      %v411 = vmax.f32 %v409, %v410
      %v412 = vrot.slane %v411, 2
      %v413 = vmax.f32 %v411, %v412
      %v414 = vrot.slane %v413, 1
      %v415 = vmax.f32 %v413, %v414
      %v416 = vmax.f32 %v364, %v368
      %v417 = vmax.f32 %v366, %v370
      %v418 = vmax.f32 %v416, %v372
      %v419 = vmax.f32 %v417, %v374
      %v420 = vmax.f32 %v418, %v376
      %v421 = vmax.f32 %v419, %v378
      %v422 = vmax.f32 %v420, %v380
      %v423 = vmax.f32 %v421, %v382
      %v424 = vmax.f32 %v422, %v384
      %v425 = vmax.f32 %v423, %v386
      %v426 = vmax.f32 %v424, %v388
      %v427 = vmax.f32 %v425, %v390
      %v428 = vmax.f32 %v426, %v392
      %v429 = vmax.f32 %v427, %v394
      %v430 = vmax.f32 %v428, %v429
      %v431 = vrot.slane %v430, 4
      %v432 = vmax.f32 %v430, %v431
      %v433 = vrot.slane %v432, 2
      %v434 = vmax.f32 %v432, %v433
      %v435 = vrot.slane %v434, 1
      %v436 = vmax.f32 %v434, %v435
      %v437 = vadd.f32 %v363, %v365
      %v438 = vadd.f32 %v437, %v367
      %v439 = vadd.f32 %v438, %v369
      %v440 = vadd.f32 %v439, %v371
      %v441 = vadd.f32 %v440, %v373
      %v442 = vadd.f32 %v441, %v375
      %v443 = vadd.f32 %v442, %v377
      %v444 = vadd.f32 %v443, %v379
      %v445 = vadd.f32 %v444, %v381
      %v446 = vadd.f32 %v445, %v383
      %v447 = vadd.f32 %v446, %v385
      %v448 = vadd.f32 %v447, %v387
      %v449 = vadd.f32 %v448, %v389
      %v450 = vadd.f32 %v449, %v391
      %v451 = vadd.f32 %v450, %v393
      %v452 = vrot.slane %v451, 4
      %v453 = vadd.f32 %v451, %v452
      %v454 = vrot.slane %v453, 2
      %v455 = vadd.f32 %v453, %v454
      %v456 = vrot.slane %v455, 1
      %v457 = vadd.f32 %v455, %v456
      %v458 = vadd.f32 %v364, %v366
      %v459 = vadd.f32 %v458, %v368
      %v460 = vadd.f32 %v459, %v370
      %v461 = vadd.f32 %v460, %v372
      %v462 = vadd.f32 %v461, %v374
      %v463 = vadd.f32 %v462, %v376
      %v464 = vadd.f32 %v463, %v378
      %v465 = vadd.f32 %v464, %v380
      %v466 = vadd.f32 %v465, %v382
      %v467 = vadd.f32 %v466, %v384
      %v468 = vadd.f32 %v467, %v386
      %v469 = vadd.f32 %v468, %v388
      %v470 = vadd.f32 %v469, %v390
      %v471 = vadd.f32 %v470, %v392
      %v472 = vadd.f32 %v471, %v394
      %v473 = vrot.slane %v472, 4
      %v474 = vadd.f32 %v472, %v473
      %v475 = vrot.slane %v474, 2
      %v476 = vadd.f32 %v474, %v475
      %v477 = vrot.slane %v476, 1
      %v478 = vadd.f32 %v476, %v477
      %v479 = vmul.f32 %v457, 0.0078125
      %v480 = vmul.f32 %v478, 0.0078125
      %v481 = vlaneseq
      %v482 = vshrl.u32 %v481, 7
      %vm483 = vcmp.eq.s32.totalorder %v482, 0
      %vm484 = vcmp.eq.s32.totalorder %v482, 1
      %vm485 = vcmp.eq.s32.totalorder %v482, 2
      %v486 = vsel %vm485, %v415, %v479
      %v487 = vsel %vm485, %v436, %v480
      %v488 = vsel %vm484, %v361, %v486
      %v489 = vsel %vm484, %v362, %v487
      %v490 = vsel %vm483, %v297, %v488
      %v491 = vsel %vm483, %v318, %v489
      %492 = vst [vmem:[#allocation2] sm:$0xff] 0.0
      %493 = vst [vmem:[#allocation2 + $0x8] sm:$0xff] 0.0
      %494 = vst [vmem:[#allocation2 + $0x10] sm:$0xf] 0.0
      %496 = vrot.lane.b32.xlu0 %v490, 69
      %v497 = vpop.permute.xlu0 %496
      %vm499 = vcmask 691752
      %500 = vst.msk [vmem:[#allocation2] sm:$0xf] %vm499, %v497
      %501 = vrot.lane.b32.xlu0 %v490, 75
      %v502 = vpop.permute.xlu0 %501
      %vm504 = vcmask 872152
      %505 = vst.msk [vmem:[#allocation2] sm:$0xf] %vm504, %v502
      %506 = vrot.lane.b32.xlu0 %v490, 81
      %v507 = vpop.permute.xlu0 %506
      %v508 = vrot.slane %v507, 4
      %vm509 = vcmask 662528
      %v510 = vsel %vm509, %v508, %v507
      %vm512 = vcmask 1044360
      %vm513 = vcmask 7172
      %vm514 = vmor %vm513, %vm512
      %515 = vst.msk [vmem:[#allocation2] sm:$0xff] %vm514, %v510
      %516 = vrot.lane.b32.xlu0 %v490, 87
      %v517 = vpop.permute.xlu0 %516
      %vm519 = vcmask 183352
      %520 = vst.msk [vmem:[#allocation2 + $0x4] sm:$0xf] %vm519, %v517
      %521 = vrot.lane.b32.xlu0 %v490, 93
      %v522 = vpop.permute.xlu0 %521
      %vm524 = vcmask 363752
      %525 = vst.msk [vmem:[#allocation2 + $0x4] sm:$0xf] %vm524, %v522
      %526 = vrot.lane.b32.xlu0 %v490, 99
      %v527 = vpop.permute.xlu0 %526
      %vm529 = vcmask 544152
      %530 = vst.msk [vmem:[#allocation2 + $0x4] sm:$0xf] %vm529, %v527
      %531 = vrot.lane.b32.xlu0 %v490, 105
      %v532 = vpop.permute.xlu0 %531
      %vm534 = vcmask 724552
      %535 = vst.msk [vmem:[#allocation2 + $0x4] sm:$0xf] %vm534, %v532
      %536 = vrot.lane.b32.xlu0 %v490, 111
      %v537 = vpop.permute.xlu0 %536
      %vm539 = vcmask 904952
      %540 = vst.msk [vmem:[#allocation2 + $0x4] sm:$0xf] %vm539, %v537
      %542 = vrot.lane.b32.xlu0 %v491, 117
      %v543 = vpop.permute.xlu0 %542
      %v544 = vrot.slane %v543, 4
      %vm545 = vcmask 957440
      %v546 = vsel %vm545, %v544, %v543
      %vm548 = vcmask 1044392
      %vm549 = vcmask 39940
      %vm550 = vmor %vm549, %vm548
      %551 = vst.msk [vmem:[#allocation2 + $0x4] sm:$0xff] %vm550, %v546
      %552 = vrot.lane.b32.xlu0 %v491, 123
      %v553 = vpop.permute.xlu0 %552
      %vm555 = vcmask 216152
      %556 = vst.msk [vmem:[#allocation2 + $0x8] sm:$0xf] %vm555, %v553
      %557 = vrot.lane.b32.xlu0 %v491, 1
      %v558 = vpop.permute.xlu0 %557
      %vm560 = vcmask 396552
      %561 = vst.msk [vmem:[#allocation2 + $0x8] sm:$0xf] %vm560, %v558
      %562 = vrot.lane.b32.xlu0 %v491, 7
      %v563 = vpop.permute.xlu0 %562
      %vm565 = vcmask 576952
      %566 = vst.msk [vmem:[#allocation2 + $0x8] sm:$0xf] %vm565, %v563
      %567 = vrot.lane.b32.xlu0 %v491, 13
      %v568 = vpop.permute.xlu0 %567
      %vm570 = vcmask 757352
      %571 = vst.msk [vmem:[#allocation2 + $0x8] sm:$0xf] %vm570, %v568
      %572 = vrot.lane.b32.xlu0 %v491, 19
      %v573 = vpop.permute.xlu0 %572
      %vm575 = vcmask 937752
      %576 = vst.msk [vmem:[#allocation2 + $0x8] sm:$0xf] %vm575, %v573
      %577 = vrot.lane.b32.xlu0 %v491, 25
      %v578 = vpop.permute.xlu0 %577
      %v579 = vrot.slane %v578, 4
      %vm580 = vcmask 203776
      %v581 = vsel %vm580, %v579, %v578
      %vm583 = vcmask 1044424
      %vm584 = vcmask 72708
      %vm585 = vmor %vm584, %vm583
      %586 = vst.msk [vmem:[#allocation2 + $0x8] sm:$0xff] %vm585, %v581
      %587 = vrot.lane.b32.xlu0 %v491, 31
      %v588 = vpop.permute.xlu0 %587
      %vm590 = vcmask 248952
      %591 = vst.msk [vmem:[#allocation2 + $0xc] sm:$0xf] %vm590, %v588
      %v592 = vld [vmem:[#allocation2] sm:$0xff]
      %v593 = vld [vmem:[#allocation2 + $0x8] sm:$0xff]
      %v594 = vld [vmem:[#allocation2 + $0x10] sm:$0xf]
      %s595 = scalar_lea.vmem %s2, 196
      %v596 = vld [vmem:[%s595] sm:$0xf]
      %598 = vset.pattern.permute.xlu0 0
      %599 = vperm.xlu0 %598, %v596
      %v600 = vpop.permute.xlu0 %599
      %v602 = vld [vmem:[%s2] sm:$0xf]
      %604 = vset.pattern.permute.xlu0 0
      %605 = vperm.xlu0 %604, %v602
      %v606 = vpop.permute.xlu0 %605
      %v610 = vcombine.high %v592, %v592
      %v612 = vmul.f32 %v606, %v592
      %v613 = vmul.f32 %v606, %v610
      %v614 = vmul.f32 %v606, %v593
      %v615 = vadd.f32 %v600, %v612
      %v616 = vadd.f32 %v600, %v613
      %v617 = vadd.f32 %v600, %v614
      %s618 = scalar_lea.vmem %s2, 4
      %v619 = vld [vmem:[%s618] sm:$0xf]
      %621 = vset.pattern.permute.xlu0 0
      %622 = vperm.xlu0 %621, %v619
      %v623 = vpop.permute.xlu0 %622
      %v625 = vcombine.high %v593, %v593
      %626 = vrot.lane.b32.xlu0 %v592, 127
      %v627 = vpop.permute.xlu0 %626
      %628 = vrot.lane.b32.xlu0 %v610, 127
      %v629 = vpop.permute.xlu0 %628
      %630 = vrot.lane.b32.xlu0 %v593, 127
      %v631 = vpop.permute.xlu0 %630
      %632 = vrot.lane.b32.xlu0 %v625, 127
      %v633 = vpop.permute.xlu0 %632
      %vm634 = vcmask 1039360
      %v635 = vsel %vm634, %v627, %v629
      %v636 = vsel %vm634, %v629, %v631
      %v637 = vsel %vm634, %v631, %v633
      %v641 = vmul.f32 %v623, %v635
      %v642 = vmul.f32 %v623, %v636
      %v643 = vmul.f32 %v623, %v637
      %v644 = vadd.f32 %v615, %v641
      %v645 = vadd.f32 %v616, %v642
      %v646 = vadd.f32 %v617, %v643
      %s647 = scalar_lea.vmem %s2, 8
      %v648 = vld [vmem:[%s647] sm:$0xf]
      %650 = vset.pattern.permute.xlu0 0
      %651 = vperm.xlu0 %650, %v648
      %v652 = vpop.permute.xlu0 %651
      %654 = vrot.lane.b32.xlu0 %v592, 126
      %v655 = vpop.permute.xlu0 %654
      %656 = vrot.lane.b32.xlu0 %v610, 126
      %v657 = vpop.permute.xlu0 %656
      %658 = vrot.lane.b32.xlu0 %v593, 126
      %v659 = vpop.permute.xlu0 %658
      %660 = vrot.lane.b32.xlu0 %v625, 126
      %v661 = vpop.permute.xlu0 %660
      %vm662 = vcmask 1031168
      %v663 = vsel %vm662, %v655, %v657
      %v664 = vsel %vm662, %v657, %v659
      %v665 = vsel %vm662, %v659, %v661
      %v669 = vmul.f32 %v652, %v663
      %v670 = vmul.f32 %v652, %v664
      %v671 = vmul.f32 %v652, %v665
      %v672 = vadd.f32 %v644, %v669
      %v673 = vadd.f32 %v645, %v670
      %v674 = vadd.f32 %v646, %v671
      %s675 = scalar_lea.vmem %s2, 12
      %v676 = vld [vmem:[%s675] sm:$0xf]
      %678 = vset.pattern.permute.xlu0 0
      %679 = vperm.xlu0 %678, %v676
      %v680 = vpop.permute.xlu0 %679
      %682 = vrot.lane.b32.xlu0 %v592, 125
      %v683 = vpop.permute.xlu0 %682
      %684 = vrot.lane.b32.xlu0 %v610, 125
      %v685 = vpop.permute.xlu0 %684
      %686 = vrot.lane.b32.xlu0 %v593, 125
      %v687 = vpop.permute.xlu0 %686
      %688 = vrot.lane.b32.xlu0 %v625, 125
      %v689 = vpop.permute.xlu0 %688
      %vm690 = vcmask 1022976
      %v691 = vsel %vm690, %v683, %v685
      %v692 = vsel %vm690, %v685, %v687
      %v693 = vsel %vm690, %v687, %v689
      %v697 = vmul.f32 %v680, %v691
      %v698 = vmul.f32 %v680, %v692
      %v699 = vmul.f32 %v680, %v693
      %v700 = vadd.f32 %v672, %v697
      %v701 = vadd.f32 %v673, %v698
      %v702 = vadd.f32 %v674, %v699
      %s703 = scalar_lea.vmem %s2, 16
      %v704 = vld [vmem:[%s703] sm:$0xf]
      %706 = vset.pattern.permute.xlu0 0
      %707 = vperm.xlu0 %706, %v704
      %v708 = vpop.permute.xlu0 %707
      %710 = vrot.lane.b32.xlu0 %v592, 124
      %v711 = vpop.permute.xlu0 %710
      %712 = vrot.lane.b32.xlu0 %v610, 124
      %v713 = vpop.permute.xlu0 %712
      %714 = vrot.lane.b32.xlu0 %v593, 124
      %v715 = vpop.permute.xlu0 %714
      %716 = vrot.lane.b32.xlu0 %v625, 124
      %v717 = vpop.permute.xlu0 %716
      %vm718 = vcmask 1014784
      %v719 = vsel %vm718, %v711, %v713
      %v720 = vsel %vm718, %v713, %v715
      %v721 = vsel %vm718, %v715, %v717
      %v725 = vmul.f32 %v708, %v719
      %v726 = vmul.f32 %v708, %v720
      %v727 = vmul.f32 %v708, %v721
      %v728 = vadd.f32 %v700, %v725
      %v729 = vadd.f32 %v701, %v726
      %v730 = vadd.f32 %v702, %v727
      %s731 = scalar_lea.vmem %s2, 20
      %v732 = vld [vmem:[%s731] sm:$0xf]
      %734 = vset.pattern.permute.xlu0 0
      %735 = vperm.xlu0 %734, %v732
      %v736 = vpop.permute.xlu0 %735
      %738 = vrot.lane.b32.xlu0 %v592, 123
      %v739 = vpop.permute.xlu0 %738
      %740 = vrot.lane.b32.xlu0 %v610, 123
      %v741 = vpop.permute.xlu0 %740
      %742 = vrot.lane.b32.xlu0 %v593, 123
      %v743 = vpop.permute.xlu0 %742
      %744 = vrot.lane.b32.xlu0 %v625, 123
      %v745 = vpop.permute.xlu0 %744
      %vm746 = vcmask 1006592
      %v747 = vsel %vm746, %v739, %v741
      %v748 = vsel %vm746, %v741, %v743
      %v749 = vsel %vm746, %v743, %v745
      %v753 = vmul.f32 %v736, %v747
      %v754 = vmul.f32 %v736, %v748
      %v755 = vmul.f32 %v736, %v749
      %v756 = vadd.f32 %v728, %v753
      %v757 = vadd.f32 %v729, %v754
      %v758 = vadd.f32 %v730, %v755
      %s759 = scalar_lea.vmem %s2, 24
      %v760 = vld [vmem:[%s759] sm:$0xf]
      %762 = vset.pattern.permute.xlu0 0
      %763 = vperm.xlu0 %762, %v760
      %v764 = vpop.permute.xlu0 %763
      %766 = vrot.lane.b32.xlu0 %v592, 122
      %v767 = vpop.permute.xlu0 %766
      %768 = vrot.lane.b32.xlu0 %v610, 122
      %v769 = vpop.permute.xlu0 %768
      %770 = vrot.lane.b32.xlu0 %v593, 122
      %v771 = vpop.permute.xlu0 %770
      %772 = vrot.lane.b32.xlu0 %v625, 122
      %v773 = vpop.permute.xlu0 %772
      %vm774 = vcmask 998400
      %v775 = vsel %vm774, %v767, %v769
      %v776 = vsel %vm774, %v769, %v771
      %v777 = vsel %vm774, %v771, %v773
      %v781 = vmul.f32 %v764, %v775
      %v782 = vmul.f32 %v764, %v776
      %v783 = vmul.f32 %v764, %v777
      %v784 = vadd.f32 %v756, %v781
      %v785 = vadd.f32 %v757, %v782
      %v786 = vadd.f32 %v758, %v783
      %s787 = scalar_lea.vmem %s2, 28
      %v788 = vld [vmem:[%s787] sm:$0xf]
      %790 = vset.pattern.permute.xlu0 0
      %791 = vperm.xlu0 %790, %v788
      %v792 = vpop.permute.xlu0 %791
      %794 = vrot.lane.b32.xlu0 %v592, 106
      %v795 = vpop.permute.xlu0 %794
      %796 = vrot.lane.b32.xlu0 %v610, 106
      %v797 = vpop.permute.xlu0 %796
      %798 = vrot.lane.b32.xlu0 %v593, 106
      %v799 = vpop.permute.xlu0 %798
      %800 = vrot.lane.b32.xlu0 %v625, 106
      %v801 = vpop.permute.xlu0 %800
      %vm802 = vcmask 867328
      %v803 = vsel %vm802, %v795, %v797
      %v804 = vsel %vm802, %v797, %v799
      %v805 = vsel %vm802, %v799, %v801
      %v809 = vmul.f32 %v792, %v803
      %v810 = vmul.f32 %v792, %v804
      %v811 = vmul.f32 %v792, %v805
      %v812 = vadd.f32 %v784, %v809
      %v813 = vadd.f32 %v785, %v810
      %v814 = vadd.f32 %v786, %v811
      %s815 = scalar_lea.vmem %s2, 32
      %v816 = vld [vmem:[%s815] sm:$0xf]
      %818 = vset.pattern.permute.xlu0 0
      %819 = vperm.xlu0 %818, %v816
      %v820 = vpop.permute.xlu0 %819
      %822 = vrot.lane.b32.xlu0 %v592, 105
      %v823 = vpop.permute.xlu0 %822
      %824 = vrot.lane.b32.xlu0 %v610, 105
      %v825 = vpop.permute.xlu0 %824
      %826 = vrot.lane.b32.xlu0 %v593, 105
      %v827 = vpop.permute.xlu0 %826
      %828 = vrot.lane.b32.xlu0 %v625, 105
      %v829 = vpop.permute.xlu0 %828
      %vm830 = vcmask 859136
      %v831 = vsel %vm830, %v823, %v825
      %v832 = vsel %vm830, %v825, %v827
      %v833 = vsel %vm830, %v827, %v829
      %v837 = vmul.f32 %v820, %v831
      %v838 = vmul.f32 %v820, %v832
      %v839 = vmul.f32 %v820, %v833
      %v840 = vadd.f32 %v812, %v837
      %v841 = vadd.f32 %v813, %v838
      %v842 = vadd.f32 %v814, %v839
      %s843 = scalar_lea.vmem %s2, 36
      %v844 = vld [vmem:[%s843] sm:$0xf]
      %846 = vset.pattern.permute.xlu0 0
      %847 = vperm.xlu0 %846, %v844
      %v848 = vpop.permute.xlu0 %847
      %850 = vrot.lane.b32.xlu0 %v592, 104
      %v851 = vpop.permute.xlu0 %850
      %852 = vrot.lane.b32.xlu0 %v610, 104
      %v853 = vpop.permute.xlu0 %852
      %854 = vrot.lane.b32.xlu0 %v593, 104
      %v855 = vpop.permute.xlu0 %854
      %856 = vrot.lane.b32.xlu0 %v625, 104
      %v857 = vpop.permute.xlu0 %856
      %vm858 = vcmask 850944
      %v859 = vsel %vm858, %v851, %v853
      %v860 = vsel %vm858, %v853, %v855
      %v861 = vsel %vm858, %v855, %v857
      %v865 = vmul.f32 %v848, %v859
      %v866 = vmul.f32 %v848, %v860
      %v867 = vmul.f32 %v848, %v861
      %v868 = vadd.f32 %v840, %v865
      %v869 = vadd.f32 %v841, %v866
      %v870 = vadd.f32 %v842, %v867
      %s871 = scalar_lea.vmem %s2, 40
      %v872 = vld [vmem:[%s871] sm:$0xf]
      %874 = vset.pattern.permute.xlu0 0
      %875 = vperm.xlu0 %874, %v872
      %v876 = vpop.permute.xlu0 %875
      %878 = vrot.lane.b32.xlu0 %v592, 103
      %v879 = vpop.permute.xlu0 %878
      %880 = vrot.lane.b32.xlu0 %v610, 103
      %v881 = vpop.permute.xlu0 %880
      %882 = vrot.lane.b32.xlu0 %v593, 103
      %v883 = vpop.permute.xlu0 %882
      %884 = vrot.lane.b32.xlu0 %v625, 103
      %v885 = vpop.permute.xlu0 %884
      %vm886 = vcmask 842752
      %v887 = vsel %vm886, %v879, %v881
      %v888 = vsel %vm886, %v881, %v883
      %v889 = vsel %vm886, %v883, %v885
      %v893 = vmul.f32 %v876, %v887
      %v894 = vmul.f32 %v876, %v888
      %v895 = vmul.f32 %v876, %v889
      %v896 = vadd.f32 %v868, %v893
      %v897 = vadd.f32 %v869, %v894
      %v898 = vadd.f32 %v870, %v895
      %s899 = scalar_lea.vmem %s2, 44
      %v900 = vld [vmem:[%s899] sm:$0xf]
      %902 = vset.pattern.permute.xlu0 0
      %903 = vperm.xlu0 %902, %v900
      %v904 = vpop.permute.xlu0 %903
      %906 = vrot.lane.b32.xlu0 %v592, 102
      %v907 = vpop.permute.xlu0 %906
      %908 = vrot.lane.b32.xlu0 %v610, 102
      %v909 = vpop.permute.xlu0 %908
      %910 = vrot.lane.b32.xlu0 %v593, 102
      %v911 = vpop.permute.xlu0 %910
      %912 = vrot.lane.b32.xlu0 %v625, 102
      %v913 = vpop.permute.xlu0 %912
      %vm914 = vcmask 834560
      %v915 = vsel %vm914, %v907, %v909
      %v916 = vsel %vm914, %v909, %v911
      %v917 = vsel %vm914, %v911, %v913
      %v921 = vmul.f32 %v904, %v915
      %v922 = vmul.f32 %v904, %v916
      %v923 = vmul.f32 %v904, %v917
      %v924 = vadd.f32 %v896, %v921
      %v925 = vadd.f32 %v897, %v922
      %v926 = vadd.f32 %v898, %v923
      %s927 = scalar_lea.vmem %s2, 48
      %v928 = vld [vmem:[%s927] sm:$0xf]
      %930 = vset.pattern.permute.xlu0 0
      %931 = vperm.xlu0 %930, %v928
      %v932 = vpop.permute.xlu0 %931
      %934 = vrot.lane.b32.xlu0 %v592, 101
      %v935 = vpop.permute.xlu0 %934
      %936 = vrot.lane.b32.xlu0 %v610, 101
      %v937 = vpop.permute.xlu0 %936
      %938 = vrot.lane.b32.xlu0 %v593, 101
      %v939 = vpop.permute.xlu0 %938
      %940 = vrot.lane.b32.xlu0 %v625, 101
      %v941 = vpop.permute.xlu0 %940
      %vm942 = vcmask 826368
      %v943 = vsel %vm942, %v935, %v937
      %v944 = vsel %vm942, %v937, %v939
      %v945 = vsel %vm942, %v939, %v941
      %v949 = vmul.f32 %v932, %v943
      %v950 = vmul.f32 %v932, %v944
      %v951 = vmul.f32 %v932, %v945
      %v952 = vadd.f32 %v924, %v949
      %v953 = vadd.f32 %v925, %v950
      %v954 = vadd.f32 %v926, %v951
      %s955 = scalar_lea.vmem %s2, 52
      %v956 = vld [vmem:[%s955] sm:$0xf]
      %958 = vset.pattern.permute.xlu0 0
      %959 = vperm.xlu0 %958, %v956
      %v960 = vpop.permute.xlu0 %959
      %962 = vrot.lane.b32.xlu0 %v592, 100
      %v963 = vpop.permute.xlu0 %962
      %964 = vrot.lane.b32.xlu0 %v610, 100
      %v965 = vpop.permute.xlu0 %964
      %966 = vrot.lane.b32.xlu0 %v593, 100
      %v967 = vpop.permute.xlu0 %966
      %968 = vrot.lane.b32.xlu0 %v625, 100
      %v969 = vpop.permute.xlu0 %968
      %vm970 = vcmask 818176
      %v971 = vsel %vm970, %v963, %v965
      %v972 = vsel %vm970, %v965, %v967
      %v973 = vsel %vm970, %v967, %v969
      %v977 = vmul.f32 %v960, %v971
      %v978 = vmul.f32 %v960, %v972
      %v979 = vmul.f32 %v960, %v973
      %v980 = vadd.f32 %v952, %v977
      %v981 = vadd.f32 %v953, %v978
      %v982 = vadd.f32 %v954, %v979
      %s983 = scalar_lea.vmem %s2, 56
      %v984 = vld [vmem:[%s983] sm:$0xf]
      %986 = vset.pattern.permute.xlu0 0
      %987 = vperm.xlu0 %986, %v984
      %v988 = vpop.permute.xlu0 %987
      %990 = vrot.lane.b32.xlu0 %v592, 84
      %v991 = vpop.permute.xlu0 %990
      %992 = vrot.lane.b32.xlu0 %v610, 84
      %v993 = vpop.permute.xlu0 %992
      %994 = vrot.lane.b32.xlu0 %v593, 84
      %v995 = vpop.permute.xlu0 %994
      %996 = vrot.lane.b32.xlu0 %v625, 84
      %v997 = vpop.permute.xlu0 %996
      %vm998 = vcmask 687104
      %v999 = vsel %vm998, %v991, %v993
      %v1000 = vsel %vm998, %v993, %v995
      %v1001 = vsel %vm998, %v995, %v997
      %v1005 = vmul.f32 %v988, %v999
      %v1006 = vmul.f32 %v988, %v1000
      %v1007 = vmul.f32 %v988, %v1001
      %v1008 = vadd.f32 %v980, %v1005
      %v1009 = vadd.f32 %v981, %v1006
      %v1010 = vadd.f32 %v982, %v1007
      %s1011 = scalar_lea.vmem %s2, 60
      %v1012 = vld [vmem:[%s1011] sm:$0xf]
      %1014 = vset.pattern.permute.xlu0 0
      %1015 = vperm.xlu0 %1014, %v1012
      %v1016 = vpop.permute.xlu0 %1015
      %1018 = vrot.lane.b32.xlu0 %v592, 83
      %v1019 = vpop.permute.xlu0 %1018
      %1020 = vrot.lane.b32.xlu0 %v610, 83
      %v1021 = vpop.permute.xlu0 %1020
      %1022 = vrot.lane.b32.xlu0 %v593, 83
      %v1023 = vpop.permute.xlu0 %1022
      %1024 = vrot.lane.b32.xlu0 %v625, 83
      %v1025 = vpop.permute.xlu0 %1024
      %vm1026 = vcmask 678912
      %v1027 = vsel %vm1026, %v1019, %v1021
      %v1028 = vsel %vm1026, %v1021, %v1023
      %v1029 = vsel %vm1026, %v1023, %v1025
      %v1033 = vmul.f32 %v1016, %v1027
      %v1034 = vmul.f32 %v1016, %v1028
      %v1035 = vmul.f32 %v1016, %v1029
      %v1036 = vadd.f32 %v1008, %v1033
      %v1037 = vadd.f32 %v1009, %v1034
      %v1038 = vadd.f32 %v1010, %v1035
      %s1039 = scalar_lea.vmem %s2, 64
      %v1040 = vld [vmem:[%s1039] sm:$0xf]
      %1042 = vset.pattern.permute.xlu0 0
      %1043 = vperm.xlu0 %1042, %v1040
      %v1044 = vpop.permute.xlu0 %1043
      %1046 = vrot.lane.b32.xlu0 %v592, 82
      %v1047 = vpop.permute.xlu0 %1046
      %1048 = vrot.lane.b32.xlu0 %v610, 82
      %v1049 = vpop.permute.xlu0 %1048
      %1050 = vrot.lane.b32.xlu0 %v593, 82
      %v1051 = vpop.permute.xlu0 %1050
      %1052 = vrot.lane.b32.xlu0 %v625, 82
      %v1053 = vpop.permute.xlu0 %1052
      %vm1054 = vcmask 670720
      %v1055 = vsel %vm1054, %v1047, %v1049
      %v1056 = vsel %vm1054, %v1049, %v1051
      %v1057 = vsel %vm1054, %v1051, %v1053
      %v1061 = vmul.f32 %v1044, %v1055
      %v1062 = vmul.f32 %v1044, %v1056
      %v1063 = vmul.f32 %v1044, %v1057
      %v1064 = vadd.f32 %v1036, %v1061
      %v1065 = vadd.f32 %v1037, %v1062
      %v1066 = vadd.f32 %v1038, %v1063
      %s1067 = scalar_lea.vmem %s2, 68
      %v1068 = vld [vmem:[%s1067] sm:$0xf]
      %1070 = vset.pattern.permute.xlu0 0
      %1071 = vperm.xlu0 %1070, %v1068
      %v1072 = vpop.permute.xlu0 %1071
      %1074 = vrot.lane.b32.xlu0 %v592, 81
      %v1075 = vpop.permute.xlu0 %1074
      %1076 = vrot.lane.b32.xlu0 %v610, 81
      %v1077 = vpop.permute.xlu0 %1076
      %1078 = vrot.lane.b32.xlu0 %v593, 81
      %v1079 = vpop.permute.xlu0 %1078
      %1080 = vrot.lane.b32.xlu0 %v625, 81
      %v1081 = vpop.permute.xlu0 %1080
      %v1082 = vsel %vm509, %v1075, %v1077
      %v1083 = vsel %vm509, %v1077, %v1079
      %v1084 = vsel %vm509, %v1079, %v1081
      %v1088 = vmul.f32 %v1072, %v1082
      %v1089 = vmul.f32 %v1072, %v1083
      %v1090 = vmul.f32 %v1072, %v1084
      %v1091 = vadd.f32 %v1064, %v1088
      %v1092 = vadd.f32 %v1065, %v1089
      %v1093 = vadd.f32 %v1066, %v1090
      %s1094 = scalar_lea.vmem %s2, 72
      %v1095 = vld [vmem:[%s1094] sm:$0xf]
      %1097 = vset.pattern.permute.xlu0 0
      %1098 = vperm.xlu0 %1097, %v1095
      %v1099 = vpop.permute.xlu0 %1098
      %1101 = vrot.lane.b32.xlu0 %v592, 80
      %v1102 = vpop.permute.xlu0 %1101
      %1103 = vrot.lane.b32.xlu0 %v610, 80
      %v1104 = vpop.permute.xlu0 %1103
      %1105 = vrot.lane.b32.xlu0 %v593, 80
      %v1106 = vpop.permute.xlu0 %1105
      %1107 = vrot.lane.b32.xlu0 %v625, 80
      %v1108 = vpop.permute.xlu0 %1107
      %vm1109 = vcmask 654336
      %v1110 = vsel %vm1109, %v1102, %v1104
      %v1111 = vsel %vm1109, %v1104, %v1106
      %v1112 = vsel %vm1109, %v1106, %v1108
      %v1116 = vmul.f32 %v1099, %v1110
      %v1117 = vmul.f32 %v1099, %v1111
      %v1118 = vmul.f32 %v1099, %v1112
      %v1119 = vadd.f32 %v1091, %v1116
      %v1120 = vadd.f32 %v1092, %v1117
      %v1121 = vadd.f32 %v1093, %v1118
      %s1122 = scalar_lea.vmem %s2, 76
      %v1123 = vld [vmem:[%s1122] sm:$0xf]
      %1125 = vset.pattern.permute.xlu0 0
      %1126 = vperm.xlu0 %1125, %v1123
      %v1127 = vpop.permute.xlu0 %1126
      %1129 = vrot.lane.b32.xlu0 %v592, 79
      %v1130 = vpop.permute.xlu0 %1129
      %1131 = vrot.lane.b32.xlu0 %v610, 79
      %v1132 = vpop.permute.xlu0 %1131
      %1133 = vrot.lane.b32.xlu0 %v593, 79
      %v1134 = vpop.permute.xlu0 %1133
      %1135 = vrot.lane.b32.xlu0 %v625, 79
      %v1136 = vpop.permute.xlu0 %1135
      %vm1137 = vcmask 646144
      %v1138 = vsel %vm1137, %v1130, %v1132
      %v1139 = vsel %vm1137, %v1132, %v1134
      %v1140 = vsel %vm1137, %v1134, %v1136
      %v1144 = vmul.f32 %v1127, %v1138
      %v1145 = vmul.f32 %v1127, %v1139
      %v1146 = vmul.f32 %v1127, %v1140
      %v1147 = vadd.f32 %v1119, %v1144
      %v1148 = vadd.f32 %v1120, %v1145
      %v1149 = vadd.f32 %v1121, %v1146
      %s1150 = scalar_lea.vmem %s2, 80
      %v1151 = vld [vmem:[%s1150] sm:$0xf]
      %1153 = vset.pattern.permute.xlu0 0
      %1154 = vperm.xlu0 %1153, %v1151
      %v1155 = vpop.permute.xlu0 %1154
      %1157 = vrot.lane.b32.xlu0 %v592, 78
      %v1158 = vpop.permute.xlu0 %1157
      %1159 = vrot.lane.b32.xlu0 %v610, 78
      %v1160 = vpop.permute.xlu0 %1159
      %1161 = vrot.lane.b32.xlu0 %v593, 78
      %v1162 = vpop.permute.xlu0 %1161
      %1163 = vrot.lane.b32.xlu0 %v625, 78
      %v1164 = vpop.permute.xlu0 %1163
      %vm1165 = vcmask 637952
      %v1166 = vsel %vm1165, %v1158, %v1160
      %v1167 = vsel %vm1165, %v1160, %v1162
      %v1168 = vsel %vm1165, %v1162, %v1164
      %v1172 = vmul.f32 %v1155, %v1166
      %v1173 = vmul.f32 %v1155, %v1167
      %v1174 = vmul.f32 %v1155, %v1168
      %v1175 = vadd.f32 %v1147, %v1172
      %v1176 = vadd.f32 %v1148, %v1173
      %v1177 = vadd.f32 %v1149, %v1174
      %s1178 = scalar_lea.vmem %s2, 84
      %v1179 = vld [vmem:[%s1178] sm:$0xf]
      %1181 = vset.pattern.permute.xlu0 0
      %1182 = vperm.xlu0 %1181, %v1179
      %v1183 = vpop.permute.xlu0 %1182
      %1185 = vrot.lane.b32.xlu0 %v592, 62
      %v1186 = vpop.permute.xlu0 %1185
      %1187 = vrot.lane.b32.xlu0 %v610, 62
      %v1188 = vpop.permute.xlu0 %1187
      %1189 = vrot.lane.b32.xlu0 %v593, 62
      %v1190 = vpop.permute.xlu0 %1189
      %1191 = vrot.lane.b32.xlu0 %v625, 62
      %v1192 = vpop.permute.xlu0 %1191
      %vm1193 = vcmask 506880
      %v1194 = vsel %vm1193, %v1186, %v1188
      %v1195 = vsel %vm1193, %v1188, %v1190
      %v1196 = vsel %vm1193, %v1190, %v1192
      %v1200 = vmul.f32 %v1183, %v1194
      %v1201 = vmul.f32 %v1183, %v1195
      %v1202 = vmul.f32 %v1183, %v1196
      %v1203 = vadd.f32 %v1175, %v1200
      %v1204 = vadd.f32 %v1176, %v1201
      %v1205 = vadd.f32 %v1177, %v1202
      %s1206 = scalar_lea.vmem %s2, 88
      %v1207 = vld [vmem:[%s1206] sm:$0xf]
      %1209 = vset.pattern.permute.xlu0 0
      %1210 = vperm.xlu0 %1209, %v1207
      %v1211 = vpop.permute.xlu0 %1210
      %1213 = vrot.lane.b32.xlu0 %v592, 61
      %v1214 = vpop.permute.xlu0 %1213
      %1215 = vrot.lane.b32.xlu0 %v610, 61
      %v1216 = vpop.permute.xlu0 %1215
      %1217 = vrot.lane.b32.xlu0 %v593, 61
      %v1218 = vpop.permute.xlu0 %1217
      %1219 = vrot.lane.b32.xlu0 %v625, 61
      %v1220 = vpop.permute.xlu0 %1219
      %vm1221 = vcmask 498688
      %v1222 = vsel %vm1221, %v1214, %v1216
      %v1223 = vsel %vm1221, %v1216, %v1218
      %v1224 = vsel %vm1221, %v1218, %v1220
      %v1228 = vmul.f32 %v1211, %v1222
      %v1229 = vmul.f32 %v1211, %v1223
      %v1230 = vmul.f32 %v1211, %v1224
      %v1231 = vadd.f32 %v1203, %v1228
      %v1232 = vadd.f32 %v1204, %v1229
      %v1233 = vadd.f32 %v1205, %v1230
      %s1234 = scalar_lea.vmem %s2, 92
      %v1235 = vld [vmem:[%s1234] sm:$0xf]
      %1237 = vset.pattern.permute.xlu0 0
      %1238 = vperm.xlu0 %1237, %v1235
      %v1239 = vpop.permute.xlu0 %1238
      %1241 = vrot.lane.b32.xlu0 %v592, 60
      %v1242 = vpop.permute.xlu0 %1241
      %1243 = vrot.lane.b32.xlu0 %v610, 60
      %v1244 = vpop.permute.xlu0 %1243
      %1245 = vrot.lane.b32.xlu0 %v593, 60
      %v1246 = vpop.permute.xlu0 %1245
      %1247 = vrot.lane.b32.xlu0 %v625, 60
      %v1248 = vpop.permute.xlu0 %1247
      %vm1249 = vcmask 490496
      %v1250 = vsel %vm1249, %v1242, %v1244
      %v1251 = vsel %vm1249, %v1244, %v1246
      %v1252 = vsel %vm1249, %v1246, %v1248
      %v1256 = vmul.f32 %v1239, %v1250
      %v1257 = vmul.f32 %v1239, %v1251
      %v1258 = vmul.f32 %v1239, %v1252
      %v1259 = vadd.f32 %v1231, %v1256
      %v1260 = vadd.f32 %v1232, %v1257
      %v1261 = vadd.f32 %v1233, %v1258
      %s1262 = scalar_lea.vmem %s2, 96
      %v1263 = vld [vmem:[%s1262] sm:$0xf]
      %1265 = vset.pattern.permute.xlu0 0
      %1266 = vperm.xlu0 %1265, %v1263
      %v1267 = vpop.permute.xlu0 %1266
      %1269 = vrot.lane.b32.xlu0 %v592, 59
      %v1270 = vpop.permute.xlu0 %1269
      %1271 = vrot.lane.b32.xlu0 %v610, 59
      %v1272 = vpop.permute.xlu0 %1271
      %1273 = vrot.lane.b32.xlu0 %v593, 59
      %v1274 = vpop.permute.xlu0 %1273
      %1275 = vrot.lane.b32.xlu0 %v625, 59
      %v1276 = vpop.permute.xlu0 %1275
      %vm1277 = vcmask 482304
      %v1278 = vsel %vm1277, %v1270, %v1272
      %v1279 = vsel %vm1277, %v1272, %v1274
      %v1280 = vsel %vm1277, %v1274, %v1276
      %v1284 = vmul.f32 %v1267, %v1278
      %v1285 = vmul.f32 %v1267, %v1279
      %v1286 = vmul.f32 %v1267, %v1280
      %v1287 = vadd.f32 %v1259, %v1284
      %v1288 = vadd.f32 %v1260, %v1285
      %v1289 = vadd.f32 %v1261, %v1286
      %s1290 = scalar_lea.vmem %s2, 100
      %v1291 = vld [vmem:[%s1290] sm:$0xf]
      %1293 = vset.pattern.permute.xlu0 0
      %1294 = vperm.xlu0 %1293, %v1291
      %v1295 = vpop.permute.xlu0 %1294
      %1297 = vrot.lane.b32.xlu0 %v592, 58
      %v1298 = vpop.permute.xlu0 %1297
      %1299 = vrot.lane.b32.xlu0 %v610, 58
      %v1300 = vpop.permute.xlu0 %1299
      %1301 = vrot.lane.b32.xlu0 %v593, 58
      %v1302 = vpop.permute.xlu0 %1301
      %1303 = vrot.lane.b32.xlu0 %v625, 58
      %v1304 = vpop.permute.xlu0 %1303
      %vm1305 = vcmask 474112
      %v1306 = vsel %vm1305, %v1298, %v1300
      %v1307 = vsel %vm1305, %v1300, %v1302
      %v1308 = vsel %vm1305, %v1302, %v1304
      %v1312 = vmul.f32 %v1295, %v1306
      %v1313 = vmul.f32 %v1295, %v1307
      %v1314 = vmul.f32 %v1295, %v1308
      %v1315 = vadd.f32 %v1287, %v1312
      %v1316 = vadd.f32 %v1288, %v1313
      %v1317 = vadd.f32 %v1289, %v1314
      %s1318 = scalar_lea.vmem %s2, 104
      %v1319 = vld [vmem:[%s1318] sm:$0xf]
      %1321 = vset.pattern.permute.xlu0 0
      %1322 = vperm.xlu0 %1321, %v1319
      %v1323 = vpop.permute.xlu0 %1322
      %1325 = vrot.lane.b32.xlu0 %v592, 57
      %v1326 = vpop.permute.xlu0 %1325
      %1327 = vrot.lane.b32.xlu0 %v610, 57
      %v1328 = vpop.permute.xlu0 %1327
      %1329 = vrot.lane.b32.xlu0 %v593, 57
      %v1330 = vpop.permute.xlu0 %1329
      %1331 = vrot.lane.b32.xlu0 %v625, 57
      %v1332 = vpop.permute.xlu0 %1331
      %vm1333 = vcmask 465920
      %v1334 = vsel %vm1333, %v1326, %v1328
      %v1335 = vsel %vm1333, %v1328, %v1330
      %v1336 = vsel %vm1333, %v1330, %v1332
      %v1340 = vmul.f32 %v1323, %v1334
      %v1341 = vmul.f32 %v1323, %v1335
      %v1342 = vmul.f32 %v1323, %v1336
      %v1343 = vadd.f32 %v1315, %v1340
      %v1344 = vadd.f32 %v1316, %v1341
      %v1345 = vadd.f32 %v1317, %v1342
      %s1346 = scalar_lea.vmem %s2, 108
      %v1347 = vld [vmem:[%s1346] sm:$0xf]
      %1349 = vset.pattern.permute.xlu0 0
      %1350 = vperm.xlu0 %1349, %v1347
      %v1351 = vpop.permute.xlu0 %1350
      %1353 = vrot.lane.b32.xlu0 %v592, 56
      %v1354 = vpop.permute.xlu0 %1353
      %1355 = vrot.lane.b32.xlu0 %v610, 56
      %v1356 = vpop.permute.xlu0 %1355
      %1357 = vrot.lane.b32.xlu0 %v593, 56
      %v1358 = vpop.permute.xlu0 %1357
      %1359 = vrot.lane.b32.xlu0 %v625, 56
      %v1360 = vpop.permute.xlu0 %1359
      %vm1361 = vcmask 457728
      %v1362 = vsel %vm1361, %v1354, %v1356
      %v1363 = vsel %vm1361, %v1356, %v1358
      %v1364 = vsel %vm1361, %v1358, %v1360
      %v1368 = vmul.f32 %v1351, %v1362
      %v1369 = vmul.f32 %v1351, %v1363
      %v1370 = vmul.f32 %v1351, %v1364
      %v1371 = vadd.f32 %v1343, %v1368
      %v1372 = vadd.f32 %v1344, %v1369
      %v1373 = vadd.f32 %v1345, %v1370
      %s1374 = scalar_lea.vmem %s2, 112
      %v1375 = vld [vmem:[%s1374] sm:$0xf]
      %1377 = vset.pattern.permute.xlu0 0
      %1378 = vperm.xlu0 %1377, %v1375
      %v1379 = vpop.permute.xlu0 %1378
      %1381 = vrot.lane.b32.xlu0 %v592, 40
      %v1382 = vpop.permute.xlu0 %1381
      %1383 = vrot.lane.b32.xlu0 %v610, 40
      %v1384 = vpop.permute.xlu0 %1383
      %1385 = vrot.lane.b32.xlu0 %v593, 40
      %v1386 = vpop.permute.xlu0 %1385
      %1387 = vrot.lane.b32.xlu0 %v625, 40
      %v1388 = vpop.permute.xlu0 %1387
      %vm1389 = vcmask 326656
      %v1390 = vsel %vm1389, %v1382, %v1384
      %v1391 = vsel %vm1389, %v1384, %v1386
      %v1392 = vsel %vm1389, %v1386, %v1388
      %v1396 = vmul.f32 %v1379, %v1390
      %v1397 = vmul.f32 %v1379, %v1391
      %v1398 = vmul.f32 %v1379, %v1392
      %v1399 = vadd.f32 %v1371, %v1396
      %v1400 = vadd.f32 %v1372, %v1397
      %v1401 = vadd.f32 %v1373, %v1398
      %s1402 = scalar_lea.vmem %s2, 116
      %v1403 = vld [vmem:[%s1402] sm:$0xf]
      %1405 = vset.pattern.permute.xlu0 0
      %1406 = vperm.xlu0 %1405, %v1403
      %v1407 = vpop.permute.xlu0 %1406
      %1409 = vrot.lane.b32.xlu0 %v592, 39
      %v1410 = vpop.permute.xlu0 %1409
      %1411 = vrot.lane.b32.xlu0 %v610, 39
      %v1412 = vpop.permute.xlu0 %1411
      %1413 = vrot.lane.b32.xlu0 %v593, 39
      %v1414 = vpop.permute.xlu0 %1413
      %1415 = vrot.lane.b32.xlu0 %v625, 39
      %v1416 = vpop.permute.xlu0 %1415
      %vm1417 = vcmask 318464
      %v1418 = vsel %vm1417, %v1410, %v1412
      %v1419 = vsel %vm1417, %v1412, %v1414
      %v1420 = vsel %vm1417, %v1414, %v1416
      %v1424 = vmul.f32 %v1407, %v1418
      %v1425 = vmul.f32 %v1407, %v1419
      %v1426 = vmul.f32 %v1407, %v1420
      %v1427 = vadd.f32 %v1399, %v1424
      %v1428 = vadd.f32 %v1400, %v1425
      %v1429 = vadd.f32 %v1401, %v1426
      %s1430 = scalar_lea.vmem %s2, 120
      %v1431 = vld [vmem:[%s1430] sm:$0xf]
      %1433 = vset.pattern.permute.xlu0 0
      %1434 = vperm.xlu0 %1433, %v1431
      %v1435 = vpop.permute.xlu0 %1434
      %1437 = vrot.lane.b32.xlu0 %v592, 38
      %v1438 = vpop.permute.xlu0 %1437
      %1439 = vrot.lane.b32.xlu0 %v610, 38
      %v1440 = vpop.permute.xlu0 %1439
      %1441 = vrot.lane.b32.xlu0 %v593, 38
      %v1442 = vpop.permute.xlu0 %1441
      %1443 = vrot.lane.b32.xlu0 %v625, 38
      %v1444 = vpop.permute.xlu0 %1443
      %vm1445 = vcmask 310272
      %v1446 = vsel %vm1445, %v1438, %v1440
      %v1447 = vsel %vm1445, %v1440, %v1442
      %v1448 = vsel %vm1445, %v1442, %v1444
      %v1452 = vmul.f32 %v1435, %v1446
      %v1453 = vmul.f32 %v1435, %v1447
      %v1454 = vmul.f32 %v1435, %v1448
      %v1455 = vadd.f32 %v1427, %v1452
      %v1456 = vadd.f32 %v1428, %v1453
      %v1457 = vadd.f32 %v1429, %v1454
      %s1458 = scalar_lea.vmem %s2, 124
      %v1459 = vld [vmem:[%s1458] sm:$0xf]
      %1461 = vset.pattern.permute.xlu0 0
      %1462 = vperm.xlu0 %1461, %v1459
      %v1463 = vpop.permute.xlu0 %1462
      %1465 = vrot.lane.b32.xlu0 %v592, 37
      %v1466 = vpop.permute.xlu0 %1465
      %1467 = vrot.lane.b32.xlu0 %v610, 37
      %v1468 = vpop.permute.xlu0 %1467
      %1469 = vrot.lane.b32.xlu0 %v593, 37
      %v1470 = vpop.permute.xlu0 %1469
      %1471 = vrot.lane.b32.xlu0 %v625, 37
      %v1472 = vpop.permute.xlu0 %1471
      %vm1473 = vcmask 302080
      %v1474 = vsel %vm1473, %v1466, %v1468
      %v1475 = vsel %vm1473, %v1468, %v1470
      %v1476 = vsel %vm1473, %v1470, %v1472
      %v1480 = vmul.f32 %v1463, %v1474
      %v1481 = vmul.f32 %v1463, %v1475
      %v1482 = vmul.f32 %v1463, %v1476
      %v1483 = vadd.f32 %v1455, %v1480
      %v1484 = vadd.f32 %v1456, %v1481
      %v1485 = vadd.f32 %v1457, %v1482
      %s1486 = scalar_lea.vmem %s2, 128
      %v1487 = vld [vmem:[%s1486] sm:$0xf]
      %1489 = vset.pattern.permute.xlu0 0
      %1490 = vperm.xlu0 %1489, %v1487
      %v1491 = vpop.permute.xlu0 %1490
      %1493 = vrot.lane.b32.xlu0 %v592, 36
      %v1494 = vpop.permute.xlu0 %1493
      %1495 = vrot.lane.b32.xlu0 %v610, 36
      %v1496 = vpop.permute.xlu0 %1495
      %1497 = vrot.lane.b32.xlu0 %v593, 36
      %v1498 = vpop.permute.xlu0 %1497
      %1499 = vrot.lane.b32.xlu0 %v625, 36
      %v1500 = vpop.permute.xlu0 %1499
      %vm1501 = vcmask 293888
      %v1502 = vsel %vm1501, %v1494, %v1496
      %v1503 = vsel %vm1501, %v1496, %v1498
      %v1504 = vsel %vm1501, %v1498, %v1500
      %v1508 = vmul.f32 %v1491, %v1502
      %v1509 = vmul.f32 %v1491, %v1503
      %v1510 = vmul.f32 %v1491, %v1504
      %v1511 = vadd.f32 %v1483, %v1508
      %v1512 = vadd.f32 %v1484, %v1509
      %v1513 = vadd.f32 %v1485, %v1510
      %s1514 = scalar_lea.vmem %s2, 132
      %v1515 = vld [vmem:[%s1514] sm:$0xf]
      %1517 = vset.pattern.permute.xlu0 0
      %1518 = vperm.xlu0 %1517, %v1515
      %v1519 = vpop.permute.xlu0 %1518
      %1521 = vrot.lane.b32.xlu0 %v592, 35
      %v1522 = vpop.permute.xlu0 %1521
      %1523 = vrot.lane.b32.xlu0 %v610, 35
      %v1524 = vpop.permute.xlu0 %1523
      %1525 = vrot.lane.b32.xlu0 %v593, 35
      %v1526 = vpop.permute.xlu0 %1525
      %1527 = vrot.lane.b32.xlu0 %v625, 35
      %v1528 = vpop.permute.xlu0 %1527
      %vm1529 = vcmask 285696
      %v1530 = vsel %vm1529, %v1522, %v1524
      %v1531 = vsel %vm1529, %v1524, %v1526
      %v1532 = vsel %vm1529, %v1526, %v1528
      %v1536 = vmul.f32 %v1519, %v1530
      %v1537 = vmul.f32 %v1519, %v1531
      %v1538 = vmul.f32 %v1519, %v1532
      %v1539 = vadd.f32 %v1511, %v1536
      %v1540 = vadd.f32 %v1512, %v1537
      %v1541 = vadd.f32 %v1513, %v1538
      %s1542 = scalar_lea.vmem %s2, 136
      %v1543 = vld [vmem:[%s1542] sm:$0xf]
      %1545 = vset.pattern.permute.xlu0 0
      %1546 = vperm.xlu0 %1545, %v1543
      %v1547 = vpop.permute.xlu0 %1546
      %1549 = vrot.lane.b32.xlu0 %v592, 34
      %v1550 = vpop.permute.xlu0 %1549
      %1551 = vrot.lane.b32.xlu0 %v610, 34
      %v1552 = vpop.permute.xlu0 %1551
      %1553 = vrot.lane.b32.xlu0 %v593, 34
      %v1554 = vpop.permute.xlu0 %1553
      %1555 = vrot.lane.b32.xlu0 %v625, 34
      %v1556 = vpop.permute.xlu0 %1555
      %vm1557 = vcmask 277504
      %v1558 = vsel %vm1557, %v1550, %v1552
      %v1559 = vsel %vm1557, %v1552, %v1554
      %v1560 = vsel %vm1557, %v1554, %v1556
      %v1564 = vmul.f32 %v1547, %v1558
      %v1565 = vmul.f32 %v1547, %v1559
      %v1566 = vmul.f32 %v1547, %v1560
      %v1567 = vadd.f32 %v1539, %v1564
      %v1568 = vadd.f32 %v1540, %v1565
      %v1569 = vadd.f32 %v1541, %v1566
      %s1570 = scalar_lea.vmem %s2, 140
      %v1571 = vld [vmem:[%s1570] sm:$0xf]
      %1573 = vset.pattern.permute.xlu0 0
      %1574 = vperm.xlu0 %1573, %v1571
      %v1575 = vpop.permute.xlu0 %1574
      %1577 = vrot.lane.b32.xlu0 %v592, 18
      %v1578 = vpop.permute.xlu0 %1577
      %1579 = vrot.lane.b32.xlu0 %v610, 18
      %v1580 = vpop.permute.xlu0 %1579
      %1581 = vrot.lane.b32.xlu0 %v593, 18
      %v1582 = vpop.permute.xlu0 %1581
      %1583 = vrot.lane.b32.xlu0 %v625, 18
      %v1584 = vpop.permute.xlu0 %1583
      %vm1585 = vcmask 146432
      %v1586 = vsel %vm1585, %v1578, %v1580
      %v1587 = vsel %vm1585, %v1580, %v1582
      %v1588 = vsel %vm1585, %v1582, %v1584
      %v1592 = vmul.f32 %v1575, %v1586
      %v1593 = vmul.f32 %v1575, %v1587
      %v1594 = vmul.f32 %v1575, %v1588
      %v1595 = vadd.f32 %v1567, %v1592
      %v1596 = vadd.f32 %v1568, %v1593
      %v1597 = vadd.f32 %v1569, %v1594
      %s1598 = scalar_lea.vmem %s2, 144
      %v1599 = vld [vmem:[%s1598] sm:$0xf]
      %1601 = vset.pattern.permute.xlu0 0
      %1602 = vperm.xlu0 %1601, %v1599
      %v1603 = vpop.permute.xlu0 %1602
      %1605 = vrot.lane.b32.xlu0 %v592, 17
      %v1606 = vpop.permute.xlu0 %1605
      %1607 = vrot.lane.b32.xlu0 %v610, 17
      %v1608 = vpop.permute.xlu0 %1607
      %1609 = vrot.lane.b32.xlu0 %v593, 17
      %v1610 = vpop.permute.xlu0 %1609
      %1611 = vrot.lane.b32.xlu0 %v625, 17
      %v1612 = vpop.permute.xlu0 %1611
      %vm1613 = vcmask 138240
      %v1614 = vsel %vm1613, %v1606, %v1608
      %v1615 = vsel %vm1613, %v1608, %v1610
      %v1616 = vsel %vm1613, %v1610, %v1612
      %v1620 = vmul.f32 %v1603, %v1614
      %v1621 = vmul.f32 %v1603, %v1615
      %v1622 = vmul.f32 %v1603, %v1616
      %v1623 = vadd.f32 %v1595, %v1620
      %v1624 = vadd.f32 %v1596, %v1621
      %v1625 = vadd.f32 %v1597, %v1622
      %s1626 = scalar_lea.vmem %s2, 148
      %v1627 = vld [vmem:[%s1626] sm:$0xf]
      %1629 = vset.pattern.permute.xlu0 0
      %1630 = vperm.xlu0 %1629, %v1627
      %v1631 = vpop.permute.xlu0 %1630
      %1633 = vrot.lane.b32.xlu0 %v592, 16
      %v1634 = vpop.permute.xlu0 %1633
      %1635 = vrot.lane.b32.xlu0 %v610, 16
      %v1636 = vpop.permute.xlu0 %1635
      %1637 = vrot.lane.b32.xlu0 %v593, 16
      %v1638 = vpop.permute.xlu0 %1637
      %1639 = vrot.lane.b32.xlu0 %v625, 16
      %v1640 = vpop.permute.xlu0 %1639
      %vm1641 = vcmask 130048
      %v1642 = vsel %vm1641, %v1634, %v1636
      %v1643 = vsel %vm1641, %v1636, %v1638
      %v1644 = vsel %vm1641, %v1638, %v1640
      %v1648 = vmul.f32 %v1631, %v1642
      %v1649 = vmul.f32 %v1631, %v1643
      %v1650 = vmul.f32 %v1631, %v1644
      %v1651 = vadd.f32 %v1623, %v1648
      %v1652 = vadd.f32 %v1624, %v1649
      %v1653 = vadd.f32 %v1625, %v1650
      %s1654 = scalar_lea.vmem %s2, 152
      %v1655 = vld [vmem:[%s1654] sm:$0xf]
      %1657 = vset.pattern.permute.xlu0 0
      %1658 = vperm.xlu0 %1657, %v1655
      %v1659 = vpop.permute.xlu0 %1658
      %1661 = vrot.lane.b32.xlu0 %v592, 15
      %v1662 = vpop.permute.xlu0 %1661
      %1663 = vrot.lane.b32.xlu0 %v610, 15
      %v1664 = vpop.permute.xlu0 %1663
      %1665 = vrot.lane.b32.xlu0 %v593, 15
      %v1666 = vpop.permute.xlu0 %1665
      %1667 = vrot.lane.b32.xlu0 %v625, 15
      %v1668 = vpop.permute.xlu0 %1667
      %vm1669 = vcmask 121856
      %v1670 = vsel %vm1669, %v1662, %v1664
      %v1671 = vsel %vm1669, %v1664, %v1666
      %v1672 = vsel %vm1669, %v1666, %v1668
      %v1676 = vmul.f32 %v1659, %v1670
      %v1677 = vmul.f32 %v1659, %v1671
      %v1678 = vmul.f32 %v1659, %v1672
      %v1679 = vadd.f32 %v1651, %v1676
      %v1680 = vadd.f32 %v1652, %v1677
      %v1681 = vadd.f32 %v1653, %v1678
      %s1682 = scalar_lea.vmem %s2, 156
      %v1683 = vld [vmem:[%s1682] sm:$0xf]
      %1685 = vset.pattern.permute.xlu0 0
      %1686 = vperm.xlu0 %1685, %v1683
      %v1687 = vpop.permute.xlu0 %1686
      %1689 = vrot.lane.b32.xlu0 %v592, 14
      %v1690 = vpop.permute.xlu0 %1689
      %1691 = vrot.lane.b32.xlu0 %v610, 14
      %v1692 = vpop.permute.xlu0 %1691
      %1693 = vrot.lane.b32.xlu0 %v593, 14
      %v1694 = vpop.permute.xlu0 %1693
      %1695 = vrot.lane.b32.xlu0 %v625, 14
      %v1696 = vpop.permute.xlu0 %1695
      %vm1697 = vcmask 113664
      %v1698 = vsel %vm1697, %v1690, %v1692
      %v1699 = vsel %vm1697, %v1692, %v1694
      %v1700 = vsel %vm1697, %v1694, %v1696
      %v1704 = vmul.f32 %v1687, %v1698
      %v1705 = vmul.f32 %v1687, %v1699
      %v1706 = vmul.f32 %v1687, %v1700
      %v1707 = vadd.f32 %v1679, %v1704
      %v1708 = vadd.f32 %v1680, %v1705
      %v1709 = vadd.f32 %v1681, %v1706
      %s1710 = scalar_lea.vmem %s2, 160
      %v1711 = vld [vmem:[%s1710] sm:$0xf]
      %1713 = vset.pattern.permute.xlu0 0
      %1714 = vperm.xlu0 %1713, %v1711
      %v1715 = vpop.permute.xlu0 %1714
      %1717 = vrot.lane.b32.xlu0 %v592, 13
      %v1718 = vpop.permute.xlu0 %1717
      %1719 = vrot.lane.b32.xlu0 %v610, 13
      %v1720 = vpop.permute.xlu0 %1719
      %1721 = vrot.lane.b32.xlu0 %v593, 13
      %v1722 = vpop.permute.xlu0 %1721
      %1723 = vrot.lane.b32.xlu0 %v625, 13
      %v1724 = vpop.permute.xlu0 %1723
      %vm1725 = vcmask 105472
      %v1726 = vsel %vm1725, %v1718, %v1720
      %v1727 = vsel %vm1725, %v1720, %v1722
      %v1728 = vsel %vm1725, %v1722, %v1724
      %v1732 = vmul.f32 %v1715, %v1726
      %v1733 = vmul.f32 %v1715, %v1727
      %v1734 = vmul.f32 %v1715, %v1728
      %v1735 = vadd.f32 %v1707, %v1732
      %v1736 = vadd.f32 %v1708, %v1733
      %v1737 = vadd.f32 %v1709, %v1734
      %s1738 = scalar_lea.vmem %s2, 164
      %v1739 = vld [vmem:[%s1738] sm:$0xf]
      %1741 = vset.pattern.permute.xlu0 0
      %1742 = vperm.xlu0 %1741, %v1739
      %v1743 = vpop.permute.xlu0 %1742
      %1745 = vrot.lane.b32.xlu0 %v592, 12
      %v1746 = vpop.permute.xlu0 %1745
      %1747 = vrot.lane.b32.xlu0 %v610, 12
      %v1748 = vpop.permute.xlu0 %1747
      %1749 = vrot.lane.b32.xlu0 %v593, 12
      %v1750 = vpop.permute.xlu0 %1749
      %1751 = vrot.lane.b32.xlu0 %v625, 12
      %v1752 = vpop.permute.xlu0 %1751
      %vm1753 = vcmask 97280
      %v1754 = vsel %vm1753, %v1746, %v1748
      %v1755 = vsel %vm1753, %v1748, %v1750
      %v1756 = vsel %vm1753, %v1750, %v1752
      %v1760 = vmul.f32 %v1743, %v1754
      %v1761 = vmul.f32 %v1743, %v1755
      %v1762 = vmul.f32 %v1743, %v1756
      %v1763 = vadd.f32 %v1735, %v1760
      %v1764 = vadd.f32 %v1736, %v1761
      %v1765 = vadd.f32 %v1737, %v1762
      %s1766 = scalar_lea.vmem %s2, 168
      %v1767 = vld [vmem:[%s1766] sm:$0xf]
      %1769 = vset.pattern.permute.xlu0 0
      %1770 = vperm.xlu0 %1769, %v1767
      %v1771 = vpop.permute.xlu0 %1770
      %1774 = vrot.lane.b32.xlu0 %v594, 124
      %v1775 = vpop.permute.xlu0 %1774
      %v1776 = vsel %vm718, %v717, %v1775
      %v1778 = vmul.f32 %v1771, %v720
      %v1779 = vmul.f32 %v1771, %v721
      %v1780 = vmul.f32 %v1771, %v1776
      %v1781 = vadd.f32 %v1763, %v1778
      %v1782 = vadd.f32 %v1764, %v1779
      %v1783 = vadd.f32 %v1765, %v1780
      %s1784 = scalar_lea.vmem %s2, 172
      %v1785 = vld [vmem:[%s1784] sm:$0xf]
      %1787 = vset.pattern.permute.xlu0 0
      %1788 = vperm.xlu0 %1787, %v1785
      %v1789 = vpop.permute.xlu0 %1788
      %1791 = vrot.lane.b32.xlu0 %v594, 123
      %v1792 = vpop.permute.xlu0 %1791
      %v1793 = vsel %vm746, %v745, %v1792
      %v1795 = vmul.f32 %v1789, %v748
      %v1796 = vmul.f32 %v1789, %v749
      %v1797 = vmul.f32 %v1789, %v1793
      %v1798 = vadd.f32 %v1781, %v1795
      %v1799 = vadd.f32 %v1782, %v1796
      %v1800 = vadd.f32 %v1783, %v1797
      %s1801 = scalar_lea.vmem %s2, 176
      %v1802 = vld [vmem:[%s1801] sm:$0xf]
      %1804 = vset.pattern.permute.xlu0 0
      %1805 = vperm.xlu0 %1804, %v1802
      %v1806 = vpop.permute.xlu0 %1805
      %1808 = vrot.lane.b32.xlu0 %v594, 122
      %v1809 = vpop.permute.xlu0 %1808
      %v1810 = vsel %vm774, %v773, %v1809
      %v1812 = vmul.f32 %v1806, %v776
      %v1813 = vmul.f32 %v1806, %v777
      %v1814 = vmul.f32 %v1806, %v1810
      %v1815 = vadd.f32 %v1798, %v1812
      %v1816 = vadd.f32 %v1799, %v1813
      %v1817 = vadd.f32 %v1800, %v1814
      %s1818 = scalar_lea.vmem %s2, 180
      %v1819 = vld [vmem:[%s1818] sm:$0xf]
      %1821 = vset.pattern.permute.xlu0 0
      %1822 = vperm.xlu0 %1821, %v1819
      %v1823 = vpop.permute.xlu0 %1822
      %1825 = vrot.lane.b32.xlu0 %v610, 121
      %v1826 = vpop.permute.xlu0 %1825
      %1827 = vrot.lane.b32.xlu0 %v593, 121
      %v1828 = vpop.permute.xlu0 %1827
      %1829 = vrot.lane.b32.xlu0 %v625, 121
      %v1830 = vpop.permute.xlu0 %1829
      %1831 = vrot.lane.b32.xlu0 %v594, 121
      %v1832 = vpop.permute.xlu0 %1831
      %vm1833 = vcmask 990208
      %v1834 = vsel %vm1833, %v1826, %v1828
      %v1835 = vsel %vm1833, %v1828, %v1830
      %v1836 = vsel %vm1833, %v1830, %v1832
      %v1840 = vmul.f32 %v1823, %v1834
      %v1841 = vmul.f32 %v1823, %v1835
      %v1842 = vmul.f32 %v1823, %v1836
      %v1843 = vadd.f32 %v1815, %v1840
      %v1844 = vadd.f32 %v1816, %v1841
      %v1845 = vadd.f32 %v1817, %v1842
      %s1846 = scalar_lea.vmem %s2, 184
      %v1847 = vld [vmem:[%s1846] sm:$0xf]
      %1849 = vset.pattern.permute.xlu0 0
      %1850 = vperm.xlu0 %1849, %v1847
      %v1851 = vpop.permute.xlu0 %1850
      %1853 = vrot.lane.b32.xlu0 %v610, 120
      %v1854 = vpop.permute.xlu0 %1853
      %1855 = vrot.lane.b32.xlu0 %v593, 120
      %v1856 = vpop.permute.xlu0 %1855
      %1857 = vrot.lane.b32.xlu0 %v625, 120
      %v1858 = vpop.permute.xlu0 %1857
      %1859 = vrot.lane.b32.xlu0 %v594, 120
      %v1860 = vpop.permute.xlu0 %1859
      %vm1861 = vcmask 982016
      %v1862 = vsel %vm1861, %v1854, %v1856
      %v1863 = vsel %vm1861, %v1856, %v1858
      %v1864 = vsel %vm1861, %v1858, %v1860
      %v1868 = vmul.f32 %v1851, %v1862
      %v1869 = vmul.f32 %v1851, %v1863
      %v1870 = vmul.f32 %v1851, %v1864
      %v1871 = vadd.f32 %v1843, %v1868
      %v1872 = vadd.f32 %v1844, %v1869
      %v1873 = vadd.f32 %v1845, %v1870
      %s1874 = scalar_lea.vmem %s2, 188
      %v1875 = vld [vmem:[%s1874] sm:$0xf]
      %1877 = vset.pattern.permute.xlu0 0
      %1878 = vperm.xlu0 %1877, %v1875
      %v1879 = vpop.permute.xlu0 %1878
      %1881 = vrot.lane.b32.xlu0 %v610, 119
      %v1882 = vpop.permute.xlu0 %1881
      %1883 = vrot.lane.b32.xlu0 %v593, 119
      %v1884 = vpop.permute.xlu0 %1883
      %1885 = vrot.lane.b32.xlu0 %v625, 119
      %v1886 = vpop.permute.xlu0 %1885
      %1887 = vrot.lane.b32.xlu0 %v594, 119
      %v1888 = vpop.permute.xlu0 %1887
      %vm1889 = vcmask 973824
      %v1890 = vsel %vm1889, %v1882, %v1884
      %v1891 = vsel %vm1889, %v1884, %v1886
      %v1892 = vsel %vm1889, %v1886, %v1888
      %v1896 = vmul.f32 %v1879, %v1890
      %v1897 = vmul.f32 %v1879, %v1891
      %v1898 = vmul.f32 %v1879, %v1892
      %v1899 = vadd.f32 %v1871, %v1896
      %v1900 = vadd.f32 %v1872, %v1897
      %v1901 = vadd.f32 %v1873, %v1898
      %s1902 = scalar_lea.vmem %s2, 192
      %v1903 = vld [vmem:[%s1902] sm:$0xf]
      %1905 = vset.pattern.permute.xlu0 0
      %1906 = vperm.xlu0 %1905, %v1903
      %v1907 = vpop.permute.xlu0 %1906
      %1909 = vrot.lane.b32.xlu0 %v610, 118
      %v1910 = vpop.permute.xlu0 %1909
      %1911 = vrot.lane.b32.xlu0 %v593, 118
      %v1912 = vpop.permute.xlu0 %1911
      %1913 = vrot.lane.b32.xlu0 %v625, 118
      %v1914 = vpop.permute.xlu0 %1913
      %1915 = vrot.lane.b32.xlu0 %v594, 118
      %v1916 = vpop.permute.xlu0 %1915
      %vm1917 = vcmask 965632
      %v1918 = vsel %vm1917, %v1910, %v1912
      %v1919 = vsel %vm1917, %v1912, %v1914
      %v1920 = vsel %vm1917, %v1914, %v1916
      %v1924 = vmul.f32 %v1907, %v1918
      %v1925 = vmul.f32 %v1907, %v1919
      %v1926 = vmul.f32 %v1907, %v1920
      %v1927 = vadd.f32 %v1899, %v1924
      %v1928 = vadd.f32 %v1900, %v1925
      %v1929 = vadd.f32 %v1901, %v1926
      %vm1930 = vcmask 125952
      %1931 = vst.msk [vmem:[#allocation3] sm:$0xf] %vm1930, %v1927
      %1933 = vrot.lane.b32.xlu0 %v1927, 122
      %v1934 = vpop.permute.xlu0 %1933
      %vm1936 = vcmask 257152
      %1937 = vst.msk [vmem:[#allocation3] sm:$0xf] %vm1936, %v1934
      %1938 = vrot.lane.b32.xlu0 %v1927, 116
      %v1939 = vpop.permute.xlu0 %1938
      %vm1941 = vcmask 388352
      %1942 = vst.msk [vmem:[#allocation3] sm:$0xf] %vm1941, %v1939
      %1943 = vrot.lane.b32.xlu0 %v1927, 110
      %v1944 = vpop.permute.xlu0 %1943
      %vm1946 = vcmask 519552
      %1947 = vst.msk [vmem:[#allocation3] sm:$0xf] %vm1946, %v1944
      %1948 = vrot.lane.b32.xlu0 %v1927, 104
      %v1949 = vpop.permute.xlu0 %1948
      %vm1951 = vcmask 650752
      %1952 = vst.msk [vmem:[#allocation3] sm:$0xf] %vm1951, %v1949
      %1953 = vrot.lane.b32.xlu0 %v1927, 98
      %v1954 = vpop.permute.xlu0 %1953
      %vm1956 = vcmask 781952
      %1957 = vst.msk [vmem:[#allocation3] sm:$0xf] %vm1956, %v1954
      %1959 = vrot.lane.b32.xlu0 %v1928, 92
      %v1960 = vpop.permute.xlu0 %1959
      %vm1962 = vcmask 913152
      %1963 = vst.msk [vmem:[#allocation3] sm:$0xf] %vm1962, %v1960
      %1964 = vrot.lane.b32.xlu0 %v1928, 86
      %v1965 = vpop.permute.xlu0 %1964
      %vm1967 = vcmask 1044352
      %1968 = vst.msk [vmem:[#allocation3] sm:$0xf] %vm1967, %v1965
      %1969 = vrot.lane.b32.xlu0 %v1928, 80
      %v1970 = vpop.permute.xlu0 %1969
      %1972 = vst.msk [vmem:[#allocation3 + $0x4] sm:$0xf] %vm1930, %v1970
      %1973 = vrot.lane.b32.xlu0 %v1928, 74
      %v1974 = vpop.permute.xlu0 %1973
      %1976 = vst.msk [vmem:[#allocation3 + $0x4] sm:$0xf] %vm1936, %v1974
      %1977 = vrot.lane.b32.xlu0 %v1928, 68
      %v1978 = vpop.permute.xlu0 %1977
      %1980 = vst.msk [vmem:[#allocation3 + $0x4] sm:$0xf] %vm1941, %v1978
      %v1982 = vcombine.low %v1928, %v1929
      %1983 = vrot.lane.b32.xlu0 %v1982, 62
      %v1984 = vpop.permute.xlu0 %1983
      %v1985 = vrot.slane %v1984, 4
      %v1986 = vsel %vm1193, %v1984, %v1985
      %1988 = vst.msk [vmem:[#allocation3 + $0x4] sm:$0xf] %vm1946, %v1986
      %1989 = vrot.lane.b32.xlu0 %v1929, 56
      %v1990 = vpop.permute.xlu0 %1989
      %1992 = vst.msk [vmem:[#allocation3 + $0x4] sm:$0xf] %vm1951, %v1990
      %1993 = vrot.lane.b32.xlu0 %v1929, 50
      %v1994 = vpop.permute.xlu0 %1993
      %1996 = vst.msk [vmem:[#allocation3 + $0x4] sm:$0xf] %vm1956, %v1994
      %1997 = vrot.lane.b32.xlu0 %v1929, 44
      %v1998 = vpop.permute.xlu0 %1997
      %2000 = vst.msk [vmem:[#allocation3 + $0x4] sm:$0xf] %vm1962, %v1998
      %2001 = vrot.lane.b32.xlu0 %v1929, 38
      %v2002 = vpop.permute.xlu0 %2001
      %2004 = vst.msk [vmem:[#allocation3 + $0x4] sm:$0xf] %vm1967, %v2002
      %v2005 = vld [vmem:[#allocation3] sm:$0xff]
      %vm2006 = vcmp.lt.s32.totalorder %v482, 2
      %v2008 = vcombine.high %v2005, %v2005
      %v2010 = vsel %vm2006, %v2005, 0.0
      %v2011 = vsel %vm2006, %v2008, 0.0
      %vm2012 = vcmask 1043456
      %v2013 = vsel %vm2012, %v2010, 0.0
      %v2014 = vrot.slane %v2013, 4
      %v2015 = vadd.f32 %v2013, %v2014
      %v2016 = vrot.slane %v2015, 2
      %v2017 = vadd.f32 %v2015, %v2016
      %v2018 = vrot.slane %v2017, 1
      %v2019 = vadd.f32 %v2017, %v2018
      %v2020 = vsel %vm2012, %v2011, 0.0
      %v2021 = vrot.slane %v2020, 4
      %v2022 = vadd.f32 %v2020, %v2021
      %v2023 = vrot.slane %v2022, 2
      %v2024 = vadd.f32 %v2022, %v2023
      %v2025 = vrot.slane %v2024, 1
      %v2026 = vadd.f32 %v2024, %v2025
      %vm2027 = vcmp.ge.s32.totalorder %v482, 2
      %v2028 = vsel %vm2027, %v2005, 0.0
      %v2029 = vsel %vm2027, %v2008, 0.0
      %v2030 = vsel %vm2012, %v2028, 0.0
      %v2031 = vrot.slane %v2030, 4
      %v2032 = vadd.f32 %v2030, %v2031
      %v2033 = vrot.slane %v2032, 2
      %v2034 = vadd.f32 %v2032, %v2033
      %v2035 = vrot.slane %v2034, 1
      %v2036 = vadd.f32 %v2034, %v2035
      %v2037 = vsel %vm2012, %v2029, 0.0
      %v2038 = vrot.slane %v2037, 4
      %v2039 = vadd.f32 %v2037, %v2038
      %v2040 = vrot.slane %v2039, 2
      %v2041 = vadd.f32 %v2039, %v2040
      %v2042 = vrot.slane %v2041, 1
      %v2043 = vadd.f32 %v2041, %v2042
      %v2044 = vxor.u32 %v2019, 2147483648
      %v2045 = vxor.u32 %v2026, 2147483648
      %v2046 = vmul.f32 %v2044, 1.442695
      %v2047 = vpow.pop %v2046
      %v2048 = vmul.f32 %v2045, 1.442695
      %v2049 = vpow.pop %v2048
      %v2050 = vadd.f32 %v2047, 1.0
      %v2051 = vadd.f32 %v2049, 1.0
      %v2052 = vrcp.pop %v2050
      %v2053 = vmul.f32 1.0, %v2052
      %v2054 = vrcp.pop %v2051
      %v2055 = vmul.f32 1.0, %v2054
      %v2056 = vadd.f32 %v2053, 1.0
      %v2057 = vadd.f32 %v2055, 1.0
      %v2058 = vxor.u32 %v2036, 2147483648
      %v2059 = vxor.u32 %v2043, 2147483648
      %v2060 = vmul.f32 %v2058, 1.442695
      %v2061 = vpow.pop %v2060
      %v2062 = vmul.f32 %v2059, 1.442695
      %v2063 = vpow.pop %v2062
      %v2064 = vadd.f32 %v2061, 1.0
      %v2065 = vadd.f32 %v2063, 1.0
      %v2066 = vrcp.pop %v2064
      %v2067 = vmul.f32 1.0, %v2066
      %v2068 = vrcp.pop %v2065
      %v2069 = vmul.f32 1.0, %v2068
      %v2070 = vadd.f32 %v2067, 1.0
      %v2071 = vadd.f32 %v2069, 1.0
      %v2072 = vld [vmem:[%s234] sm:$0xff]
      %v2073 = vld [vmem:[%s234 + $0x10] sm:$0xff]
      %v2074 = vld [vmem:[%s234 + $0x20] sm:$0xff]
      %v2075 = vld [vmem:[%s234 + $0x30] sm:$0xff]
      %v2076 = vld [vmem:[%s234 + $0x40] sm:$0xff]
      %v2077 = vld [vmem:[%s234 + $0x50] sm:$0xff]
      %v2078 = vld [vmem:[%s234 + $0x60] sm:$0xff]
      %v2079 = vld [vmem:[%s234 + $0x70] sm:$0xff]
      %v2080 = vld [vmem:[%s234 + $0x80] sm:$0xff]
      %v2081 = vld [vmem:[%s234 + $0x90] sm:$0xff]
      %v2082 = vld [vmem:[%s234 + $0xa0] sm:$0xff]
      %v2083 = vld [vmem:[%s234 + $0xb0] sm:$0xff]
      %v2084 = vld [vmem:[%s234 + $0xc0] sm:$0xff]
      %v2085 = vld [vmem:[%s234 + $0xd0] sm:$0xff]
      %v2086 = vld [vmem:[%s234 + $0xe0] sm:$0xff]
      %v2087 = vld [vmem:[%s234 + $0xf0] sm:$0xff]
      %v2088 = vmul.f32 %v2072, %v2056
      %v2089 = vmul.f32 %v2073, %v2056
      %v2090 = vmul.f32 %v2074, %v2056
      %v2091 = vmul.f32 %v2075, %v2056
      %v2092 = vmul.f32 %v2076, %v2056
      %v2093 = vmul.f32 %v2077, %v2056
      %v2094 = vmul.f32 %v2078, %v2056
      %v2095 = vmul.f32 %v2079, %v2056
      %v2096 = vmul.f32 %v2080, %v2056
      %v2097 = vmul.f32 %v2081, %v2056
      %v2098 = vmul.f32 %v2082, %v2056
      %v2099 = vmul.f32 %v2083, %v2056
      %v2100 = vmul.f32 %v2084, %v2056
      %v2101 = vmul.f32 %v2085, %v2056
      %v2102 = vmul.f32 %v2086, %v2056
      %v2103 = vmul.f32 %v2087, %v2056
      %2104 = vst [vmem:[#allocation4] sm:$0xff] %v2088
      %2105 = vst [vmem:[#allocation4 + $0x10] sm:$0xff] %v2089
      %2106 = vst [vmem:[#allocation4 + $0x20] sm:$0xff] %v2090
      %2107 = vst [vmem:[#allocation4 + $0x30] sm:$0xff] %v2091
      %2108 = vst [vmem:[#allocation4 + $0x40] sm:$0xff] %v2092
      %2109 = vst [vmem:[#allocation4 + $0x50] sm:$0xff] %v2093
      %2110 = vst [vmem:[#allocation4 + $0x60] sm:$0xff] %v2094
      %2111 = vst [vmem:[#allocation4 + $0x70] sm:$0xff] %v2095
      %2112 = vst [vmem:[#allocation4 + $0x80] sm:$0xff] %v2096
      %2113 = vst [vmem:[#allocation4 + $0x90] sm:$0xff] %v2097
      %2114 = vst [vmem:[#allocation4 + $0xa0] sm:$0xff] %v2098
      %2115 = vst [vmem:[#allocation4 + $0xb0] sm:$0xff] %v2099
      %2116 = vst [vmem:[#allocation4 + $0xc0] sm:$0xff] %v2100
      %2117 = vst [vmem:[#allocation4 + $0xd0] sm:$0xff] %v2101
      %2118 = vst [vmem:[#allocation4 + $0xe0] sm:$0xff] %v2102
      %2119 = vst [vmem:[#allocation4 + $0xf0] sm:$0xff] %v2103
      %v2120 = vld [vmem:[%s239] sm:$0xff]
      %v2121 = vld [vmem:[%s239 + $0x10] sm:$0xff]
      %v2122 = vld [vmem:[%s239 + $0x20] sm:$0xff]
      %v2123 = vld [vmem:[%s239 + $0x30] sm:$0xff]
      %v2124 = vld [vmem:[%s239 + $0x40] sm:$0xff]
      %v2125 = vld [vmem:[%s239 + $0x50] sm:$0xff]
      %v2126 = vld [vmem:[%s239 + $0x60] sm:$0xff]
      %v2127 = vld [vmem:[%s239 + $0x70] sm:$0xff]
      %v2128 = vld [vmem:[%s239 + $0x80] sm:$0xff]
      %v2129 = vld [vmem:[%s239 + $0x90] sm:$0xff]
      %v2130 = vld [vmem:[%s239 + $0xa0] sm:$0xff]
      %v2131 = vld [vmem:[%s239 + $0xb0] sm:$0xff]
      %v2132 = vld [vmem:[%s239 + $0xc0] sm:$0xff]
      %v2133 = vld [vmem:[%s239 + $0xd0] sm:$0xff]
      %v2134 = vld [vmem:[%s239 + $0xe0] sm:$0xff]
      %v2135 = vld [vmem:[%s239 + $0xf0] sm:$0xff]
      %v2136 = vmul.f32 %v2120, %v2070
      %v2137 = vmul.f32 %v2121, %v2070
      %v2138 = vmul.f32 %v2122, %v2070
      %v2139 = vmul.f32 %v2123, %v2070
      %v2140 = vmul.f32 %v2124, %v2070
      %v2141 = vmul.f32 %v2125, %v2070
      %v2142 = vmul.f32 %v2126, %v2070
      %v2143 = vmul.f32 %v2127, %v2070
      %v2144 = vmul.f32 %v2128, %v2070
      %v2145 = vmul.f32 %v2129, %v2070
      %v2146 = vmul.f32 %v2130, %v2070
      %v2147 = vmul.f32 %v2131, %v2070
      %v2148 = vmul.f32 %v2132, %v2070
      %v2149 = vmul.f32 %v2133, %v2070
      %v2150 = vmul.f32 %v2134, %v2070
      %v2151 = vmul.f32 %v2135, %v2070
      %2152 = vst [vmem:[#allocation5] sm:$0xff] %v2136
      %2153 = vst [vmem:[#allocation5 + $0x10] sm:$0xff] %v2137
      %2154 = vst [vmem:[#allocation5 + $0x20] sm:$0xff] %v2138
      %2155 = vst [vmem:[#allocation5 + $0x30] sm:$0xff] %v2139
      %2156 = vst [vmem:[#allocation5 + $0x40] sm:$0xff] %v2140
      %2157 = vst [vmem:[#allocation5 + $0x50] sm:$0xff] %v2141
      %2158 = vst [vmem:[#allocation5 + $0x60] sm:$0xff] %v2142
      %2159 = vst [vmem:[#allocation5 + $0x70] sm:$0xff] %v2143
      %2160 = vst [vmem:[#allocation5 + $0x80] sm:$0xff] %v2144
      %2161 = vst [vmem:[#allocation5 + $0x90] sm:$0xff] %v2145
      %2162 = vst [vmem:[#allocation5 + $0xa0] sm:$0xff] %v2146
      %2163 = vst [vmem:[#allocation5 + $0xb0] sm:$0xff] %v2147
      %2164 = vst [vmem:[#allocation5 + $0xc0] sm:$0xff] %v2148
      %2165 = vst [vmem:[#allocation5 + $0xd0] sm:$0xff] %v2149
      %2166 = vst [vmem:[#allocation5 + $0xe0] sm:$0xff] %v2150
      %2167 = vst [vmem:[#allocation5 + $0xf0] sm:$0xff] %v2151
      %v2168 = vld [vmem:[%s234 + $0x8] sm:$0xff]
      %v2169 = vld [vmem:[%s234 + $0x18] sm:$0xff]
      %v2170 = vld [vmem:[%s234 + $0x28] sm:$0xff]
      %v2171 = vld [vmem:[%s234 + $0x38] sm:$0xff]
      %v2172 = vld [vmem:[%s234 + $0x48] sm:$0xff]
      %v2173 = vld [vmem:[%s234 + $0x58] sm:$0xff]
      %v2174 = vld [vmem:[%s234 + $0x68] sm:$0xff]
      %v2175 = vld [vmem:[%s234 + $0x78] sm:$0xff]
      %v2176 = vld [vmem:[%s234 + $0x88] sm:$0xff]
      %v2177 = vld [vmem:[%s234 + $0x98] sm:$0xff]
      %v2178 = vld [vmem:[%s234 + $0xa8] sm:$0xff]
      %v2179 = vld [vmem:[%s234 + $0xb8] sm:$0xff]
      %v2180 = vld [vmem:[%s234 + $0xc8] sm:$0xff]
      %v2181 = vld [vmem:[%s234 + $0xd8] sm:$0xff]
      %v2182 = vld [vmem:[%s234 + $0xe8] sm:$0xff]
      %v2183 = vld [vmem:[%s234 + $0xf8] sm:$0xff]
      %v2184 = vmul.f32 %v2168, %v2057
      %v2185 = vmul.f32 %v2169, %v2057
      %v2186 = vmul.f32 %v2170, %v2057
      %v2187 = vmul.f32 %v2171, %v2057
      %v2188 = vmul.f32 %v2172, %v2057
      %v2189 = vmul.f32 %v2173, %v2057
      %v2190 = vmul.f32 %v2174, %v2057
      %v2191 = vmul.f32 %v2175, %v2057
      %v2192 = vmul.f32 %v2176, %v2057
      %v2193 = vmul.f32 %v2177, %v2057
      %v2194 = vmul.f32 %v2178, %v2057
      %v2195 = vmul.f32 %v2179, %v2057
      %v2196 = vmul.f32 %v2180, %v2057
      %v2197 = vmul.f32 %v2181, %v2057
      %v2198 = vmul.f32 %v2182, %v2057
      %v2199 = vmul.f32 %v2183, %v2057
      %2200 = vst [vmem:[#allocation4 + $0x8] sm:$0xff] %v2184
      %2201 = vst [vmem:[#allocation4 + $0x18] sm:$0xff] %v2185
      %2202 = vst [vmem:[#allocation4 + $0x28] sm:$0xff] %v2186
      %2203 = vst [vmem:[#allocation4 + $0x38] sm:$0xff] %v2187
      %2204 = vst [vmem:[#allocation4 + $0x48] sm:$0xff] %v2188
      %2205 = vst [vmem:[#allocation4 + $0x58] sm:$0xff] %v2189
      %2206 = vst [vmem:[#allocation4 + $0x68] sm:$0xff] %v2190
      %2207 = vst [vmem:[#allocation4 + $0x78] sm:$0xff] %v2191
      %2208 = vst [vmem:[#allocation4 + $0x88] sm:$0xff] %v2192
      %2209 = vst [vmem:[#allocation4 + $0x98] sm:$0xff] %v2193
      %2210 = vst [vmem:[#allocation4 + $0xa8] sm:$0xff] %v2194
      %2211 = vst [vmem:[#allocation4 + $0xb8] sm:$0xff] %v2195
      %2212 = vst [vmem:[#allocation4 + $0xc8] sm:$0xff] %v2196
      %2213 = vst [vmem:[#allocation4 + $0xd8] sm:$0xff] %v2197
      %2214 = vst [vmem:[#allocation4 + $0xe8] sm:$0xff] %v2198
      %2215 = vst [vmem:[#allocation4 + $0xf8] sm:$0xff] %v2199
      %v2216 = vld [vmem:[%s239 + $0x8] sm:$0xff]
      %v2217 = vld [vmem:[%s239 + $0x18] sm:$0xff]
      %v2218 = vld [vmem:[%s239 + $0x28] sm:$0xff]
      %v2219 = vld [vmem:[%s239 + $0x38] sm:$0xff]
      %v2220 = vld [vmem:[%s239 + $0x48] sm:$0xff]
      %v2221 = vld [vmem:[%s239 + $0x58] sm:$0xff]
      %v2222 = vld [vmem:[%s239 + $0x68] sm:$0xff]
      %v2223 = vld [vmem:[%s239 + $0x78] sm:$0xff]
      %v2224 = vld [vmem:[%s239 + $0x88] sm:$0xff]
      %v2225 = vld [vmem:[%s239 + $0x98] sm:$0xff]
      %v2226 = vld [vmem:[%s239 + $0xa8] sm:$0xff]
      %v2227 = vld [vmem:[%s239 + $0xb8] sm:$0xff]
      %v2228 = vld [vmem:[%s239 + $0xc8] sm:$0xff]
      %v2229 = vld [vmem:[%s239 + $0xd8] sm:$0xff]
      %v2230 = vld [vmem:[%s239 + $0xe8] sm:$0xff]
      %v2231 = vld [vmem:[%s239 + $0xf8] sm:$0xff]
      %v2232 = vmul.f32 %v2216, %v2071
      %v2233 = vmul.f32 %v2217, %v2071
      %v2234 = vmul.f32 %v2218, %v2071
      %v2235 = vmul.f32 %v2219, %v2071
      %v2236 = vmul.f32 %v2220, %v2071
      %v2237 = vmul.f32 %v2221, %v2071
      %v2238 = vmul.f32 %v2222, %v2071
      %v2239 = vmul.f32 %v2223, %v2071
      %v2240 = vmul.f32 %v2224, %v2071
      %v2241 = vmul.f32 %v2225, %v2071
      %v2242 = vmul.f32 %v2226, %v2071
      %v2243 = vmul.f32 %v2227, %v2071
      %v2244 = vmul.f32 %v2228, %v2071
      %v2245 = vmul.f32 %v2229, %v2071
      %v2246 = vmul.f32 %v2230, %v2071
      %v2247 = vmul.f32 %v2231, %v2071
      %2248 = vst [vmem:[#allocation5 + $0x8] sm:$0xff] %v2232
      %2249 = vst [vmem:[#allocation5 + $0x18] sm:$0xff] %v2233
      %2250 = vst [vmem:[#allocation5 + $0x28] sm:$0xff] %v2234
      %2251 = vst [vmem:[#allocation5 + $0x38] sm:$0xff] %v2235
      %2252 = vst [vmem:[#allocation5 + $0x48] sm:$0xff] %v2236
      %2253 = vst [vmem:[#allocation5 + $0x58] sm:$0xff] %v2237
      %2254 = vst [vmem:[#allocation5 + $0x68] sm:$0xff] %v2238
      %2255 = vst [vmem:[#allocation5 + $0x78] sm:$0xff] %v2239
      %2256 = vst [vmem:[#allocation5 + $0x88] sm:$0xff] %v2240
      %2257 = vst [vmem:[#allocation5 + $0x98] sm:$0xff] %v2241
      %2258 = vst [vmem:[#allocation5 + $0xa8] sm:$0xff] %v2242
      %2259 = vst [vmem:[#allocation5 + $0xb8] sm:$0xff] %v2243
      %2260 = vst [vmem:[#allocation5 + $0xc8] sm:$0xff] %v2244
      %2261 = vst [vmem:[#allocation5 + $0xd8] sm:$0xff] %v2245
      %2262 = vst [vmem:[#allocation5 + $0xe8] sm:$0xff] %v2246
      %2263 = vst [vmem:[#allocation5 + $0xf8] sm:$0xff] %v2247
      %v2264 = vld [vmem:[#allocation4] sm:$0xff]
      %v2265 = vld [vmem:[#allocation4 + $0x8] sm:$0xff]
      %v2266 = vld [vmem:[#allocation4 + $0x10] sm:$0xff]
      %v2267 = vld [vmem:[#allocation4 + $0x18] sm:$0xff]
      %v2268 = vld [vmem:[#allocation4 + $0x20] sm:$0xff]
      %v2269 = vld [vmem:[#allocation4 + $0x28] sm:$0xff]
      %v2270 = vld [vmem:[#allocation4 + $0x30] sm:$0xff]
      %v2271 = vld [vmem:[#allocation4 + $0x38] sm:$0xff]
      %v2272 = vld [vmem:[#allocation4 + $0x40] sm:$0xff]
      %v2273 = vld [vmem:[#allocation4 + $0x48] sm:$0xff]
      %v2274 = vld [vmem:[#allocation4 + $0x50] sm:$0xff]
      %v2275 = vld [vmem:[#allocation4 + $0x58] sm:$0xff]
      %v2276 = vld [vmem:[#allocation4 + $0x60] sm:$0xff]
      %v2277 = vld [vmem:[#allocation4 + $0x68] sm:$0xff]
      %v2278 = vld [vmem:[#allocation4 + $0x70] sm:$0xff]
      %v2279 = vld [vmem:[#allocation4 + $0x78] sm:$0xff]
      %v2280 = vld [vmem:[#allocation4 + $0x80] sm:$0xff]
      %v2281 = vld [vmem:[#allocation4 + $0x88] sm:$0xff]
      %v2282 = vld [vmem:[#allocation4 + $0x90] sm:$0xff]
      %v2283 = vld [vmem:[#allocation4 + $0x98] sm:$0xff]
      %v2284 = vld [vmem:[#allocation4 + $0xa0] sm:$0xff]
      %v2285 = vld [vmem:[#allocation4 + $0xa8] sm:$0xff]
      %v2286 = vld [vmem:[#allocation4 + $0xb0] sm:$0xff]
      %v2287 = vld [vmem:[#allocation4 + $0xb8] sm:$0xff]
      %v2288 = vld [vmem:[#allocation4 + $0xc0] sm:$0xff]
      %v2289 = vld [vmem:[#allocation4 + $0xc8] sm:$0xff]
      %v2290 = vld [vmem:[#allocation4 + $0xd0] sm:$0xff]
      %v2291 = vld [vmem:[#allocation4 + $0xd8] sm:$0xff]
      %v2292 = vld [vmem:[#allocation4 + $0xe0] sm:$0xff]
      %v2293 = vld [vmem:[#allocation4 + $0xe8] sm:$0xff]
      %v2294 = vld [vmem:[#allocation4 + $0xf0] sm:$0xff]
      %v2295 = vld [vmem:[#allocation4 + $0xf8] sm:$0xff]
      %v2296 = vld [vmem:[#allocation5] sm:$0xff]
      %v2297 = vld [vmem:[#allocation5 + $0x8] sm:$0xff]
      %v2298 = vld [vmem:[#allocation5 + $0x10] sm:$0xff]
      %v2299 = vld [vmem:[#allocation5 + $0x18] sm:$0xff]
      %v2300 = vld [vmem:[#allocation5 + $0x20] sm:$0xff]
      %v2301 = vld [vmem:[#allocation5 + $0x28] sm:$0xff]
      %v2302 = vld [vmem:[#allocation5 + $0x30] sm:$0xff]
      %v2303 = vld [vmem:[#allocation5 + $0x38] sm:$0xff]
      %v2304 = vld [vmem:[#allocation5 + $0x40] sm:$0xff]
      %v2305 = vld [vmem:[#allocation5 + $0x48] sm:$0xff]
      %v2306 = vld [vmem:[#allocation5 + $0x50] sm:$0xff]
      %v2307 = vld [vmem:[#allocation5 + $0x58] sm:$0xff]
      %v2308 = vld [vmem:[#allocation5 + $0x60] sm:$0xff]
      %v2309 = vld [vmem:[#allocation5 + $0x68] sm:$0xff]
      %v2310 = vld [vmem:[#allocation5 + $0x70] sm:$0xff]
      %v2311 = vld [vmem:[#allocation5 + $0x78] sm:$0xff]
      %v2312 = vld [vmem:[#allocation5 + $0x80] sm:$0xff]
      %v2313 = vld [vmem:[#allocation5 + $0x88] sm:$0xff]
      %v2314 = vld [vmem:[#allocation5 + $0x90] sm:$0xff]
      %v2315 = vld [vmem:[#allocation5 + $0x98] sm:$0xff]
      %v2316 = vld [vmem:[#allocation5 + $0xa0] sm:$0xff]
      %v2317 = vld [vmem:[#allocation5 + $0xa8] sm:$0xff]
      %v2318 = vld [vmem:[#allocation5 + $0xb0] sm:$0xff]
      %v2319 = vld [vmem:[#allocation5 + $0xb8] sm:$0xff]
      %v2320 = vld [vmem:[#allocation5 + $0xc0] sm:$0xff]
      %v2321 = vld [vmem:[#allocation5 + $0xc8] sm:$0xff]
      %v2322 = vld [vmem:[#allocation5 + $0xd0] sm:$0xff]
      %v2323 = vld [vmem:[#allocation5 + $0xd8] sm:$0xff]
      %v2324 = vld [vmem:[#allocation5 + $0xe0] sm:$0xff]
      %v2325 = vld [vmem:[#allocation5 + $0xe8] sm:$0xff]
      %v2326 = vld [vmem:[#allocation5 + $0xf0] sm:$0xff]
      %v2327 = vld [vmem:[#allocation5 + $0xf8] sm:$0xff]
      %v2328 = vadd.f32 %v2264, %v2296
      %v2329 = vadd.f32 %v2265, %v2297
      %v2330 = vadd.f32 %v2266, %v2298
      %v2331 = vadd.f32 %v2267, %v2299
      %v2332 = vadd.f32 %v2268, %v2300
      %v2333 = vadd.f32 %v2269, %v2301
      %v2334 = vadd.f32 %v2270, %v2302
      %v2335 = vadd.f32 %v2271, %v2303
      %v2336 = vadd.f32 %v2272, %v2304
      %v2337 = vadd.f32 %v2273, %v2305
      %v2338 = vadd.f32 %v2274, %v2306
      %v2339 = vadd.f32 %v2275, %v2307
      %v2340 = vadd.f32 %v2276, %v2308
      %v2341 = vadd.f32 %v2277, %v2309
      %v2342 = vadd.f32 %v2278, %v2310
      %v2343 = vadd.f32 %v2279, %v2311
      %v2344 = vadd.f32 %v2280, %v2312
      %v2345 = vadd.f32 %v2281, %v2313
      %v2346 = vadd.f32 %v2282, %v2314
      %v2347 = vadd.f32 %v2283, %v2315
      %v2348 = vadd.f32 %v2284, %v2316
      %v2349 = vadd.f32 %v2285, %v2317
      %v2350 = vadd.f32 %v2286, %v2318
      %v2351 = vadd.f32 %v2287, %v2319
      %v2352 = vadd.f32 %v2288, %v2320
      %v2353 = vadd.f32 %v2289, %v2321
      %v2354 = vadd.f32 %v2290, %v2322
      %v2355 = vadd.f32 %v2291, %v2323
      %v2356 = vadd.f32 %v2292, %v2324
      %v2357 = vadd.f32 %v2293, %v2325
      %v2358 = vadd.f32 %v2294, %v2326
      %v2359 = vadd.f32 %v2295, %v2327
      %v2360 = vadd.f32 %v2328, %v2329
      %2361 = vadd.xlane.f32.xlu0 %v2360
      %v2362 = vpop.xlane.xlu0 %2361
      %v2363 = vadd.f32 %v2330, %v2331
      %2364 = vadd.xlane.f32.xlu0 %v2363
      %v2365 = vpop.xlane.xlu0 %2364
      %v2366 = vadd.f32 %v2332, %v2333
      %2367 = vadd.xlane.f32.xlu0 %v2366
      %v2368 = vpop.xlane.xlu0 %2367
      %v2369 = vadd.f32 %v2334, %v2335
      %2370 = vadd.xlane.f32.xlu0 %v2369
      %v2371 = vpop.xlane.xlu0 %2370
      %v2372 = vadd.f32 %v2336, %v2337
      %2373 = vadd.xlane.f32.xlu0 %v2372
      %v2374 = vpop.xlane.xlu0 %2373
      %v2375 = vadd.f32 %v2338, %v2339
      %2376 = vadd.xlane.f32.xlu0 %v2375
      %v2377 = vpop.xlane.xlu0 %2376
      %v2378 = vadd.f32 %v2340, %v2341
      %2379 = vadd.xlane.f32.xlu0 %v2378
      %v2380 = vpop.xlane.xlu0 %2379
      %v2381 = vadd.f32 %v2342, %v2343
      %2382 = vadd.xlane.f32.xlu0 %v2381
      %v2383 = vpop.xlane.xlu0 %2382
      %v2384 = vadd.f32 %v2344, %v2345
      %2385 = vadd.xlane.f32.xlu0 %v2384
      %v2386 = vpop.xlane.xlu0 %2385
      %v2387 = vadd.f32 %v2346, %v2347
      %2388 = vadd.xlane.f32.xlu0 %v2387
      %v2389 = vpop.xlane.xlu0 %2388
      %v2390 = vadd.f32 %v2348, %v2349
      %2391 = vadd.xlane.f32.xlu0 %v2390
      %v2392 = vpop.xlane.xlu0 %2391
      %v2393 = vadd.f32 %v2350, %v2351
      %2394 = vadd.xlane.f32.xlu0 %v2393
      %v2395 = vpop.xlane.xlu0 %2394
      %v2396 = vadd.f32 %v2352, %v2353
      %2397 = vadd.xlane.f32.xlu0 %v2396
      %v2398 = vpop.xlane.xlu0 %2397
      %v2399 = vadd.f32 %v2354, %v2355
      %2400 = vadd.xlane.f32.xlu0 %v2399
      %v2401 = vpop.xlane.xlu0 %2400
      %v2402 = vadd.f32 %v2356, %v2357
      %2403 = vadd.xlane.f32.xlu0 %v2402
      %v2404 = vpop.xlane.xlu0 %2403
      %v2405 = vadd.f32 %v2358, %v2359
      %2406 = vadd.xlane.f32.xlu0 %v2405
      %v2407 = vpop.xlane.xlu0 %2406
      %v2408 = vmul.f32 %v2362, 0.00390625
      %v2409 = vmul.f32 %v2365, 0.00390625
      %v2410 = vmul.f32 %v2368, 0.00390625
      %v2411 = vmul.f32 %v2371, 0.00390625
      %v2412 = vmul.f32 %v2374, 0.00390625
      %v2413 = vmul.f32 %v2377, 0.00390625
      %v2414 = vmul.f32 %v2380, 0.00390625
      %v2415 = vmul.f32 %v2383, 0.00390625
      %v2416 = vmul.f32 %v2386, 0.00390625
      %v2417 = vmul.f32 %v2389, 0.00390625
      %v2418 = vmul.f32 %v2392, 0.00390625
      %v2419 = vmul.f32 %v2395, 0.00390625
      %v2420 = vmul.f32 %v2398, 0.00390625
      %v2421 = vmul.f32 %v2401, 0.00390625
      %v2422 = vmul.f32 %v2404, 0.00390625
      %v2423 = vmul.f32 %v2407, 0.00390625
      %v2424 = vld [vmem:[%s3] sm:$0xff]
      %2425 = vmatprep.subr.mxu0 0.0
      %2426 = vmatpush1.msra.mxu0 %v2423
      %2427 = vmatprep.subr.mxu0 0.0
      %2428 = vmatpush1.msra.mxu0 %v2422
      %2429 = vmatprep.subr.mxu0 0.0
      %2430 = vmatpush1.msra.mxu0 %v2421
      %2431 = vmatprep.subr.mxu0 0.0
      %2432 = vmatpush1.msra.mxu0 %v2420
      %2433 = vmatprep.subr.mxu0 0.0
      %2434 = vmatpush1.msra.mxu0 %v2419
      %2435 = vmatprep.subr.mxu0 0.0
      %2436 = vmatpush1.msra.mxu0 %v2418
      %2437 = vmatprep.subr.mxu0 0.0
      %2438 = vmatpush1.msra.mxu0 %v2417
      %2439 = vmatprep.subr.mxu0 0.0
      %2440 = vmatpush1.msra.mxu0 %v2416
      %2441 = vmatprep.subr.mxu0 0.0
      %2442 = vmatpush1.msra.mxu0 %v2415
      %2443 = vmatprep.subr.mxu0 0.0
      %2444 = vmatpush1.msra.mxu0 %v2414
      %2445 = vmatprep.subr.mxu0 0.0
      %2446 = vmatpush1.msra.mxu0 %v2413
      %2447 = vmatprep.subr.mxu0 0.0
      %2448 = vmatpush1.msra.mxu0 %v2412
      %2449 = vmatprep.subr.mxu0 0.0
      %2450 = vmatpush1.msra.mxu0 %v2411
      %2451 = vmatprep.subr.mxu0 0.0
      %2452 = vmatpush1.msra.mxu0 %v2410
      %2453 = vmatprep.subr.mxu0 0.0
      %2454 = vmatpush1.msra.mxu0 %v2409
      %2455 = vmatprep.subr.mxu0 0.0
      %2456 = vmatpush1.msra.mxu0 %v2408
      %2457 = vmatprep.subr.mxu0 0.0
      %2458 = vmatpush2.msra.mxu0 0.0
      %2459 = vmatprep.subr.mxu0 0.0
      %2460 = vmatpush2.msra.mxu0 0.0
      %2461 = vmatprep.subr.mxu0 0.0
      %2462 = vmatpush2.msra.mxu0 0.0
      %2463 = vmatprep.subr.mxu0 0.0
      %2464 = vmatpush2.msra.mxu0 0.0
      %2465 = vmatprep.subr.mxu0 0.0
      %2466 = vmatpush2.msra.mxu0 0.0
      %2467 = vmatprep.subr.mxu0 0.0
      %2468 = vmatpush2.msra.mxu0 0.0
      %2469 = vmatprep.subr.mxu0 0.0
      %2470 = vmatpush2.msra.mxu0 0.0
      %2471 = vmatprep.subr.mxu0 0.0
      %2472 = vmatpush2.msra.mxu0 0.0
      %2473 = vmatprep.subr.mxu0 0.0
      %2474 = vmatpush2.msra.mxu0 0.0
      %2475 = vmatprep.subr.mxu0 0.0
      %2476 = vmatpush2.msra.mxu0 0.0
      %2477 = vmatprep.subr.mxu0 0.0
      %2478 = vmatpush2.msra.mxu0 0.0
      %2479 = vmatprep.subr.mxu0 0.0
      %2480 = vmatpush2.msra.mxu0 0.0
      %2481 = vmatprep.subr.mxu0 0.0
      %2482 = vmatpush2.msra.mxu0 0.0
      %2483 = vmatprep.subr.mxu0 0.0
      %2484 = vmatpush2.msra.mxu0 0.0
      %2485 = vmatprep.subr.mxu0 0.0
      %2486 = vmatpush2.msra.mxu0 0.0
      %2487 = vmatprep.subr.mxu0 0.0
      %2488 = vmatpush2.msra.mxu0 0.0
      %2489 = vmatprep.mubr.f32.mxu0 0.0
      %2490 = vmatmul.mubr.f32.gmra.mxu0 %v2424
      %v2491 = vpop.f32.mrf.mxu0
      %v2492 = vadd.f32 0.0, %v2491
      %v2493 = vpop.f32.mrf.mxu0
      %2494 = vdwg.mxu0
      %v2495 = vmax.f32 %v2492, 0.0
      %v2496 = vld [vmem:[%s4] sm:$0xff]
      %v2497 = vld [vmem:[%s4 + $0x8] sm:$0xff]
      %v2498 = vld [vmem:[%s4 + $0x10] sm:$0xff]
      %v2499 = vld [vmem:[%s4 + $0x18] sm:$0xff]
      %v2500 = vld [vmem:[%s4 + $0x20] sm:$0xff]
      %v2501 = vld [vmem:[%s4 + $0x28] sm:$0xff]
      %v2502 = vld [vmem:[%s4 + $0x30] sm:$0xff]
      %v2503 = vld [vmem:[%s4 + $0x38] sm:$0xff]
      %v2504 = vld [vmem:[%s4 + $0x40] sm:$0xff]
      %v2505 = vld [vmem:[%s4 + $0x48] sm:$0xff]
      %v2506 = vld [vmem:[%s4 + $0x50] sm:$0xff]
      %v2507 = vld [vmem:[%s4 + $0x58] sm:$0xff]
      %v2508 = vld [vmem:[%s4 + $0x60] sm:$0xff]
      %v2509 = vld [vmem:[%s4 + $0x68] sm:$0xff]
      %v2510 = vld [vmem:[%s4 + $0x70] sm:$0xff]
      %v2511 = vld [vmem:[%s4 + $0x78] sm:$0xff]
      %v2512 = vld [vmem:[%s4 + $0x80] sm:$0xff]
      %v2513 = vld [vmem:[%s4 + $0x88] sm:$0xff]
      %v2514 = vld [vmem:[%s4 + $0x90] sm:$0xff]
      %v2515 = vld [vmem:[%s4 + $0x98] sm:$0xff]
      %v2516 = vld [vmem:[%s4 + $0xa0] sm:$0xff]
      %v2517 = vld [vmem:[%s4 + $0xa8] sm:$0xff]
      %v2518 = vld [vmem:[%s4 + $0xb0] sm:$0xff]
      %v2519 = vld [vmem:[%s4 + $0xb8] sm:$0xff]
      %v2520 = vld [vmem:[%s4 + $0xc0] sm:$0xff]
      %v2521 = vld [vmem:[%s4 + $0xc8] sm:$0xff]
      %v2522 = vld [vmem:[%s4 + $0xd0] sm:$0xff]
      %v2523 = vld [vmem:[%s4 + $0xd8] sm:$0xff]
      %v2524 = vld [vmem:[%s4 + $0xe0] sm:$0xff]
      %v2525 = vld [vmem:[%s4 + $0xe8] sm:$0xff]
      %v2526 = vld [vmem:[%s4 + $0xf0] sm:$0xff]
      %v2527 = vld [vmem:[%s4 + $0xf8] sm:$0xff]
      %vm2528 = vcmask 64512
      %v2530 = vsel %vm2528, %v2496, 0
      %v2533 = vsel %vm2528, %v2497, 0
      %v2536 = vsel %vm2528, %v2498, 0
      %v2539 = vsel %vm2528, %v2499, 0
      %v2542 = vsel %vm2528, %v2500, 0
      %v2545 = vsel %vm2528, %v2501, 0
      %v2548 = vsel %vm2528, %v2502, 0
      %v2551 = vsel %vm2528, %v2503, 0
      %v2554 = vsel %vm2528, %v2504, 0
      %v2557 = vsel %vm2528, %v2505, 0
      %v2560 = vsel %vm2528, %v2506, 0
      %v2563 = vsel %vm2528, %v2507, 0
      %v2566 = vsel %vm2528, %v2508, 0
      %v2569 = vsel %vm2528, %v2509, 0
      %v2572 = vsel %vm2528, %v2510, 0
      %v2575 = vsel %vm2528, %v2511, 0
      %v2578 = vsel %vm2528, %v2512, 0
      %v2581 = vsel %vm2528, %v2513, 0
      %v2584 = vsel %vm2528, %v2514, 0
      %v2587 = vsel %vm2528, %v2515, 0
      %v2590 = vsel %vm2528, %v2516, 0
      %v2593 = vsel %vm2528, %v2517, 0
      %v2596 = vsel %vm2528, %v2518, 0
      %v2599 = vsel %vm2528, %v2519, 0
      %v2602 = vsel %vm2528, %v2520, 0
      %v2605 = vsel %vm2528, %v2521, 0
      %v2608 = vsel %vm2528, %v2522, 0
      %v2611 = vsel %vm2528, %v2523, 0
      %v2614 = vsel %vm2528, %v2524, 0
      %v2617 = vsel %vm2528, %v2525, 0
      %v2620 = vsel %vm2528, %v2526, 0
      %v2623 = vsel %vm2528, %v2527, 0
      %2625 = vmatprep.subr.mxu0 0.0
      %2626 = vmatpush1.msra.mxu0 0.0
      %2627 = vmatprep.subr.mxu0 0.0
      %2628 = vmatpush1.msra.mxu0 0.0
      %2629 = vmatprep.subr.mxu0 0.0
      %2630 = vmatpush1.msra.mxu0 0.0
      %2631 = vmatprep.subr.mxu0 0.0
      %2632 = vmatpush1.msra.mxu0 0.0
      %2633 = vmatprep.subr.mxu0 0.0
      %2634 = vmatpush1.msra.mxu0 0.0
      %2635 = vmatprep.subr.mxu0 0.0
      %2636 = vmatpush1.msra.mxu0 0.0
      %2637 = vmatprep.subr.mxu0 0.0
      %2638 = vmatpush1.msra.mxu0 0.0
      %2639 = vmatprep.subr.mxu0 0.0
      %2640 = vmatpush1.msra.mxu0 0.0
      %2641 = vmatprep.subr.mxu0 0.0
      %2642 = vmatpush1.msra.mxu0 0.0
      %2643 = vmatprep.subr.mxu0 0.0
      %2644 = vmatpush1.msra.mxu0 0.0
      %2645 = vmatprep.subr.mxu0 0.0
      %2646 = vmatpush1.msra.mxu0 0.0
      %2647 = vmatprep.subr.mxu0 0.0
      %2648 = vmatpush1.msra.mxu0 0.0
      %2649 = vmatprep.subr.mxu0 0.0
      %2650 = vmatpush1.msra.mxu0 0.0
      %2651 = vmatprep.subr.mxu0 0.0
      %2652 = vmatpush1.msra.mxu0 0.0
      %2653 = vmatprep.subr.mxu0 0.0
      %2654 = vmatpush1.msra.mxu0 0.0
      %2655 = vmatprep.subr.mxu0 0.0
      %2656 = vmatpush1.msra.mxu0 %v2495
      %2657 = vmatprep.subr.mxu0 0.0
      %2658 = vmatpush2.msra.mxu0 0.0
      %2659 = vmatprep.subr.mxu0 0.0
      %2660 = vmatpush2.msra.mxu0 0.0
      %2661 = vmatprep.subr.mxu0 0.0
      %2662 = vmatpush2.msra.mxu0 0.0
      %2663 = vmatprep.subr.mxu0 0.0
      %2664 = vmatpush2.msra.mxu0 0.0
      %2665 = vmatprep.subr.mxu0 0.0
      %2666 = vmatpush2.msra.mxu0 0.0
      %2667 = vmatprep.subr.mxu0 0.0
      %2668 = vmatpush2.msra.mxu0 0.0
      %2669 = vmatprep.subr.mxu0 0.0
      %2670 = vmatpush2.msra.mxu0 0.0
      %2671 = vmatprep.subr.mxu0 0.0
      %2672 = vmatpush2.msra.mxu0 0.0
      %2673 = vmatprep.subr.mxu0 0.0
      %2674 = vmatpush2.msra.mxu0 0.0
      %2675 = vmatprep.subr.mxu0 0.0
      %2676 = vmatpush2.msra.mxu0 0.0
      %2677 = vmatprep.subr.mxu0 0.0
      %2678 = vmatpush2.msra.mxu0 0.0
      %2679 = vmatprep.subr.mxu0 0.0
      %2680 = vmatpush2.msra.mxu0 0.0
      %2681 = vmatprep.subr.mxu0 0.0
      %2682 = vmatpush2.msra.mxu0 0.0
      %2683 = vmatprep.subr.mxu0 0.0
      %2684 = vmatpush2.msra.mxu0 0.0
      %2685 = vmatprep.subr.mxu0 0.0
      %2686 = vmatpush2.msra.mxu0 0.0
      %2687 = vmatprep.subr.mxu0 0.0
      %2688 = vmatpush2.msra.mxu0 0.0
      %2689 = vmatprep.mubr.f32.mxu0 0.0
      %2690 = vmatmul.mubr.f32.gmra.mxu0 %v2530
      %v2691 = vpop.f32.mrf.mxu0
      %v2692 = vadd.f32 0.0, %v2691
      %v2693 = vpop.f32.mrf.mxu0
      %2694 = vmatprep.mubr.f32.mxu0 0.0
      %2695 = vmatmul.mubr.f32.gmra.mxu0 %v2533
      %v2696 = vpop.f32.mrf.mxu0
      %v2697 = vadd.f32 0.0, %v2696
      %v2698 = vpop.f32.mrf.mxu0
      %2699 = vmatprep.mubr.f32.mxu0 0.0
      %2700 = vmatmul.mubr.f32.gmra.mxu0 %v2536
      %v2701 = vpop.f32.mrf.mxu0
      %v2702 = vadd.f32 0.0, %v2701
      %v2703 = vpop.f32.mrf.mxu0
      %2704 = vmatprep.mubr.f32.mxu0 0.0
      %2705 = vmatmul.mubr.f32.gmra.mxu0 %v2539
      %v2706 = vpop.f32.mrf.mxu0
      %v2707 = vadd.f32 0.0, %v2706
      %v2708 = vpop.f32.mrf.mxu0
      %2709 = vmatprep.mubr.f32.mxu0 0.0
      %2710 = vmatmul.mubr.f32.gmra.mxu0 %v2542
      %v2711 = vpop.f32.mrf.mxu0
      %v2712 = vadd.f32 0.0, %v2711
      %v2713 = vpop.f32.mrf.mxu0
      %2714 = vmatprep.mubr.f32.mxu0 0.0
      %2715 = vmatmul.mubr.f32.gmra.mxu0 %v2545
      %v2716 = vpop.f32.mrf.mxu0
      %v2717 = vadd.f32 0.0, %v2716
      %v2718 = vpop.f32.mrf.mxu0
      %2719 = vmatprep.mubr.f32.mxu0 0.0
      %2720 = vmatmul.mubr.f32.gmra.mxu0 %v2548
      %v2721 = vpop.f32.mrf.mxu0
      %v2722 = vadd.f32 0.0, %v2721
      %v2723 = vpop.f32.mrf.mxu0
      %2724 = vmatprep.mubr.f32.mxu0 0.0
      %2725 = vmatmul.mubr.f32.gmra.mxu0 %v2551
      %v2726 = vpop.f32.mrf.mxu0
      %v2727 = vadd.f32 0.0, %v2726
      %v2728 = vpop.f32.mrf.mxu0
      %2729 = vmatprep.mubr.f32.mxu0 0.0
      %2730 = vmatmul.mubr.f32.gmra.mxu0 %v2554
      %v2731 = vpop.f32.mrf.mxu0
      %v2732 = vadd.f32 0.0, %v2731
      %v2733 = vpop.f32.mrf.mxu0
      %2734 = vmatprep.mubr.f32.mxu0 0.0
      %2735 = vmatmul.mubr.f32.gmra.mxu0 %v2557
      %v2736 = vpop.f32.mrf.mxu0
      %v2737 = vadd.f32 0.0, %v2736
      %v2738 = vpop.f32.mrf.mxu0
      %2739 = vmatprep.mubr.f32.mxu0 0.0
      %2740 = vmatmul.mubr.f32.gmra.mxu0 %v2560
      %v2741 = vpop.f32.mrf.mxu0
      %v2742 = vadd.f32 0.0, %v2741
      %v2743 = vpop.f32.mrf.mxu0
      %2744 = vmatprep.mubr.f32.mxu0 0.0
      %2745 = vmatmul.mubr.f32.gmra.mxu0 %v2563
      %v2746 = vpop.f32.mrf.mxu0
      %v2747 = vadd.f32 0.0, %v2746
      %v2748 = vpop.f32.mrf.mxu0
      %2749 = vmatprep.mubr.f32.mxu0 0.0
      %2750 = vmatmul.mubr.f32.gmra.mxu0 %v2566
      %v2751 = vpop.f32.mrf.mxu0
      %v2752 = vadd.f32 0.0, %v2751
      %v2753 = vpop.f32.mrf.mxu0
      %2754 = vmatprep.mubr.f32.mxu0 0.0
      %2755 = vmatmul.mubr.f32.gmra.mxu0 %v2569
      %v2756 = vpop.f32.mrf.mxu0
      %v2757 = vadd.f32 0.0, %v2756
      %v2758 = vpop.f32.mrf.mxu0
      %2759 = vmatprep.mubr.f32.mxu0 0.0
      %2760 = vmatmul.mubr.f32.gmra.mxu0 %v2572
      %v2761 = vpop.f32.mrf.mxu0
      %v2762 = vadd.f32 0.0, %v2761
      %v2763 = vpop.f32.mrf.mxu0
      %2764 = vmatprep.mubr.f32.mxu0 0.0
      %2765 = vmatmul.mubr.f32.gmra.mxu0 %v2575
      %v2766 = vpop.f32.mrf.mxu0
      %v2767 = vadd.f32 0.0, %v2766
      %v2768 = vpop.f32.mrf.mxu0
      %2769 = vmatprep.mubr.f32.mxu0 0.0
      %2770 = vmatmul.mubr.f32.gmra.mxu0 %v2578
      %v2771 = vpop.f32.mrf.mxu0
      %v2772 = vadd.f32 0.0, %v2771
      %v2773 = vpop.f32.mrf.mxu0
      %2774 = vmatprep.mubr.f32.mxu0 0.0
      %2775 = vmatmul.mubr.f32.gmra.mxu0 %v2581
      %v2776 = vpop.f32.mrf.mxu0
      %v2777 = vadd.f32 0.0, %v2776
      %v2778 = vpop.f32.mrf.mxu0
      %2779 = vmatprep.mubr.f32.mxu0 0.0
      %2780 = vmatmul.mubr.f32.gmra.mxu0 %v2584
      %v2781 = vpop.f32.mrf.mxu0
      %v2782 = vadd.f32 0.0, %v2781
      %v2783 = vpop.f32.mrf.mxu0
      %2784 = vmatprep.mubr.f32.mxu0 0.0
      %2785 = vmatmul.mubr.f32.gmra.mxu0 %v2587
      %v2786 = vpop.f32.mrf.mxu0
      %v2787 = vadd.f32 0.0, %v2786
      %v2788 = vpop.f32.mrf.mxu0
      %2789 = vmatprep.mubr.f32.mxu0 0.0
      %2790 = vmatmul.mubr.f32.gmra.mxu0 %v2590
      %v2791 = vpop.f32.mrf.mxu0
      %v2792 = vadd.f32 0.0, %v2791
      %v2793 = vpop.f32.mrf.mxu0
      %2794 = vmatprep.mubr.f32.mxu0 0.0
      %2795 = vmatmul.mubr.f32.gmra.mxu0 %v2593
      %v2796 = vpop.f32.mrf.mxu0
      %v2797 = vadd.f32 0.0, %v2796
      %v2798 = vpop.f32.mrf.mxu0
      %2799 = vmatprep.mubr.f32.mxu0 0.0
      %2800 = vmatmul.mubr.f32.gmra.mxu0 %v2596
      %v2801 = vpop.f32.mrf.mxu0
      %v2802 = vadd.f32 0.0, %v2801
      %v2803 = vpop.f32.mrf.mxu0
      %2804 = vmatprep.mubr.f32.mxu0 0.0
      %2805 = vmatmul.mubr.f32.gmra.mxu0 %v2599
      %v2806 = vpop.f32.mrf.mxu0
      %v2807 = vadd.f32 0.0, %v2806
      %v2808 = vpop.f32.mrf.mxu0
      %2809 = vmatprep.mubr.f32.mxu0 0.0
      %2810 = vmatmul.mubr.f32.gmra.mxu0 %v2602
      %v2811 = vpop.f32.mrf.mxu0
      %v2812 = vadd.f32 0.0, %v2811
      %v2813 = vpop.f32.mrf.mxu0
      %2814 = vmatprep.mubr.f32.mxu0 0.0
      %2815 = vmatmul.mubr.f32.gmra.mxu0 %v2605
      %v2816 = vpop.f32.mrf.mxu0
      %v2817 = vadd.f32 0.0, %v2816
      %v2818 = vpop.f32.mrf.mxu0
      %2819 = vmatprep.mubr.f32.mxu0 0.0
      %2820 = vmatmul.mubr.f32.gmra.mxu0 %v2608
      %v2821 = vpop.f32.mrf.mxu0
      %v2822 = vadd.f32 0.0, %v2821
      %v2823 = vpop.f32.mrf.mxu0
      %2824 = vmatprep.mubr.f32.mxu0 0.0
      %2825 = vmatmul.mubr.f32.gmra.mxu0 %v2611
      %v2826 = vpop.f32.mrf.mxu0
      %v2827 = vadd.f32 0.0, %v2826
      %v2828 = vpop.f32.mrf.mxu0
      %2829 = vmatprep.mubr.f32.mxu0 0.0
      %2830 = vmatmul.mubr.f32.gmra.mxu0 %v2614
      %v2831 = vpop.f32.mrf.mxu0
      %v2832 = vadd.f32 0.0, %v2831
      %v2833 = vpop.f32.mrf.mxu0
      %2834 = vmatprep.mubr.f32.mxu0 0.0
      %2835 = vmatmul.mubr.f32.gmra.mxu0 %v2617
      %v2836 = vpop.f32.mrf.mxu0
      %v2837 = vadd.f32 0.0, %v2836
      %v2838 = vpop.f32.mrf.mxu0
      %2839 = vmatprep.mubr.f32.mxu0 0.0
      %2840 = vmatmul.mubr.f32.gmra.mxu0 %v2620
      %v2841 = vpop.f32.mrf.mxu0
      %v2842 = vadd.f32 0.0, %v2841
      %v2843 = vpop.f32.mrf.mxu0
      %2844 = vmatprep.mubr.f32.mxu0 0.0
      %2845 = vmatmul.mubr.f32.gmra.mxu0 %v2623
      %v2846 = vpop.f32.mrf.mxu0
      %v2847 = vadd.f32 0.0, %v2846
      %v2848 = vpop.f32.mrf.mxu0
      %2849 = vdwg.mxu0
      %v2850 = vmax.f32 %v2692, %v2772
      %v2851 = vmax.f32 %v2697, %v2777
      %v2852 = vmax.f32 %v2702, %v2782
      %v2853 = vmax.f32 %v2707, %v2787
      %v2854 = vmax.f32 %v2712, %v2792
      %v2855 = vmax.f32 %v2717, %v2797
      %v2856 = vmax.f32 %v2722, %v2802
      %v2857 = vmax.f32 %v2727, %v2807
      %v2858 = vmax.f32 %v2732, %v2812
      %v2859 = vmax.f32 %v2737, %v2817
      %v2860 = vmax.f32 %v2742, %v2822
      %v2861 = vmax.f32 %v2747, %v2827
      %v2862 = vmax.f32 %v2752, %v2832
      %v2863 = vmax.f32 %v2757, %v2837
      %v2864 = vmax.f32 %v2762, %v2842
      %v2865 = vmax.f32 %v2767, %v2847
      %v2866 = vsub.f32 %v2692, %v2850
      %v2867 = vsub.f32 %v2697, %v2851
      %v2868 = vsub.f32 %v2702, %v2852
      %v2869 = vsub.f32 %v2707, %v2853
      %v2870 = vsub.f32 %v2712, %v2854
      %v2871 = vsub.f32 %v2717, %v2855
      %v2872 = vsub.f32 %v2722, %v2856
      %v2873 = vsub.f32 %v2727, %v2857
      %v2874 = vsub.f32 %v2732, %v2858
      %v2875 = vsub.f32 %v2737, %v2859
      %v2876 = vsub.f32 %v2742, %v2860
      %v2877 = vsub.f32 %v2747, %v2861
      %v2878 = vsub.f32 %v2752, %v2862
      %v2879 = vsub.f32 %v2757, %v2863
      %v2880 = vsub.f32 %v2762, %v2864
      %v2881 = vsub.f32 %v2767, %v2865
      %v2882 = vmul.f32 %v2866, 1.442695
      %v2883 = vpow.pop %v2882
      %v2884 = vmul.f32 %v2867, 1.442695
      %v2885 = vpow.pop %v2884
      %v2886 = vmul.f32 %v2868, 1.442695
      %v2887 = vpow.pop %v2886
      %v2888 = vmul.f32 %v2869, 1.442695
      %v2889 = vpow.pop %v2888
      %v2890 = vmul.f32 %v2870, 1.442695
      %v2891 = vpow.pop %v2890
      %v2892 = vmul.f32 %v2871, 1.442695
      %v2893 = vpow.pop %v2892
      %v2894 = vmul.f32 %v2872, 1.442695
      %v2895 = vpow.pop %v2894
      %v2896 = vmul.f32 %v2873, 1.442695
      %v2897 = vpow.pop %v2896
      %v2898 = vmul.f32 %v2874, 1.442695
      %v2899 = vpow.pop %v2898
      %v2900 = vmul.f32 %v2875, 1.442695
      %v2901 = vpow.pop %v2900
      %v2902 = vmul.f32 %v2876, 1.442695
      %v2903 = vpow.pop %v2902
      %v2904 = vmul.f32 %v2877, 1.442695
      %v2905 = vpow.pop %v2904
      %v2906 = vmul.f32 %v2878, 1.442695
      %v2907 = vpow.pop %v2906
      %v2908 = vmul.f32 %v2879, 1.442695
      %v2909 = vpow.pop %v2908
      %v2910 = vmul.f32 %v2880, 1.442695
      %v2911 = vpow.pop %v2910
      %v2912 = vmul.f32 %v2881, 1.442695
      %v2913 = vpow.pop %v2912
      %v2914 = vsub.f32 %v2772, %v2850
      %v2915 = vsub.f32 %v2777, %v2851
      %v2916 = vsub.f32 %v2782, %v2852
      %v2917 = vsub.f32 %v2787, %v2853
      %v2918 = vsub.f32 %v2792, %v2854
      %v2919 = vsub.f32 %v2797, %v2855
      %v2920 = vsub.f32 %v2802, %v2856
      %v2921 = vsub.f32 %v2807, %v2857
      %v2922 = vsub.f32 %v2812, %v2858
      %v2923 = vsub.f32 %v2817, %v2859
      %v2924 = vsub.f32 %v2822, %v2860
      %v2925 = vsub.f32 %v2827, %v2861
      %v2926 = vsub.f32 %v2832, %v2862
      %v2927 = vsub.f32 %v2837, %v2863
      %v2928 = vsub.f32 %v2842, %v2864
      %v2929 = vsub.f32 %v2847, %v2865
      %v2930 = vmul.f32 %v2914, 1.442695
      %v2931 = vpow.pop %v2930
      %v2932 = vmul.f32 %v2915, 1.442695
      %v2933 = vpow.pop %v2932
      %v2934 = vmul.f32 %v2916, 1.442695
      %v2935 = vpow.pop %v2934
      %v2936 = vmul.f32 %v2917, 1.442695
      %v2937 = vpow.pop %v2936
      %v2938 = vmul.f32 %v2918, 1.442695
      %v2939 = vpow.pop %v2938
      %v2940 = vmul.f32 %v2919, 1.442695
      %v2941 = vpow.pop %v2940
      %v2942 = vmul.f32 %v2920, 1.442695
      %v2943 = vpow.pop %v2942
      %v2944 = vmul.f32 %v2921, 1.442695
      %v2945 = vpow.pop %v2944
      %v2946 = vmul.f32 %v2922, 1.442695
      %v2947 = vpow.pop %v2946
      %v2948 = vmul.f32 %v2923, 1.442695
      %v2949 = vpow.pop %v2948
      %v2950 = vmul.f32 %v2924, 1.442695
      %v2951 = vpow.pop %v2950
      %v2952 = vmul.f32 %v2925, 1.442695
      %v2953 = vpow.pop %v2952
      %v2954 = vmul.f32 %v2926, 1.442695
      %v2955 = vpow.pop %v2954
      %v2956 = vmul.f32 %v2927, 1.442695
      %v2957 = vpow.pop %v2956
      %v2958 = vmul.f32 %v2928, 1.442695
      %v2959 = vpow.pop %v2958
      %v2960 = vmul.f32 %v2929, 1.442695
      %v2961 = vpow.pop %v2960
      %v2962 = vadd.f32 %v2883, %v2931
      %v2963 = vadd.f32 %v2885, %v2933
      %v2964 = vadd.f32 %v2887, %v2935
      %v2965 = vadd.f32 %v2889, %v2937
      %v2966 = vadd.f32 %v2891, %v2939
      %v2967 = vadd.f32 %v2893, %v2941
      %v2968 = vadd.f32 %v2895, %v2943
      %v2969 = vadd.f32 %v2897, %v2945
      %v2970 = vadd.f32 %v2899, %v2947
      %v2971 = vadd.f32 %v2901, %v2949
      %v2972 = vadd.f32 %v2903, %v2951
      %v2973 = vadd.f32 %v2905, %v2953
      %v2974 = vadd.f32 %v2907, %v2955
      %v2975 = vadd.f32 %v2909, %v2957
      %v2976 = vadd.f32 %v2911, %v2959
      %v2977 = vadd.f32 %v2913, %v2961
      %v2978 = vrcp.pop %v2962
      %v2979 = vmul.f32 1.0, %v2978
      %v2980 = vrcp.pop %v2963
      %v2981 = vmul.f32 1.0, %v2980
      %v2982 = vrcp.pop %v2964
      %v2983 = vmul.f32 1.0, %v2982
      %v2984 = vrcp.pop %v2965
      %v2985 = vmul.f32 1.0, %v2984
      %v2986 = vrcp.pop %v2966
      %v2987 = vmul.f32 1.0, %v2986
      %v2988 = vrcp.pop %v2967
      %v2989 = vmul.f32 1.0, %v2988
      %v2990 = vrcp.pop %v2968
      %v2991 = vmul.f32 1.0, %v2990
      %v2992 = vrcp.pop %v2969
      %v2993 = vmul.f32 1.0, %v2992
      %v2994 = vrcp.pop %v2970
      %v2995 = vmul.f32 1.0, %v2994
      %v2996 = vrcp.pop %v2971
      %v2997 = vmul.f32 1.0, %v2996
      %v2998 = vrcp.pop %v2972
      %v2999 = vmul.f32 1.0, %v2998
      %v3000 = vrcp.pop %v2973
      %v3001 = vmul.f32 1.0, %v3000
      %v3002 = vrcp.pop %v2974
      %v3003 = vmul.f32 1.0, %v3002
      %v3004 = vrcp.pop %v2975
      %v3005 = vmul.f32 1.0, %v3004
      %v3006 = vrcp.pop %v2976
      %v3007 = vmul.f32 1.0, %v3006
      %v3008 = vrcp.pop %v2977
      %v3009 = vmul.f32 1.0, %v3008
      %v3010 = vmul.f32 %v2883, %v2979
      %v3011 = vmul.f32 %v2885, %v2981
      %v3012 = vmul.f32 %v2887, %v2983
      %v3013 = vmul.f32 %v2889, %v2985
      %v3014 = vmul.f32 %v2891, %v2987
      %v3015 = vmul.f32 %v2893, %v2989
      %v3016 = vmul.f32 %v2895, %v2991
      %v3017 = vmul.f32 %v2897, %v2993
      %v3018 = vmul.f32 %v2899, %v2995
      %v3019 = vmul.f32 %v2901, %v2997
      %v3020 = vmul.f32 %v2903, %v2999
      %v3021 = vmul.f32 %v2905, %v3001
      %v3022 = vmul.f32 %v2907, %v3003
      %v3023 = vmul.f32 %v2909, %v3005
      %v3024 = vmul.f32 %v2911, %v3007
      %v3025 = vmul.f32 %v2913, %v3009
      %v3026 = vmul.f32 %v2931, %v2979
      %v3027 = vmul.f32 %v2933, %v2981
      %v3028 = vmul.f32 %v2935, %v2983
      %v3029 = vmul.f32 %v2937, %v2985
      %v3030 = vmul.f32 %v2939, %v2987
      %v3031 = vmul.f32 %v2941, %v2989
      %v3032 = vmul.f32 %v2943, %v2991
      %v3033 = vmul.f32 %v2945, %v2993
      %v3034 = vmul.f32 %v2947, %v2995
      %v3035 = vmul.f32 %v2949, %v2997
      %v3036 = vmul.f32 %v2951, %v2999
      %v3037 = vmul.f32 %v2953, %v3001
      %v3038 = vmul.f32 %v2955, %v3003
      %v3039 = vmul.f32 %v2957, %v3005
      %v3040 = vmul.f32 %v2959, %v3007
      %v3041 = vmul.f32 %v2961, %v3009
      %3043 = vset.pattern.permute.xlu0 0
      %3044 = vperm.xlu0 %3043, %v3010
      %v3045 = vpop.permute.xlu0 %3044
      %3048 = vset.pattern.permute.xlu0 0
      %3049 = vperm.xlu0 %3048, %v3011
      %v3050 = vpop.permute.xlu0 %3049
      %3053 = vset.pattern.permute.xlu0 0
      %3054 = vperm.xlu0 %3053, %v3012
      %v3055 = vpop.permute.xlu0 %3054
      %3058 = vset.pattern.permute.xlu0 0
      %3059 = vperm.xlu0 %3058, %v3013
      %v3060 = vpop.permute.xlu0 %3059
      %3063 = vset.pattern.permute.xlu0 0
      %3064 = vperm.xlu0 %3063, %v3014
      %v3065 = vpop.permute.xlu0 %3064
      %3068 = vset.pattern.permute.xlu0 0
      %3069 = vperm.xlu0 %3068, %v3015
      %v3070 = vpop.permute.xlu0 %3069
      %3073 = vset.pattern.permute.xlu0 0
      %3074 = vperm.xlu0 %3073, %v3016
      %v3075 = vpop.permute.xlu0 %3074
      %3078 = vset.pattern.permute.xlu0 0
      %3079 = vperm.xlu0 %3078, %v3017
      %v3080 = vpop.permute.xlu0 %3079
      %3083 = vset.pattern.permute.xlu0 0
      %3084 = vperm.xlu0 %3083, %v3018
      %v3085 = vpop.permute.xlu0 %3084
      %3088 = vset.pattern.permute.xlu0 0
      %3089 = vperm.xlu0 %3088, %v3019
      %v3090 = vpop.permute.xlu0 %3089
      %3093 = vset.pattern.permute.xlu0 0
      %3094 = vperm.xlu0 %3093, %v3020
      %v3095 = vpop.permute.xlu0 %3094
      %3098 = vset.pattern.permute.xlu0 0
      %3099 = vperm.xlu0 %3098, %v3021
      %v3100 = vpop.permute.xlu0 %3099
      %3103 = vset.pattern.permute.xlu0 0
      %3104 = vperm.xlu0 %3103, %v3022
      %v3105 = vpop.permute.xlu0 %3104
      %3108 = vset.pattern.permute.xlu0 0
      %3109 = vperm.xlu0 %3108, %v3023
      %v3110 = vpop.permute.xlu0 %3109
      %3113 = vset.pattern.permute.xlu0 0
      %3114 = vperm.xlu0 %3113, %v3024
      %v3115 = vpop.permute.xlu0 %3114
      %3118 = vset.pattern.permute.xlu0 0
      %3119 = vperm.xlu0 %3118, %v3025
      %v3120 = vpop.permute.xlu0 %3119
      %v3122 = vmul.f32 %v2264, %v3045
      %v3123 = vmul.f32 %v2265, %v3045
      %v3124 = vmul.f32 %v2266, %v3050
      %v3125 = vmul.f32 %v2267, %v3050
      %v3126 = vmul.f32 %v2268, %v3055
      %v3127 = vmul.f32 %v2269, %v3055
      %v3128 = vmul.f32 %v2270, %v3060
      %v3129 = vmul.f32 %v2271, %v3060
      %v3130 = vmul.f32 %v2272, %v3065
      %v3131 = vmul.f32 %v2273, %v3065
      %v3132 = vmul.f32 %v2274, %v3070
      %v3133 = vmul.f32 %v2275, %v3070
      %v3134 = vmul.f32 %v2276, %v3075
      %v3135 = vmul.f32 %v2277, %v3075
      %v3136 = vmul.f32 %v2278, %v3080
      %v3137 = vmul.f32 %v2279, %v3080
      %v3138 = vmul.f32 %v2280, %v3085
      %v3139 = vmul.f32 %v2281, %v3085
      %v3140 = vmul.f32 %v2282, %v3090
      %v3141 = vmul.f32 %v2283, %v3090
      %v3142 = vmul.f32 %v2284, %v3095
      %v3143 = vmul.f32 %v2285, %v3095
      %v3144 = vmul.f32 %v2286, %v3100
      %v3145 = vmul.f32 %v2287, %v3100
      %v3146 = vmul.f32 %v2288, %v3105
      %v3147 = vmul.f32 %v2289, %v3105
      %v3148 = vmul.f32 %v2290, %v3110
      %v3149 = vmul.f32 %v2291, %v3110
      %v3150 = vmul.f32 %v2292, %v3115
      %v3151 = vmul.f32 %v2293, %v3115
      %v3152 = vmul.f32 %v2294, %v3120
      %v3153 = vmul.f32 %v2295, %v3120
      %3155 = vset.pattern.permute.xlu0 0
      %3156 = vperm.xlu0 %3155, %v3026
      %v3157 = vpop.permute.xlu0 %3156
      %3160 = vset.pattern.permute.xlu0 0
      %3161 = vperm.xlu0 %3160, %v3027
      %v3162 = vpop.permute.xlu0 %3161
      %3165 = vset.pattern.permute.xlu0 0
      %3166 = vperm.xlu0 %3165, %v3028
      %v3167 = vpop.permute.xlu0 %3166
      %3170 = vset.pattern.permute.xlu0 0
      %3171 = vperm.xlu0 %3170, %v3029
      %v3172 = vpop.permute.xlu0 %3171
      %3175 = vset.pattern.permute.xlu0 0
      %3176 = vperm.xlu0 %3175, %v3030
      %v3177 = vpop.permute.xlu0 %3176
      %3180 = vset.pattern.permute.xlu0 0
      %3181 = vperm.xlu0 %3180, %v3031
      %v3182 = vpop.permute.xlu0 %3181
      %3185 = vset.pattern.permute.xlu0 0
      %3186 = vperm.xlu0 %3185, %v3032
      %v3187 = vpop.permute.xlu0 %3186
      %3190 = vset.pattern.permute.xlu0 0
      %3191 = vperm.xlu0 %3190, %v3033
      %v3192 = vpop.permute.xlu0 %3191
      %3195 = vset.pattern.permute.xlu0 0
      %3196 = vperm.xlu0 %3195, %v3034
      %v3197 = vpop.permute.xlu0 %3196
      %3200 = vset.pattern.permute.xlu0 0
      %3201 = vperm.xlu0 %3200, %v3035
      %v3202 = vpop.permute.xlu0 %3201
      %3205 = vset.pattern.permute.xlu0 0
      %3206 = vperm.xlu0 %3205, %v3036
      %v3207 = vpop.permute.xlu0 %3206
      %3210 = vset.pattern.permute.xlu0 0
      %3211 = vperm.xlu0 %3210, %v3037
      %v3212 = vpop.permute.xlu0 %3211
      %3215 = vset.pattern.permute.xlu0 0
      %3216 = vperm.xlu0 %3215, %v3038
      %v3217 = vpop.permute.xlu0 %3216
      %3220 = vset.pattern.permute.xlu0 0
      %3221 = vperm.xlu0 %3220, %v3039
      %v3222 = vpop.permute.xlu0 %3221
      %3225 = vset.pattern.permute.xlu0 0
      %3226 = vperm.xlu0 %3225, %v3040
      %v3227 = vpop.permute.xlu0 %3226
      %3230 = vset.pattern.permute.xlu0 0
      %3231 = vperm.xlu0 %3230, %v3041
      %v3232 = vpop.permute.xlu0 %3231
      %v3234 = vmul.f32 %v2296, %v3157
      %v3235 = vmul.f32 %v2297, %v3157
      %v3236 = vmul.f32 %v2298, %v3162
      %v3237 = vmul.f32 %v2299, %v3162
      %v3238 = vmul.f32 %v2300, %v3167
      %v3239 = vmul.f32 %v2301, %v3167
      %v3240 = vmul.f32 %v2302, %v3172
      %v3241 = vmul.f32 %v2303, %v3172
      %v3242 = vmul.f32 %v2304, %v3177
      %v3243 = vmul.f32 %v2305, %v3177
      %v3244 = vmul.f32 %v2306, %v3182
      %v3245 = vmul.f32 %v2307, %v3182
      %v3246 = vmul.f32 %v2308, %v3187
      %v3247 = vmul.f32 %v2309, %v3187
      %v3248 = vmul.f32 %v2310, %v3192
      %v3249 = vmul.f32 %v2311, %v3192
      %v3250 = vmul.f32 %v2312, %v3197
      %v3251 = vmul.f32 %v2313, %v3197
      %v3252 = vmul.f32 %v2314, %v3202
      %v3253 = vmul.f32 %v2315, %v3202
      %v3254 = vmul.f32 %v2316, %v3207
      %v3255 = vmul.f32 %v2317, %v3207
      %v3256 = vmul.f32 %v2318, %v3212
      %v3257 = vmul.f32 %v2319, %v3212
      %v3258 = vmul.f32 %v2320, %v3217
      %v3259 = vmul.f32 %v2321, %v3217
      %v3260 = vmul.f32 %v2322, %v3222
      %v3261 = vmul.f32 %v2323, %v3222
      %v3262 = vmul.f32 %v2324, %v3227
      %v3263 = vmul.f32 %v2325, %v3227
      %v3264 = vmul.f32 %v2326, %v3232
      %v3265 = vmul.f32 %v2327, %v3232
      %v3266 = vadd.f32 %v3122, %v3234
      %v3267 = vadd.f32 %v3123, %v3235
      %v3268 = vadd.f32 %v3124, %v3236
      %v3269 = vadd.f32 %v3125, %v3237
      %v3270 = vadd.f32 %v3126, %v3238
      %v3271 = vadd.f32 %v3127, %v3239
      %v3272 = vadd.f32 %v3128, %v3240
      %v3273 = vadd.f32 %v3129, %v3241
      %v3274 = vadd.f32 %v3130, %v3242
      %v3275 = vadd.f32 %v3131, %v3243
      %v3276 = vadd.f32 %v3132, %v3244
      %v3277 = vadd.f32 %v3133, %v3245
      %v3278 = vadd.f32 %v3134, %v3246
      %v3279 = vadd.f32 %v3135, %v3247
      %v3280 = vadd.f32 %v3136, %v3248
      %v3281 = vadd.f32 %v3137, %v3249
      %v3282 = vadd.f32 %v3138, %v3250
      %v3283 = vadd.f32 %v3139, %v3251
      %v3284 = vadd.f32 %v3140, %v3252
      %v3285 = vadd.f32 %v3141, %v3253
      %v3286 = vadd.f32 %v3142, %v3254
      %v3287 = vadd.f32 %v3143, %v3255
      %v3288 = vadd.f32 %v3144, %v3256
      %v3289 = vadd.f32 %v3145, %v3257
      %v3290 = vadd.f32 %v3146, %v3258
      %v3291 = vadd.f32 %v3147, %v3259
      %v3292 = vadd.f32 %v3148, %v3260
      %v3293 = vadd.f32 %v3149, %v3261
      %v3294 = vadd.f32 %v3150, %v3262
      %v3295 = vadd.f32 %v3151, %v3263
      %v3296 = vadd.f32 %v3152, %v3264
      %v3297 = vadd.f32 %v3153, %v3265
      %3298 = vst [vmem:[%s244] sm:$0xff] %v3266
      %3299 = vst [vmem:[%s244 + $0x8] sm:$0xff] %v3267
      %3300 = vst [vmem:[%s244 + $0x10] sm:$0xff] %v3268
      %3301 = vst [vmem:[%s244 + $0x18] sm:$0xff] %v3269
      %3302 = vst [vmem:[%s244 + $0x20] sm:$0xff] %v3270
      %3303 = vst [vmem:[%s244 + $0x28] sm:$0xff] %v3271
      %3304 = vst [vmem:[%s244 + $0x30] sm:$0xff] %v3272
      %3305 = vst [vmem:[%s244 + $0x38] sm:$0xff] %v3273
      %3306 = vst [vmem:[%s244 + $0x40] sm:$0xff] %v3274
      %3307 = vst [vmem:[%s244 + $0x48] sm:$0xff] %v3275
      %3308 = vst [vmem:[%s244 + $0x50] sm:$0xff] %v3276
      %3309 = vst [vmem:[%s244 + $0x58] sm:$0xff] %v3277
      %3310 = vst [vmem:[%s244 + $0x60] sm:$0xff] %v3278
      %3311 = vst [vmem:[%s244 + $0x68] sm:$0xff] %v3279
      %3312 = vst [vmem:[%s244 + $0x70] sm:$0xff] %v3280
      %3313 = vst [vmem:[%s244 + $0x78] sm:$0xff] %v3281
      %3314 = vst [vmem:[%s244 + $0x80] sm:$0xff] %v3282
      %3315 = vst [vmem:[%s244 + $0x88] sm:$0xff] %v3283
      %3316 = vst [vmem:[%s244 + $0x90] sm:$0xff] %v3284
      %3317 = vst [vmem:[%s244 + $0x98] sm:$0xff] %v3285
      %3318 = vst [vmem:[%s244 + $0xa0] sm:$0xff] %v3286
      %3319 = vst [vmem:[%s244 + $0xa8] sm:$0xff] %v3287
      %3320 = vst [vmem:[%s244 + $0xb0] sm:$0xff] %v3288
      %3321 = vst [vmem:[%s244 + $0xb8] sm:$0xff] %v3289
      %3322 = vst [vmem:[%s244 + $0xc0] sm:$0xff] %v3290
      %3323 = vst [vmem:[%s244 + $0xc8] sm:$0xff] %v3291
      %3324 = vst [vmem:[%s244 + $0xd0] sm:$0xff] %v3292
      %3325 = vst [vmem:[%s244 + $0xd8] sm:$0xff] %v3293
      %3326 = vst [vmem:[%s244 + $0xe0] sm:$0xff] %v3294
      %3327 = vst [vmem:[%s244 + $0xe8] sm:$0xff] %v3295
      %3328 = vst [vmem:[%s244 + $0xf0] sm:$0xff] %v3296
      %3329 = vst [vmem:[%s244 + $0xf8] sm:$0xff] %v3297
      %p3330 = scmp.lt.s32.totalorder %s16, 1
      %s3331 = scalar_select %p3330, %s16, 1
      %s3332 = smul.addr %s3331, 32
      %s3333 = smul.addr %s3332, 8
      %s3334 = scalar_lea.vmem %s5, %s3333
      // Predicated region
      $region41: #{csef_forward.1} parent=39 // pred_check
        %p3335 = pneg %p149
      $region42: #{csef_forward.1} parent=39 // pred_check_branch
        %3337 = sbr.rel (%p3335) target = $region44
      $region43: #{csef_forward.1} parent=39 // pred_region
        _
      $region44: #{csef_forward.1} parent=39 // pred_fallthru
        _
    $region40: #{csef_forward.1} parent=5 // pred_fallthru
      _
    %p3338 = scmp.le.s32.totalorder 2, %s11
    // Predicated region
    $region45: #{csef_forward.1} parent=5 // pred_check
      %p3339 = pneg %p3338
    $region46: #{csef_forward.1} parent=5 // pred_check_branch
      %3341 = sbr.rel (%p3339) target = $region48
    $region47: #{csef_forward.1} parent=5 // pred_region
      %s3342 = ssub.s32 %s11, 2
      // Predicated region
      $region49: #{csef_forward.1} parent=47 // pred_check
        %p3343 = pneg %p155
      $region50: #{csef_forward.1} parent=47 // pred_check_branch
        %3345 = sbr.rel (%p3343) target = $region52
      $region51: #{csef_forward.1} parent=47 // pred_region
        %p3346 = scmp.lt.s32.totalorder %s17, 1
        %s3347 = scalar_select %p3346, %s17, 1
        %s3348 = smul.addr %s3347, 32
        %s3349 = smul.addr %s3348, 8
        %s3350 = scalar_lea.vmem %s5, %s3349
      $region52: #{csef_forward.1} parent=47 // pred_fallthru
        _
    $region48: #{csef_forward.1} parent=5 // pred_fallthru
      _
  $region6: #{csef_forward.1} parent=0 // loop_footer
    %s15 = sadd.s32 1, %s11
  $region7: #{csef_forward.1} parent=0 // loop_footer_branch
    %10 = sbr.rel target = $region3
  $region8: #{csef_forward.1} parent=0 // loop_exit
    _

</llo_original>
